<compile_context>
chip_gen: v7x
topology: tpu7x:2x2x1
jax: 0.10.0
libtpu: 0.0.40
codegen_flags: <defaults>
</compile_context>

<pallas_src>
import functools

import jax
import jax.numpy as jnp
from jax.experimental import pallas as pl
from jax.experimental.pallas import tpu as pltpu

NEG_SLOPE = 0.2
BN_EPS = 1e-5
LANE = 128
SUBLANE = 16                        # M-tile granularity (bf16 sublane friendly)
MAX_TILE_M = 512                    # v7x-safe; v5e/v6e could go to 1024 (128 MiB VMEM)
VMEM_LIMIT = 32 * 1024 * 1024       # headroom under v7x's 64 MiB physical VMEM
FUSED_Y_BUDGET = 8 * 1024 * 1024    # max f32 y VMEM scratch for the fused path


def _cdiv(a, b):
    return -(-a // b)


def _round_up(x, m):
    return _cdiv(x, m) * m


def _tiling(m):
    """Balanced M tiling: tile_m <= MAX_TILE_M, 16-row aligned, minimal padding."""
    n_tiles = _cdiv(m, MAX_TILE_M)
    tile_m = _round_up(_cdiv(m, n_tiles), SUBLANE)
    grid_m = _cdiv(m, tile_m)
    return tile_m, grid_m, grid_m * tile_m


# ---------------------------------------------------------------------------
# Kernels
# ---------------------------------------------------------------------------
def _scale_lrelu_kernel(x_ref, w_ref, o_ref):
    # Layer 1 (1x1 conv, Cin=1, no BN): y[m, c] = leaky_relu(x[m, 0] * w[0, c]).
    y = x_ref[...] * w_ref[...]
    o_ref[...] = jnp.where(y >= 0, y, NEG_SLOPE * y).astype(o_ref.dtype)


def _fused_conv_bn_lrelu_kernel(a_ref, w_ref, g_ref, b_ref, o_ref,
                                y_ref, scale_ref, shift_ref, *, inv_m, tile_m):
    """grid = (2, grid_m).

    phase 0: GEMM tile -> VMEM y scratch, accumulate per-channel sum / sum-sq
             in scale_ref/shift_ref; at the last M tile fold the batch stats
             into scale = gamma*rstd and shift = beta - mean*scale (in place).
    phase 1: out = leaky_relu(y*scale + shift), bf16 store.
    """
    phase = pl.program_id(0)
    i = pl.program_id(1)
    row0 = pl.multiple_of(i * tile_m, SUBLANE)

    @pl.when(phase == 0)
    def _gemm_and_stats():
        @pl.when(i == 0)
        def _init():
            scale_ref[...] = jnp.zeros_like(scale_ref)   # running sum
            shift_ref[...] = jnp.zeros_like(shift_ref)   # running sum of squares

        y = jnp.dot(a_ref[...], w_ref[...], preferred_element_type=jnp.float32)
        y_ref[pl.ds(row0, tile_m), :] = y
        scale_ref[...] += jnp.sum(y, axis=0, keepdims=True)
        shift_ref[...] += jnp.sum(y * y, axis=0, keepdims=True)

        @pl.when(i == pl.num_programs(1) - 1)
        def _finalize():
            mu = scale_ref[...] * inv_m
            var = jnp.maximum(shift_ref[...] * inv_m - mu * mu, 0.0)  # biased var
            scale = g_ref[...] * jax.lax.rsqrt(var + BN_EPS)
            scale_ref[...] = scale
            shift_ref[...] = b_ref[...] - mu * scale

    @pl.when(phase == 1)
    def _normalize():
        z = y_ref[pl.ds(row0, tile_m), :] * scale_ref[...] + shift_ref[...]
        o_ref[...] = jnp.where(z >= 0, z, NEG_SLOPE * z).astype(o_ref.dtype)


def _gemm_stats_kernel(a_ref, w_ref, g_ref, b_ref, y_ref, scale_ref, shift_ref,
                       sum_ref, ssq_ref, *, inv_m):
    # Fallback pass A: bf16 GEMM (f32 accumulate) + batch-stat accumulation,
    # bf16 y store; scale/shift emitted at the last tile.
    i = pl.program_id(0)

    @pl.when(i == 0)
    def _init():
        sum_ref[...] = jnp.zeros_like(sum_ref)
        ssq_ref[...] = jnp.zeros_like(ssq_ref)

    y = jnp.dot(a_ref[...], w_ref[...], preferred_element_type=jnp.float32)
    y_ref[...] = y.astype(y_ref.dtype)            # bf16: halves the y HBM roundtrip
    sum_ref[...] += jnp.sum(y, axis=0, keepdims=True)
    ssq_ref[...] += jnp.sum(y * y, axis=0, keepdims=True)

    @pl.when(i == pl.num_programs(0) - 1)
    def _finalize():
        mu = sum_ref[...] * inv_m
        var = jnp.maximum(ssq_ref[...] * inv_m - mu * mu, 0.0)
        scale = g_ref[...] * jax.lax.rsqrt(var + BN_EPS)
        scale_ref[...] = scale
        shift_ref[...] = b_ref[...] - mu * scale


def _bn_lrelu_kernel(y_ref, scale_ref, shift_ref, o_ref):
    # Fallback pass B: single FMA + LeakyReLU.
    z = y_ref[...].astype(jnp.float32) * scale_ref[...] + shift_ref[...]
    o_ref[...] = jnp.where(z >= 0, z, NEG_SLOPE * z).astype(o_ref.dtype)


# ---------------------------------------------------------------------------
# Plain-JAX glue
# ---------------------------------------------------------------------------
def _im2col_nhwc(x_nhwc, k, stride, pad):
    n, h, w, c = x_nhwc.shape
    xp = jnp.pad(x_nhwc, ((0, 0), (pad, pad), (pad, pad), (0, 0)))
    ho = (h + 2 * pad - k) // stride + 1
    wo = (w + 2 * pad - k) // stride + 1
    cols = []
    for i in range(k):
        for j in range(k):
            cols.append(xp[:, i:i + stride * ho:stride, j:j + stride * wo:stride, :])
    patches = jnp.concatenate(cols, axis=-1)      # (N, Ho, Wo, k*k*C), (i, j, c) order
    return patches.reshape(n * ho * wo, k * k * c), ho, wo


def _layer1_scale_lrelu(x_nhwc, w1):
    """Conv2d(1, F, 1, 1, 1, bias=False) + LeakyReLU(0.2): pure VPU scale."""
    n, h, w, _ = x_nhwc.shape                     # cin == 1
    f = w1.shape[0]
    xp = jnp.pad(x_nhwc, ((0, 0), (1, 1), (1, 1), (0, 0)))   # zero padding ring
    ho, wo = h + 2, w + 2
    m = n * ho * wo
    tile_m, grid_m, m_pad = _tiling(m)

    xf = jnp.pad(xp.reshape(m, 1), ((0, m_pad - m), (0, 0))).astype(jnp.float32)
    wv = w1.reshape(1, f).astype(jnp.float32)

    out = pl.pallas_call(
        _scale_lrelu_kernel,
        grid=(grid_m,),
        in_specs=[pl.BlockSpec((tile_m, 1), lambda i: (i, 0)),
                  pl.BlockSpec((1, f), lambda i: (0, 0))],
        out_specs=pl.BlockSpec((tile_m, f), lambda i: (i, 0)),
        out_shape=jax.ShapeDtypeStruct((m_pad, f), jnp.bfloat16),
        compiler_params=pltpu.CompilerParams(
            dimension_semantics=("parallel",),
            vmem_limit_bytes=VMEM_LIMIT),
    )(xf, wv)
    return out[:m].reshape(n, ho, wo, f)


def _conv_bn_lrelu(x_nhwc, w, gamma, beta, *, k, stride, pad):
    """Conv2d(k, stride, pad, bias=False) + BatchNorm2d (batch stats) + LeakyReLU."""
    n = x_nhwc.shape[0]
    cout, cin = w.shape[0], w.shape[1]
    cout_p = _round_up(cout, LANE)

    patches, ho, wo = _im2col_nhwc(x_nhwc, k, stride, pad)
    m = n * ho * wo
    kdim = k * k * cin                        # real Cin: no per-channel lane padding
    kdim_p = _round_up(kdim, LANE)            # pad total K once -> lane-dense patches
    tile_m, grid_m, m_pad = _tiling(m)

    patches = jnp.pad(patches.astype(jnp.bfloat16),
                      ((0, m_pad - m), (0, kdim_p - kdim)))

    # (Cout, Cin, KH, KW) -> (KH, KW, Cin, Cout) -> (kdim, Cout) -> (kdim_p, cout_p)
    w_mat = jnp.transpose(w, (2, 3, 1, 0)).reshape(kdim, cout)
    w_mat = jnp.pad(w_mat, ((0, kdim_p - kdim), (0, cout_p - cout))).astype(jnp.bfloat16)

    g_p = jnp.pad(gamma, (0, cout_p - cout)).reshape(1, cout_p).astype(jnp.float32)
    b_p = jnp.pad(beta, (0, cout_p - cout)).reshape(1, cout_p).astype(jnp.float32)

    inv_m = 1.0 / m
    flops = 2 * m_pad * kdim_p * cout_p
    bytes_accessed = (m_pad * kdim_p + kdim_p * cout_p + m_pad * cout_p) * 2 + 4 * cout_p * 4

    if m_pad * cout_p * 4 <= FUSED_Y_BUDGET:
        # ---- fused single call: GEMM + stats (phase 0) -> BN + LeakyReLU (phase 1).
        # y stays in a VMEM scratch; the patch tile / output block index maps are
        # chosen so no block is re-fetched or written back with stale data.
        last = grid_m - 1

        def a_index(p, i):
            return ((1 - p) * i + p * last, 0)   # phase 1 parks on the last tile

        def o_index(p, i):
            return (p * i, 0)                    # phase 0 parks on block 0 (unwritten)

        out = pl.pallas_call(
            functools.partial(_fused_conv_bn_lrelu_kernel, inv_m=inv_m, tile_m=tile_m),
            grid=(2, grid_m),
            in_specs=[pl.BlockSpec((tile_m, kdim_p), a_index),
                      pl.BlockSpec((kdim_p, cout_p), lambda p, i: (0, 0)),
                      pl.BlockSpec((1, cout_p), lambda p, i: (0, 0)),
                      pl.BlockSpec((1, cout_p), lambda p, i: (0, 0))],
            out_specs=pl.BlockSpec((tile_m, cout_p), o_index),
            out_shape=jax.ShapeDtypeStruct((m_pad, cout_p), jnp.bfloat16),
            scratch_shapes=[pltpu.VMEM((m_pad, cout_p), jnp.float32),
                            pltpu.VMEM((1, cout_p), jnp.float32),
                            pltpu.VMEM((1, cout_p), jnp.float32)],
            compiler_params=pltpu.CompilerParams(
                dimension_semantics=("arbitrary", "arbitrary"),
                vmem_limit_bytes=VMEM_LIMIT),
            cost_estimate=pl.CostEstimate(flops=flops, transcendentals=cout_p,
                                          bytes_accessed=bytes_accessed),
        )(patches, w_mat, g_p, b_p)
    else:
        # ---- fallback for large M: two passes, bf16 y intermediate, scale/shift
        # precomputed in pass A so pass B is a single FMA + LeakyReLU.
        y, scale, shift = pl.pallas_call(
            functools.partial(_gemm_stats_kernel, inv_m=inv_m),
            grid=(grid_m,),
            in_specs=[pl.BlockSpec((tile_m, kdim_p), lambda i: (i, 0)),
                      pl.BlockSpec((kdim_p, cout_p), lambda i: (0, 0)),
                      pl.BlockSpec((1, cout_p), lambda i: (0, 0)),
                      pl.BlockSpec((1, cout_p), lambda i: (0, 0))],
            out_specs=(pl.BlockSpec((tile_m, cout_p), lambda i: (i, 0)),
                       pl.BlockSpec((1, cout_p), lambda i: (0, 0)),
                       pl.BlockSpec((1, cout_p), lambda i: (0, 0))),
            out_shape=(jax.ShapeDtypeStruct((m_pad, cout_p), jnp.bfloat16),
                       jax.ShapeDtypeStruct((1, cout_p), jnp.float32),
                       jax.ShapeDtypeStruct((1, cout_p), jnp.float32)),
            scratch_shapes=[pltpu.VMEM((1, cout_p), jnp.float32),
                            pltpu.VMEM((1, cout_p), jnp.float32)],
            compiler_params=pltpu.CompilerParams(
                dimension_semantics=("arbitrary",),
                vmem_limit_bytes=VMEM_LIMIT),
            cost_estimate=pl.CostEstimate(flops=flops, transcendentals=cout_p,
                                          bytes_accessed=bytes_accessed),
        )(patches, w_mat, g_p, b_p)

        out = pl.pallas_call(
            _bn_lrelu_kernel,
            grid=(grid_m,),
            in_specs=[pl.BlockSpec((tile_m, cout_p), lambda i: (i, 0)),
                      pl.BlockSpec((1, cout_p), lambda i: (0, 0)),
                      pl.BlockSpec((1, cout_p), lambda i: (0, 0))],
            out_specs=pl.BlockSpec((tile_m, cout_p), lambda i: (i, 0)),
            out_shape=jax.ShapeDtypeStruct((m_pad, cout_p), jnp.bfloat16),
            compiler_params=pltpu.CompilerParams(
                dimension_semantics=("parallel",),
                vmem_limit_bytes=VMEM_LIMIT),
        )(y, scale, shift)

    return out[:m, :cout].reshape(n, ho, wo, cout)


# ---------------------------------------------------------------------------
# FrontEnd forward
# ---------------------------------------------------------------------------
def front_end_forward(x, params):
    # NCHW -> NHWC once at the boundary; activations stay NHWC with their real
    # channel counts between layers (zero padding only on GEMM operands).
    h = x.transpose(0, 2, 3, 1)
    # Conv2d(1, F, 1, 1, 1) + LeakyReLU(0.2)             (VPU kernel)
    h = _layer1_scale_lrelu(h, params["w1"])
    # Conv2d(F, 2F, 2, 2, 1) + BN(2F) + LeakyReLU(0.2)   (fused MXU GEMM + BN)
    h = _conv_bn_lrelu(h, params["w2"], params["g2"], params["b2"], k=2, stride=2, pad=1)
    # Conv2d(2F, 4F, 4, 2, 1) + BN(4F) + LeakyReLU(0.2)
    h = _conv_bn_lrelu(h, params["w3"], params["g3"], params["b3"], k=4, stride=2, pad=1)
    # Conv2d(4F, 8F, 4, 2, 1) + BN(8F) + LeakyReLU(0.2)
    h = _conv_bn_lrelu(h, params["w4"], params["g4"], params["b4"], k=4, stride=2, pad=1)
    return h.astype(jnp.float32).transpose(0, 3, 1, 2)


def init_params(feature_size, key):
    f = feature_size
    k1, k2, k3, k4 = jax.random.split(key, 4)
    return {
        "w1": 0.02 * jax.random.normal(k1, (f, 1, 1, 1), jnp.float32),
        "w2": 0.02 * jax.random.normal(k2, (2 * f, f, 2, 2), jnp.float32),
        "w3": 0.02 * jax.random.normal(k3, (4 * f, 2 * f, 4, 4), jnp.float32),
        "w4": 0.02 * jax.random.normal(k4, (8 * f, 4 * f, 4, 4), jnp.float32),
        # BatchNorm affine params (PyTorch default: gamma=1, beta=0)
        "g2": jnp.ones((2 * f,), jnp.float32), "b2": jnp.zeros((2 * f,), jnp.float32),
        "g3": jnp.ones((4 * f,), jnp.float32), "b3": jnp.zeros((4 * f,), jnp.float32),
        "g4": jnp.ones((8 * f,), jnp.float32), "b4": jnp.zeros((8 * f,), jnp.float32),
    }


def _reference_forward(x, params):
    # Pure-JAX f32 reference (training-mode BN: biased batch stats).
    def conv(h, w, stride, pad):
        return jax.lax.conv_general_dilated(
            h, w, window_strides=(stride, stride),
            padding=((pad, pad), (pad, pad)),
            dimension_numbers=("NCHW", "OIHW", "NCHW"))

    def lrelu(h):
        return jnp.where(h >= 0, h, NEG_SLOPE * h)

    def bn(h, g, b):
        mu = h.mean(axis=(0, 2, 3), keepdims=True)
        var = ((h - mu) ** 2).mean(axis=(0, 2, 3), keepdims=True)
        return ((h - mu) * jax.lax.rsqrt(var + BN_EPS) * g.reshape(1, -1, 1, 1)
                + b.reshape(1, -1, 1, 1))

    h = lrelu(conv(x, params["w1"], 1, 1))
    h = lrelu(bn(conv(h, params["w2"], 2, 1), params["g2"], params["b2"]))
    h = lrelu(bn(conv(h, params["w3"], 2, 1), params["g3"], params["b3"]))
    h = lrelu(bn(conv(h, params["w4"], 2, 1), params["g4"], params["b4"]))
    return h


if __name__ == "__main__":
    feature_size = 4
    key = jax.random.PRNGKey(0)
    k_params, k_x = jax.random.split(key)

    params = init_params(feature_size, k_params)
    # Input matches nn.Conv2d(1, ...): NCHW with 1 channel.
    x = jax.random.normal(k_x, (2, 1, 16, 16), jnp.float32)

    out = jax.block_until_ready(jax.jit(front_end_forward)(x, params))

    # 16x16 -> conv1(k1,s1,p1)->18 -> conv2(k2,s2,p1)->10 -> conv3(k4,s2,p1)->5
    # -> conv4(k4,s2,p1)->2 ; channels = 8*feature_size
    assert out.shape == (2, 8 * feature_size, 2, 2), out.shape
    assert jnp.isfinite(out).all()

    # Loose tolerance vs. the f32 reference: the Pallas path runs the GEMMs and
    # stores inter-layer activations in bf16, and BN normalization amplifies
    # that rounding somewhat (especially with only N*Ho*Wo=8 samples in layer 4).
    ref = _reference_forward(x, params)
    mean_err = float(jnp.mean(jnp.abs(out - ref)))
    rel_err = float(jnp.linalg.norm(out - ref) / (jnp.linalg.norm(ref) + 1e-6))
    assert mean_err < 0.08 and rel_err < 0.2, (mean_err, rel_err)

    print("KERNEL_OK")
</pallas_src>

<mosaic_0001>
module attributes {stable_mosaic.version = 11 : i64} {
  func.func @_scale_lrelu_kernel(%arg0: i32, %arg1: memref<336x1xf32, #tpu.memory_space<vmem>>, %arg2: memref<1x4xf32, #tpu.memory_space<vmem>>, %arg3: memref<336x4xbf16, #tpu.memory_space<vmem>>) attributes {dimension_semantics = [#tpu.dimension_semantics<parallel>], iteration_bounds = array<i64: 2>, scalar_prefetch = 0 : i64, scratch_operands = 0 : i64, tpu.core_type = #tpu.core_type<tc>, window_params = [{transform_indices = @transform_0, window_bounds = array<i64: 336, 1>}, {pipeline_mode = #tpu.pipeline_mode<synchronous>, transform_indices = @transform_1, window_bounds = array<i64: 1, 4>}, {transform_indices = @transform_2, window_bounds = array<i64: 336, 4>}]} {
    %c0 = arith.constant 0 : index
    %c0_0 = arith.constant 0 : index
    %0 = vector.load %arg1[%c0, %c0_0] : memref<336x1xf32, #tpu.memory_space<vmem>>, vector<336x1xf32>
    %c0_1 = arith.constant 0 : index
    %c0_2 = arith.constant 0 : index
    %1 = vector.load %arg2[%c0_1, %c0_2] : memref<1x4xf32, #tpu.memory_space<vmem>>, vector<1x4xf32>
    %2 = vector.broadcast %0 : vector<336x1xf32> to vector<336x4xf32>
    %3 = vector.broadcast %1 : vector<1x4xf32> to vector<336x4xf32>
    %4 = arith.mulf %2, %3 : vector<336x4xf32>
    %cst = arith.constant 0.000000e+00 : f32
    %5 = vector.broadcast %cst : f32 to vector<336x4xf32>
    %6 = arith.cmpf oge, %4, %5 : vector<336x4xf32>
    %cst_3 = arith.constant 2.000000e-01 : f32
    %7 = vector.broadcast %cst_3 : f32 to vector<336x4xf32>
    %8 = arith.mulf %7, %4 : vector<336x4xf32>
    %9 = arith.select %6, %4, %8 : vector<336x4xi1>, vector<336x4xf32>
    %10 = arith.truncf %9 : vector<336x4xf32> to vector<336x4xbf16>
    %c0_4 = arith.constant 0 : index
    %c0_5 = arith.constant 0 : index
    %11 = vector.load %arg3[%c0_4, %c0_5] : memref<336x4xbf16, #tpu.memory_space<vmem>>, vector<336x4xbf16>
    tpu.vector_store %arg3[%c0_4, %c0_5], %10 {strides = array<i32>} : memref<336x4xbf16, #tpu.memory_space<vmem>>, vector<336x4xbf16>,
    return
  }
  func.func @transform_0(%arg0: i32) -> (i32, i32) {
    %c0_i32 = arith.constant 0 : i32
    %c0_i32_0 = arith.constant 0 : i32
    return %arg0, %c0_i32 : i32, i32
  }
  func.func @transform_1(%arg0: i32) -> (i32, i32) {
    %c0_i32 = arith.constant 0 : i32
    %c0_i32_0 = arith.constant 0 : i32
    %c0_i32_1 = arith.constant 0 : i32
    return %c0_i32, %c0_i32_0 : i32, i32
  }
  func.func @transform_2(%arg0: i32) -> (i32, i32) {
    %c0_i32 = arith.constant 0 : i32
    %c0_i32_0 = arith.constant 0 : i32
    return %arg0, %c0_i32 : i32, i32
  }
}

module attributes {stable_mosaic.version = 11 : i64} {
  func.func @_fused_conv_bn_lrelu_kernel(%arg0: i32, %arg1: i32, %arg2: memref<208x128xbf16, #tpu.memory_space<vmem>>, %arg3: memref<128x128xbf16, #tpu.memory_space<vmem>>, %arg4: memref<1x128xf32, #tpu.memory_space<vmem>>, %arg5: memref<1x128xf32, #tpu.memory_space<vmem>>, %arg6: memref<208x128xbf16, #tpu.memory_space<vmem>>, %arg7: memref<208x128xf32, #tpu.memory_space<vmem>>, %arg8: memref<1x128xf32, #tpu.memory_space<vmem>>, %arg9: memref<1x128xf32, #tpu.memory_space<vmem>>) attributes {dimension_semantics = [#tpu.dimension_semantics<arbitrary>, #tpu.dimension_semantics<arbitrary>], iteration_bounds = array<i64: 2, 1>, scalar_prefetch = 0 : i64, scratch_operands = 3 : i64, tpu.core_type = #tpu.core_type<tc>, window_params = [{transform_indices = @transform_0, window_bounds = array<i64: 208, 128>}, {pipeline_mode = #tpu.pipeline_mode<synchronous>, transform_indices = @transform_1, window_bounds = array<i64: 128, 128>}, {pipeline_mode = #tpu.pipeline_mode<synchronous>, transform_indices = @transform_2, window_bounds = array<i64: 1, 128>}, {pipeline_mode = #tpu.pipeline_mode<synchronous>, transform_indices = @transform_3, window_bounds = array<i64: 1, 128>}, {transform_indices = @transform_4, window_bounds = array<i64: 208, 128>}]} {
    %c208_i32 = arith.constant 208 : i32
    %0 = arith.muli %arg1, %c208_i32 : i32
    %1 = tpu.assume_multiple %0, 16 : i32
    %c0_i32 = arith.constant 0 : i32
    %2 = arith.cmpi eq, %arg0, %c0_i32 : i32
    %3 = arith.extui %2 : i1 to i32
    %c0_i32_0 = arith.constant 0 : i32
    %4 = arith.cmpi ne, %3, %c0_i32_0 : i32
    scf.if %4 {
      %c0_i32_2 = arith.constant 0 : i32
      %8 = arith.cmpi eq, %arg1, %c0_i32_2 : i32
      %9 = arith.extui %8 : i1 to i32
      %c0_i32_3 = arith.constant 0 : i32
      %10 = arith.cmpi ne, %9, %c0_i32_3 : i32
      scf.if %10 {
        %cst_20 = arith.constant 0.000000e+00 : f32
        %30 = vector.broadcast %cst_20 : f32 to vector<1x128xf32>
        %c0_21 = arith.constant 0 : index
        %c0_22 = arith.constant 0 : index
        %31 = vector.load %arg8[%c0_21, %c0_22] : memref<1x128xf32, #tpu.memory_space<vmem>>, vector<1x128xf32>
        tpu.vector_store %arg8[%c0_21, %c0_22], %30 {strides = array<i32>} : memref<1x128xf32, #tpu.memory_space<vmem>>, vector<1x128xf32>,
        %cst_23 = arith.constant 0.000000e+00 : f32
        %32 = vector.broadcast %cst_23 : f32 to vector<1x128xf32>
        %c0_24 = arith.constant 0 : index
        %c0_25 = arith.constant 0 : index
        %33 = vector.load %arg9[%c0_24, %c0_25] : memref<1x128xf32, #tpu.memory_space<vmem>>, vector<1x128xf32>
        tpu.vector_store %arg9[%c0_24, %c0_25], %32 {strides = array<i32>} : memref<1x128xf32, #tpu.memory_space<vmem>>, vector<1x128xf32>,
      } else {
      }
      %c0 = arith.constant 0 : index
      %c0_4 = arith.constant 0 : index
      %11 = vector.load %arg2[%c0, %c0_4] : memref<208x128xbf16, #tpu.memory_space<vmem>>, vector<208x128xbf16>
      %c0_5 = arith.constant 0 : index
      %c0_6 = arith.constant 0 : index
      %12 = vector.load %arg3[%c0_5, %c0_6] : memref<128x128xbf16, #tpu.memory_space<vmem>>, vector<128x128xbf16>
      %cst = arith.constant dense<0.000000e+00> : vector<208x128xf32>
      %13 = tpu.matmul %11, %12, %cst {dimension_numbers = #tpu.dot_dimension_numbers<[1], [0], [0], [1], [0, 0, 1, 1], [], []>} : vector<208x128xbf16>, vector<128x128xbf16>, vector<208x128xf32> -> vector<208x128xf32>
      %14 = arith.index_cast %1 : i32 to index
      %c0_7 = arith.constant 0 : index
      %15 = vector.load %arg7[%14, %c0_7] : memref<208x128xf32, #tpu.memory_space<vmem>>, vector<208x128xf32>
      tpu.vector_store %arg7[%14, %c0_7], %13 {strides = array<i32>} : memref<208x128xf32, #tpu.memory_space<vmem>>, vector<208x128xf32>,
      %c0_8 = arith.constant 0 : index
      %c0_9 = arith.constant 0 : index
      %16 = vector.load %arg8[%c0_8, %c0_9] : memref<1x128xf32, #tpu.memory_space<vmem>>, vector<1x128xf32>
      %cst_10 = arith.constant dense<0.000000e+00> : vector<128xf32>
      %17 = vector.multi_reduction <add>, %13, %cst_10 [0] : vector<208x128xf32> to vector<128xf32>
      %18 = vector.shape_cast %17 : vector<128xf32> to vector<1x128xf32>
      %19 = arith.addf %16, %18 : vector<1x128xf32>
      %c0_11 = arith.constant 0 : index
      %c0_12 = arith.constant 0 : index
      %20 = vector.load %arg8[%c0_11, %c0_12] : memref<1x128xf32, #tpu.memory_space<vmem>>, vector<1x128xf32>
      tpu.vector_store %arg8[%c0_11, %c0_12], %19 {strides = array<i32>} : memref<1x128xf32, #tpu.memory_space<vmem>>, vector<1x128xf32>,
      %c0_13 = arith.constant 0 : index
      %c0_14 = arith.constant 0 : index
      %21 = vector.load %arg9[%c0_13, %c0_14] : memref<1x128xf32, #tpu.memory_space<vmem>>, vector<1x128xf32>
      %22 = arith.mulf %13, %13 : vector<208x128xf32>
      %cst_15 = arith.constant dense<0.000000e+00> : vector<128xf32>
      %23 = vector.multi_reduction <add>, %22, %cst_15 [0] : vector<208x128xf32> to vector<128xf32>
      %24 = vector.shape_cast %23 : vector<128xf32> to vector<1x128xf32>
      %25 = arith.addf %21, %24 : vector<1x128xf32>
      %c0_16 = arith.constant 0 : index
      %c0_17 = arith.constant 0 : index
      %26 = vector.load %arg9[%c0_16, %c0_17] : memref<1x128xf32, #tpu.memory_space<vmem>>, vector<1x128xf32>
      tpu.vector_store %arg9[%c0_16, %c0_17], %25 {strides = array<i32>} : memref<1x128xf32, #tpu.memory_space<vmem>>, vector<1x128xf32>,
      %c0_i32_18 = arith.constant 0 : i32
      %27 = arith.cmpi eq, %arg1, %c0_i32_18 : i32
      %28 = arith.extui %27 : i1 to i32
      %c0_i32_19 = arith.constant 0 : i32
      %29 = arith.cmpi ne, %28, %c0_i32_19 : i32
      scf.if %29 {
        %c0_20 = arith.constant 0 : index
        %c0_21 = arith.constant 0 : index
        %30 = vector.load %arg8[%c0_20, %c0_21] : memref<1x128xf32, #tpu.memory_space<vmem>>, vector<1x128xf32>
        %cst_22 = arith.constant 5.000000e-03 : f32
        %31 = vector.broadcast %cst_22 : f32 to vector<1x128xf32>
        %32 = arith.mulf %30, %31 : vector<1x128xf32>
        %c0_23 = arith.constant 0 : index
        %c0_24 = arith.constant 0 : index
        %33 = vector.load %arg9[%c0_23, %c0_24] : memref<1x128xf32, #tpu.memory_space<vmem>>, vector<1x128xf32>
        %cst_25 = arith.constant 5.000000e-03 : f32
        %34 = vector.broadcast %cst_25 : f32 to vector<1x128xf32>
        %35 = arith.mulf %33, %34 : vector<1x128xf32>
        %36 = arith.mulf %32, %32 : vector<1x128xf32>
        %37 = arith.subf %35, %36 : vector<1x128xf32>
        %cst_26 = arith.constant 0.000000e+00 : f32
        %38 = vector.broadcast %cst_26 : f32 to vector<1x128xf32>
        %39 = arith.maximumf %37, %38 : vector<1x128xf32>
        %c0_27 = arith.constant 0 : index
        %c0_28 = arith.constant 0 : index
        %40 = vector.load %arg4[%c0_27, %c0_28] : memref<1x128xf32, #tpu.memory_space<vmem>>, vector<1x128xf32>
        %cst_29 = arith.constant 9.99999974E-6 : f32
        %41 = vector.broadcast %cst_29 : f32 to vector<1x128xf32>
        %42 = arith.addf %39, %41 : vector<1x128xf32>
        %43 = math.rsqrt %42 : vector<1x128xf32>
        %44 = arith.mulf %40, %43 : vector<1x128xf32>
        %c0_30 = arith.constant 0 : index
        %c0_31 = arith.constant 0 : index
        %45 = vector.load %arg8[%c0_30, %c0_31] : memref<1x128xf32, #tpu.memory_space<vmem>>, vector<1x128xf32>
        tpu.vector_store %arg8[%c0_30, %c0_31], %44 {strides = array<i32>} : memref<1x128xf32, #tpu.memory_space<vmem>>, vector<1x128xf32>,
        %c0_32 = arith.constant 0 : index
        %c0_33 = arith.constant 0 : index
        %46 = vector.load %arg5[%c0_32, %c0_33] : memref<1x128xf32, #tpu.memory_space<vmem>>, vector<1x128xf32>
        %47 = arith.mulf %32, %44 : vector<1x128xf32>
        %48 = arith.subf %46, %47 : vector<1x128xf32>
        %c0_34 = arith.constant 0 : index
        %c0_35 = arith.constant 0 : index
        %49 = vector.load %arg9[%c0_34, %c0_35] : memref<1x128xf32, #tpu.memory_space<vmem>>, vector<1x128xf32>
        tpu.vector_store %arg9[%c0_34, %c0_35], %48 {strides = array<i32>} : memref<1x128xf32, #tpu.memory_space<vmem>>, vector<1x128xf32>,
      } else {
      }
    } else {
    }
    %c1_i32 = arith.constant 1 : i32
    %5 = arith.cmpi eq, %arg0, %c1_i32 : i32
    %6 = arith.extui %5 : i1 to i32
    %c0_i32_1 = arith.constant 0 : i32
    %7 = arith.cmpi ne, %6, %c0_i32_1 : i32
    scf.if %7 {
      %8 = arith.index_cast %1 : i32 to index
      %c0 = arith.constant 0 : index
      %9 = vector.load %arg7[%8, %c0] : memref<208x128xf32, #tpu.memory_space<vmem>>, vector<208x128xf32>
      %c0_2 = arith.constant 0 : index
      %c0_3 = arith.constant 0 : index
      %10 = vector.load %arg8[%c0_2, %c0_3] : memref<1x128xf32, #tpu.memory_space<vmem>>, vector<1x128xf32>
      %11 = vector.broadcast %10 : vector<1x128xf32> to vector<208x128xf32>
      %12 = arith.mulf %9, %11 : vector<208x128xf32>
      %c0_4 = arith.constant 0 : index
      %c0_5 = arith.constant 0 : index
      %13 = vector.load %arg9[%c0_4, %c0_5] : memref<1x128xf32, #tpu.memory_space<vmem>>, vector<1x128xf32>
      %14 = vector.broadcast %13 : vector<1x128xf32> to vector<208x128xf32>
      %15 = arith.addf %12, %14 : vector<208x128xf32>
      %cst = arith.constant 0.000000e+00 : f32
      %16 = vector.broadcast %cst : f32 to vector<208x128xf32>
      %17 = arith.cmpf oge, %15, %16 : vector<208x128xf32>
      %cst_6 = arith.constant 2.000000e-01 : f32
      %18 = vector.broadcast %cst_6 : f32 to vector<208x128xf32>
      %19 = arith.mulf %18, %15 : vector<208x128xf32>
      %20 = arith.select %17, %15, %19 : vector<208x128xi1>, vector<208x128xf32>
      %21 = arith.truncf %20 : vector<208x128xf32> to vector<208x128xbf16>
      %c0_7 = arith.constant 0 : index
      %c0_8 = arith.constant 0 : index
      %22 = vector.load %arg6[%c0_7, %c0_8] : memref<208x128xbf16, #tpu.memory_space<vmem>>, vector<208x128xbf16>
      tpu.vector_store %arg6[%c0_7, %c0_8], %21 {strides = array<i32>} : memref<208x128xbf16, #tpu.memory_space<vmem>>, vector<208x128xbf16>,
    } else {
    }
    return
  }
  func.func @transform_0(%arg0: i32, %arg1: i32) -> (i32, i32) {
    %c1_i32 = arith.constant 1 : i32
    %0 = arith.subi %c1_i32, %arg0 : i32
    %1 = arith.muli %0, %arg1 : i32
    %c0_i32 = arith.constant 0 : i32
    %2 = arith.muli %arg0, %c0_i32 : i32
    %3 = arith.addi %1, %2 : i32
    %c0_i32_0 = arith.constant 0 : i32
    %c0_i32_1 = arith.constant 0 : i32
    return %3, %c0_i32_0 : i32, i32
  }
  func.func @transform_1(%arg0: i32, %arg1: i32) -> (i32, i32) {
    %c0_i32 = arith.constant 0 : i32
    %c0_i32_0 = arith.constant 0 : i32
    %c0_i32_1 = arith.constant 0 : i32
    return %c0_i32, %c0_i32_0 : i32, i32
  }
  func.func @transform_2(%arg0: i32, %arg1: i32) -> (i32, i32) {
    %c0_i32 = arith.constant 0 : i32
    %c0_i32_0 = arith.constant 0 : i32
    %c0_i32_1 = arith.constant 0 : i32
    return %c0_i32, %c0_i32_0 : i32, i32
  }
  func.func @transform_3(%arg0: i32, %arg1: i32) -> (i32, i32) {
    %c0_i32 = arith.constant 0 : i32
    %c0_i32_0 = arith.constant 0 : i32
    %c0_i32_1 = arith.constant 0 : i32
    return %c0_i32, %c0_i32_0 : i32, i32
  }
  func.func @transform_4(%arg0: i32, %arg1: i32) -> (i32, i32) {
    %0 = arith.muli %arg0, %arg1 : i32
    %c0_i32 = arith.constant 0 : i32
    %c0_i32_0 = arith.constant 0 : i32
    return %0, %c0_i32 : i32, i32
  }
}

module attributes {stable_mosaic.version = 11 : i64} {
  func.func @_fused_conv_bn_lrelu_kernel(%arg0: i32, %arg1: i32, %arg2: memref<64x128xbf16, #tpu.memory_space<vmem>>, %arg3: memref<128x128xbf16, #tpu.memory_space<vmem>>, %arg4: memref<1x128xf32, #tpu.memory_space<vmem>>, %arg5: memref<1x128xf32, #tpu.memory_space<vmem>>, %arg6: memref<64x128xbf16, #tpu.memory_space<vmem>>, %arg7: memref<64x128xf32, #tpu.memory_space<vmem>>, %arg8: memref<1x128xf32, #tpu.memory_space<vmem>>, %arg9: memref<1x128xf32, #tpu.memory_space<vmem>>) attributes {dimension_semantics = [#tpu.dimension_semantics<arbitrary>, #tpu.dimension_semantics<arbitrary>], iteration_bounds = array<i64: 2, 1>, scalar_prefetch = 0 : i64, scratch_operands = 3 : i64, tpu.core_type = #tpu.core_type<tc>, window_params = [{transform_indices = @transform_0, window_bounds = array<i64: 64, 128>}, {pipeline_mode = #tpu.pipeline_mode<synchronous>, transform_indices = @transform_1, window_bounds = array<i64: 128, 128>}, {pipeline_mode = #tpu.pipeline_mode<synchronous>, transform_indices = @transform_2, window_bounds = array<i64: 1, 128>}, {pipeline_mode = #tpu.pipeline_mode<synchronous>, transform_indices = @transform_3, window_bounds = array<i64: 1, 128>}, {transform_indices = @transform_4, window_bounds = array<i64: 64, 128>}]} {
    %c64_i32 = arith.constant 64 : i32
    %0 = arith.muli %arg1, %c64_i32 : i32
    %1 = tpu.assume_multiple %0, 16 : i32
    %c0_i32 = arith.constant 0 : i32
    %2 = arith.cmpi eq, %arg0, %c0_i32 : i32
    %3 = arith.extui %2 : i1 to i32
    %c0_i32_0 = arith.constant 0 : i32
    %4 = arith.cmpi ne, %3, %c0_i32_0 : i32
    scf.if %4 {
      %c0_i32_2 = arith.constant 0 : i32
      %8 = arith.cmpi eq, %arg1, %c0_i32_2 : i32
      %9 = arith.extui %8 : i1 to i32
      %c0_i32_3 = arith.constant 0 : i32
      %10 = arith.cmpi ne, %9, %c0_i32_3 : i32
      scf.if %10 {
        %cst_20 = arith.constant 0.000000e+00 : f32
        %30 = vector.broadcast %cst_20 : f32 to vector<1x128xf32>
        %c0_21 = arith.constant 0 : index
        %c0_22 = arith.constant 0 : index
        %31 = vector.load %arg8[%c0_21, %c0_22] : memref<1x128xf32, #tpu.memory_space<vmem>>, vector<1x128xf32>
        tpu.vector_store %arg8[%c0_21, %c0_22], %30 {strides = array<i32>} : memref<1x128xf32, #tpu.memory_space<vmem>>, vector<1x128xf32>,
        %cst_23 = arith.constant 0.000000e+00 : f32
        %32 = vector.broadcast %cst_23 : f32 to vector<1x128xf32>
        %c0_24 = arith.constant 0 : index
        %c0_25 = arith.constant 0 : index
        %33 = vector.load %arg9[%c0_24, %c0_25] : memref<1x128xf32, #tpu.memory_space<vmem>>, vector<1x128xf32>
        tpu.vector_store %arg9[%c0_24, %c0_25], %32 {strides = array<i32>} : memref<1x128xf32, #tpu.memory_space<vmem>>, vector<1x128xf32>,
      } else {
      }
      %c0 = arith.constant 0 : index
      %c0_4 = arith.constant 0 : index
      %11 = vector.load %arg2[%c0, %c0_4] : memref<64x128xbf16, #tpu.memory_space<vmem>>, vector<64x128xbf16>
      %c0_5 = arith.constant 0 : index
      %c0_6 = arith.constant 0 : index
      %12 = vector.load %arg3[%c0_5, %c0_6] : memref<128x128xbf16, #tpu.memory_space<vmem>>, vector<128x128xbf16>
      %cst = arith.constant dense<0.000000e+00> : vector<64x128xf32>
      %13 = tpu.matmul %11, %12, %cst {dimension_numbers = #tpu.dot_dimension_numbers<[1], [0], [0], [1], [0, 0, 1, 1], [], []>} : vector<64x128xbf16>, vector<128x128xbf16>, vector<64x128xf32> -> vector<64x128xf32>
      %14 = arith.index_cast %1 : i32 to index
      %c0_7 = arith.constant 0 : index
      %15 = vector.load %arg7[%14, %c0_7] : memref<64x128xf32, #tpu.memory_space<vmem>>, vector<64x128xf32>
      tpu.vector_store %arg7[%14, %c0_7], %13 {strides = array<i32>} : memref<64x128xf32, #tpu.memory_space<vmem>>, vector<64x128xf32>,
      %c0_8 = arith.constant 0 : index
      %c0_9 = arith.constant 0 : index
      %16 = vector.load %arg8[%c0_8, %c0_9] : memref<1x128xf32, #tpu.memory_space<vmem>>, vector<1x128xf32>
      %cst_10 = arith.constant dense<0.000000e+00> : vector<128xf32>
      %17 = vector.multi_reduction <add>, %13, %cst_10 [0] : vector<64x128xf32> to vector<128xf32>
      %18 = vector.shape_cast %17 : vector<128xf32> to vector<1x128xf32>
      %19 = arith.addf %16, %18 : vector<1x128xf32>
      %c0_11 = arith.constant 0 : index
      %c0_12 = arith.constant 0 : index
      %20 = vector.load %arg8[%c0_11, %c0_12] : memref<1x128xf32, #tpu.memory_space<vmem>>, vector<1x128xf32>
      tpu.vector_store %arg8[%c0_11, %c0_12], %19 {strides = array<i32>} : memref<1x128xf32, #tpu.memory_space<vmem>>, vector<1x128xf32>,
      %c0_13 = arith.constant 0 : index
      %c0_14 = arith.constant 0 : index
      %21 = vector.load %arg9[%c0_13, %c0_14] : memref<1x128xf32, #tpu.memory_space<vmem>>, vector<1x128xf32>
      %22 = arith.mulf %13, %13 : vector<64x128xf32>
      %cst_15 = arith.constant dense<0.000000e+00> : vector<128xf32>
      %23 = vector.multi_reduction <add>, %22, %cst_15 [0] : vector<64x128xf32> to vector<128xf32>
      %24 = vector.shape_cast %23 : vector<128xf32> to vector<1x128xf32>
      %25 = arith.addf %21, %24 : vector<1x128xf32>
      %c0_16 = arith.constant 0 : index
      %c0_17 = arith.constant 0 : index
      %26 = vector.load %arg9[%c0_16, %c0_17] : memref<1x128xf32, #tpu.memory_space<vmem>>, vector<1x128xf32>
      tpu.vector_store %arg9[%c0_16, %c0_17], %25 {strides = array<i32>} : memref<1x128xf32, #tpu.memory_space<vmem>>, vector<1x128xf32>,
      %c0_i32_18 = arith.constant 0 : i32
      %27 = arith.cmpi eq, %arg1, %c0_i32_18 : i32
      %28 = arith.extui %27 : i1 to i32
      %c0_i32_19 = arith.constant 0 : i32
      %29 = arith.cmpi ne, %28, %c0_i32_19 : i32
      scf.if %29 {
        %c0_20 = arith.constant 0 : index
        %c0_21 = arith.constant 0 : index
        %30 = vector.load %arg8[%c0_20, %c0_21] : memref<1x128xf32, #tpu.memory_space<vmem>>, vector<1x128xf32>
        %cst_22 = arith.constant 2.000000e-02 : f32
        %31 = vector.broadcast %cst_22 : f32 to vector<1x128xf32>
        %32 = arith.mulf %30, %31 : vector<1x128xf32>
        %c0_23 = arith.constant 0 : index
        %c0_24 = arith.constant 0 : index
        %33 = vector.load %arg9[%c0_23, %c0_24] : memref<1x128xf32, #tpu.memory_space<vmem>>, vector<1x128xf32>
        %cst_25 = arith.constant 2.000000e-02 : f32
        %34 = vector.broadcast %cst_25 : f32 to vector<1x128xf32>
        %35 = arith.mulf %33, %34 : vector<1x128xf32>
        %36 = arith.mulf %32, %32 : vector<1x128xf32>
        %37 = arith.subf %35, %36 : vector<1x128xf32>
        %cst_26 = arith.constant 0.000000e+00 : f32
        %38 = vector.broadcast %cst_26 : f32 to vector<1x128xf32>
        %39 = arith.maximumf %37, %38 : vector<1x128xf32>
        %c0_27 = arith.constant 0 : index
        %c0_28 = arith.constant 0 : index
        %40 = vector.load %arg4[%c0_27, %c0_28] : memref<1x128xf32, #tpu.memory_space<vmem>>, vector<1x128xf32>
        %cst_29 = arith.constant 9.99999974E-6 : f32
        %41 = vector.broadcast %cst_29 : f32 to vector<1x128xf32>
        %42 = arith.addf %39, %41 : vector<1x128xf32>
        %43 = math.rsqrt %42 : vector<1x128xf32>
        %44 = arith.mulf %40, %43 : vector<1x128xf32>
        %c0_30 = arith.constant 0 : index
        %c0_31 = arith.constant 0 : index
        %45 = vector.load %arg8[%c0_30, %c0_31] : memref<1x128xf32, #tpu.memory_space<vmem>>, vector<1x128xf32>
        tpu.vector_store %arg8[%c0_30, %c0_31], %44 {strides = array<i32>} : memref<1x128xf32, #tpu.memory_space<vmem>>, vector<1x128xf32>,
        %c0_32 = arith.constant 0 : index
        %c0_33 = arith.constant 0 : index
        %46 = vector.load %arg5[%c0_32, %c0_33] : memref<1x128xf32, #tpu.memory_space<vmem>>, vector<1x128xf32>
        %47 = arith.mulf %32, %44 : vector<1x128xf32>
        %48 = arith.subf %46, %47 : vector<1x128xf32>
        %c0_34 = arith.constant 0 : index
        %c0_35 = arith.constant 0 : index
        %49 = vector.load %arg9[%c0_34, %c0_35] : memref<1x128xf32, #tpu.memory_space<vmem>>, vector<1x128xf32>
        tpu.vector_store %arg9[%c0_34, %c0_35], %48 {strides = array<i32>} : memref<1x128xf32, #tpu.memory_space<vmem>>, vector<1x128xf32>,
      } else {
      }
    } else {
    }
    %c1_i32 = arith.constant 1 : i32
    %5 = arith.cmpi eq, %arg0, %c1_i32 : i32
    %6 = arith.extui %5 : i1 to i32
    %c0_i32_1 = arith.constant 0 : i32
    %7 = arith.cmpi ne, %6, %c0_i32_1 : i32
    scf.if %7 {
      %8 = arith.index_cast %1 : i32 to index
      %c0 = arith.constant 0 : index
      %9 = vector.load %arg7[%8, %c0] : memref<64x128xf32, #tpu.memory_space<vmem>>, vector<64x128xf32>
      %c0_2 = arith.constant 0 : index
      %c0_3 = arith.constant 0 : index
      %10 = vector.load %arg8[%c0_2, %c0_3] : memref<1x128xf32, #tpu.memory_space<vmem>>, vector<1x128xf32>
      %11 = vector.broadcast %10 : vector<1x128xf32> to vector<64x128xf32>
      %12 = arith.mulf %9, %11 : vector<64x128xf32>
      %c0_4 = arith.constant 0 : index
      %c0_5 = arith.constant 0 : index
      %13 = vector.load %arg9[%c0_4, %c0_5] : memref<1x128xf32, #tpu.memory_space<vmem>>, vector<1x128xf32>
      %14 = vector.broadcast %13 : vector<1x128xf32> to vector<64x128xf32>
      %15 = arith.addf %12, %14 : vector<64x128xf32>
      %cst = arith.constant 0.000000e+00 : f32
      %16 = vector.broadcast %cst : f32 to vector<64x128xf32>
      %17 = arith.cmpf oge, %15, %16 : vector<64x128xf32>
      %cst_6 = arith.constant 2.000000e-01 : f32
      %18 = vector.broadcast %cst_6 : f32 to vector<64x128xf32>
      %19 = arith.mulf %18, %15 : vector<64x128xf32>
      %20 = arith.select %17, %15, %19 : vector<64x128xi1>, vector<64x128xf32>
      %21 = arith.truncf %20 : vector<64x128xf32> to vector<64x128xbf16>
      %c0_7 = arith.constant 0 : index
      %c0_8 = arith.constant 0 : index
      %22 = vector.load %arg6[%c0_7, %c0_8] : memref<64x128xbf16, #tpu.memory_space<vmem>>, vector<64x128xbf16>
      tpu.vector_store %arg6[%c0_7, %c0_8], %21 {strides = array<i32>} : memref<64x128xbf16, #tpu.memory_space<vmem>>, vector<64x128xbf16>,
    } else {
    }
    return
  }
  func.func @transform_0(%arg0: i32, %arg1: i32) -> (i32, i32) {
    %c1_i32 = arith.constant 1 : i32
    %0 = arith.subi %c1_i32, %arg0 : i32
    %1 = arith.muli %0, %arg1 : i32
    %c0_i32 = arith.constant 0 : i32
    %2 = arith.muli %arg0, %c0_i32 : i32
    %3 = arith.addi %1, %2 : i32
    %c0_i32_0 = arith.constant 0 : i32
    %c0_i32_1 = arith.constant 0 : i32
    return %3, %c0_i32_0 : i32, i32
  }
  func.func @transform_1(%arg0: i32, %arg1: i32) -> (i32, i32) {
    %c0_i32 = arith.constant 0 : i32
    %c0_i32_0 = arith.constant 0 : i32
    %c0_i32_1 = arith.constant 0 : i32
    return %c0_i32, %c0_i32_0 : i32, i32
  }
  func.func @transform_2(%arg0: i32, %arg1: i32) -> (i32, i32) {
    %c0_i32 = arith.constant 0 : i32
    %c0_i32_0 = arith.constant 0 : i32
    %c0_i32_1 = arith.constant 0 : i32
    return %c0_i32, %c0_i32_0 : i32, i32
  }
  func.func @transform_3(%arg0: i32, %arg1: i32) -> (i32, i32) {
    %c0_i32 = arith.constant 0 : i32
    %c0_i32_0 = arith.constant 0 : i32
    %c0_i32_1 = arith.constant 0 : i32
    return %c0_i32, %c0_i32_0 : i32, i32
  }
  func.func @transform_4(%arg0: i32, %arg1: i32) -> (i32, i32) {
    %0 = arith.muli %arg0, %arg1 : i32
    %c0_i32 = arith.constant 0 : i32
    %c0_i32_0 = arith.constant 0 : i32
    return %0, %c0_i32 : i32, i32
  }
}

module attributes {stable_mosaic.version = 11 : i64} {
  func.func @_fused_conv_bn_lrelu_kernel(%arg0: i32, %arg1: i32, %arg2: memref<16x256xbf16, #tpu.memory_space<vmem>>, %arg3: memref<256x128xbf16, #tpu.memory_space<vmem>>, %arg4: memref<1x128xf32, #tpu.memory_space<vmem>>, %arg5: memref<1x128xf32, #tpu.memory_space<vmem>>, %arg6: memref<16x128xbf16, #tpu.memory_space<vmem>>, %arg7: memref<16x128xf32, #tpu.memory_space<vmem>>, %arg8: memref<1x128xf32, #tpu.memory_space<vmem>>, %arg9: memref<1x128xf32, #tpu.memory_space<vmem>>) attributes {dimension_semantics = [#tpu.dimension_semantics<arbitrary>, #tpu.dimension_semantics<arbitrary>], iteration_bounds = array<i64: 2, 1>, scalar_prefetch = 0 : i64, scratch_operands = 3 : i64, tpu.core_type = #tpu.core_type<tc>, window_params = [{transform_indices = @transform_0, window_bounds = array<i64: 16, 256>}, {pipeline_mode = #tpu.pipeline_mode<synchronous>, transform_indices = @transform_1, window_bounds = array<i64: 256, 128>}, {pipeline_mode = #tpu.pipeline_mode<synchronous>, transform_indices = @transform_2, window_bounds = array<i64: 1, 128>}, {pipeline_mode = #tpu.pipeline_mode<synchronous>, transform_indices = @transform_3, window_bounds = array<i64: 1, 128>}, {transform_indices = @transform_4, window_bounds = array<i64: 16, 128>}]} {
    %c16_i32 = arith.constant 16 : i32
    %0 = arith.muli %arg1, %c16_i32 : i32
    %1 = tpu.assume_multiple %0, 16 : i32
    %c0_i32 = arith.constant 0 : i32
    %2 = arith.cmpi eq, %arg0, %c0_i32 : i32
    %3 = arith.extui %2 : i1 to i32
    %c0_i32_0 = arith.constant 0 : i32
    %4 = arith.cmpi ne, %3, %c0_i32_0 : i32
    scf.if %4 {
      %c0_i32_2 = arith.constant 0 : i32
      %8 = arith.cmpi eq, %arg1, %c0_i32_2 : i32
      %9 = arith.extui %8 : i1 to i32
      %c0_i32_3 = arith.constant 0 : i32
      %10 = arith.cmpi ne, %9, %c0_i32_3 : i32
      scf.if %10 {
        %cst_20 = arith.constant 0.000000e+00 : f32
        %30 = vector.broadcast %cst_20 : f32 to vector<1x128xf32>
        %c0_21 = arith.constant 0 : index
        %c0_22 = arith.constant 0 : index
        %31 = vector.load %arg8[%c0_21, %c0_22] : memref<1x128xf32, #tpu.memory_space<vmem>>, vector<1x128xf32>
        tpu.vector_store %arg8[%c0_21, %c0_22], %30 {strides = array<i32>} : memref<1x128xf32, #tpu.memory_space<vmem>>, vector<1x128xf32>,
        %cst_23 = arith.constant 0.000000e+00 : f32
        %32 = vector.broadcast %cst_23 : f32 to vector<1x128xf32>
        %c0_24 = arith.constant 0 : index
        %c0_25 = arith.constant 0 : index
        %33 = vector.load %arg9[%c0_24, %c0_25] : memref<1x128xf32, #tpu.memory_space<vmem>>, vector<1x128xf32>
        tpu.vector_store %arg9[%c0_24, %c0_25], %32 {strides = array<i32>} : memref<1x128xf32, #tpu.memory_space<vmem>>, vector<1x128xf32>,
      } else {
      }
      %c0 = arith.constant 0 : index
      %c0_4 = arith.constant 0 : index
      %11 = vector.load %arg2[%c0, %c0_4] : memref<16x256xbf16, #tpu.memory_space<vmem>>, vector<16x256xbf16>
      %c0_5 = arith.constant 0 : index
      %c0_6 = arith.constant 0 : index
      %12 = vector.load %arg3[%c0_5, %c0_6] : memref<256x128xbf16, #tpu.memory_space<vmem>>, vector<256x128xbf16>
      %cst = arith.constant dense<0.000000e+00> : vector<16x128xf32>
      %13 = tpu.matmul %11, %12, %cst {dimension_numbers = #tpu.dot_dimension_numbers<[1], [0], [0], [1], [0, 0, 1, 1], [], []>} : vector<16x256xbf16>, vector<256x128xbf16>, vector<16x128xf32> -> vector<16x128xf32>
      %14 = arith.index_cast %1 : i32 to index
      %c0_7 = arith.constant 0 : index
      %15 = vector.load %arg7[%14, %c0_7] : memref<16x128xf32, #tpu.memory_space<vmem>>, vector<16x128xf32>
      tpu.vector_store %arg7[%14, %c0_7], %13 {strides = array<i32>} : memref<16x128xf32, #tpu.memory_space<vmem>>, vector<16x128xf32>,
      %c0_8 = arith.constant 0 : index
      %c0_9 = arith.constant 0 : index
      %16 = vector.load %arg8[%c0_8, %c0_9] : memref<1x128xf32, #tpu.memory_space<vmem>>, vector<1x128xf32>
      %cst_10 = arith.constant dense<0.000000e+00> : vector<128xf32>
      %17 = vector.multi_reduction <add>, %13, %cst_10 [0] : vector<16x128xf32> to vector<128xf32>
      %18 = vector.shape_cast %17 : vector<128xf32> to vector<1x128xf32>
      %19 = arith.addf %16, %18 : vector<1x128xf32>
      %c0_11 = arith.constant 0 : index
      %c0_12 = arith.constant 0 : index
      %20 = vector.load %arg8[%c0_11, %c0_12] : memref<1x128xf32, #tpu.memory_space<vmem>>, vector<1x128xf32>
      tpu.vector_store %arg8[%c0_11, %c0_12], %19 {strides = array<i32>} : memref<1x128xf32, #tpu.memory_space<vmem>>, vector<1x128xf32>,
      %c0_13 = arith.constant 0 : index
      %c0_14 = arith.constant 0 : index
      %21 = vector.load %arg9[%c0_13, %c0_14] : memref<1x128xf32, #tpu.memory_space<vmem>>, vector<1x128xf32>
      %22 = arith.mulf %13, %13 : vector<16x128xf32>
      %cst_15 = arith.constant dense<0.000000e+00> : vector<128xf32>
      %23 = vector.multi_reduction <add>, %22, %cst_15 [0] : vector<16x128xf32> to vector<128xf32>
      %24 = vector.shape_cast %23 : vector<128xf32> to vector<1x128xf32>
      %25 = arith.addf %21, %24 : vector<1x128xf32>
      %c0_16 = arith.constant 0 : index
      %c0_17 = arith.constant 0 : index
      %26 = vector.load %arg9[%c0_16, %c0_17] : memref<1x128xf32, #tpu.memory_space<vmem>>, vector<1x128xf32>
      tpu.vector_store %arg9[%c0_16, %c0_17], %25 {strides = array<i32>} : memref<1x128xf32, #tpu.memory_space<vmem>>, vector<1x128xf32>,
      %c0_i32_18 = arith.constant 0 : i32
      %27 = arith.cmpi eq, %arg1, %c0_i32_18 : i32
      %28 = arith.extui %27 : i1 to i32
      %c0_i32_19 = arith.constant 0 : i32
      %29 = arith.cmpi ne, %28, %c0_i32_19 : i32
      scf.if %29 {
        %c0_20 = arith.constant 0 : index
        %c0_21 = arith.constant 0 : index
        %30 = vector.load %arg8[%c0_20, %c0_21] : memref<1x128xf32, #tpu.memory_space<vmem>>, vector<1x128xf32>
        %cst_22 = arith.constant 1.250000e-01 : f32
        %31 = vector.broadcast %cst_22 : f32 to vector<1x128xf32>
        %32 = arith.mulf %30, %31 : vector<1x128xf32>
        %c0_23 = arith.constant 0 : index
        %c0_24 = arith.constant 0 : index
        %33 = vector.load %arg9[%c0_23, %c0_24] : memref<1x128xf32, #tpu.memory_space<vmem>>, vector<1x128xf32>
        %cst_25 = arith.constant 1.250000e-01 : f32
        %34 = vector.broadcast %cst_25 : f32 to vector<1x128xf32>
        %35 = arith.mulf %33, %34 : vector<1x128xf32>
        %36 = arith.mulf %32, %32 : vector<1x128xf32>
        %37 = arith.subf %35, %36 : vector<1x128xf32>
        %cst_26 = arith.constant 0.000000e+00 : f32
        %38 = vector.broadcast %cst_26 : f32 to vector<1x128xf32>
        %39 = arith.maximumf %37, %38 : vector<1x128xf32>
        %c0_27 = arith.constant 0 : index
        %c0_28 = arith.constant 0 : index
        %40 = vector.load %arg4[%c0_27, %c0_28] : memref<1x128xf32, #tpu.memory_space<vmem>>, vector<1x128xf32>
        %cst_29 = arith.constant 9.99999974E-6 : f32
        %41 = vector.broadcast %cst_29 : f32 to vector<1x128xf32>
        %42 = arith.addf %39, %41 : vector<1x128xf32>
        %43 = math.rsqrt %42 : vector<1x128xf32>
        %44 = arith.mulf %40, %43 : vector<1x128xf32>
        %c0_30 = arith.constant 0 : index
        %c0_31 = arith.constant 0 : index
        %45 = vector.load %arg8[%c0_30, %c0_31] : memref<1x128xf32, #tpu.memory_space<vmem>>, vector<1x128xf32>
        tpu.vector_store %arg8[%c0_30, %c0_31], %44 {strides = array<i32>} : memref<1x128xf32, #tpu.memory_space<vmem>>, vector<1x128xf32>,
        %c0_32 = arith.constant 0 : index
        %c0_33 = arith.constant 0 : index
        %46 = vector.load %arg5[%c0_32, %c0_33] : memref<1x128xf32, #tpu.memory_space<vmem>>, vector<1x128xf32>
        %47 = arith.mulf %32, %44 : vector<1x128xf32>
        %48 = arith.subf %46, %47 : vector<1x128xf32>
        %c0_34 = arith.constant 0 : index
        %c0_35 = arith.constant 0 : index
        %49 = vector.load %arg9[%c0_34, %c0_35] : memref<1x128xf32, #tpu.memory_space<vmem>>, vector<1x128xf32>
        tpu.vector_store %arg9[%c0_34, %c0_35], %48 {strides = array<i32>} : memref<1x128xf32, #tpu.memory_space<vmem>>, vector<1x128xf32>,
      } else {
      }
    } else {
    }
    %c1_i32 = arith.constant 1 : i32
    %5 = arith.cmpi eq, %arg0, %c1_i32 : i32
    %6 = arith.extui %5 : i1 to i32
    %c0_i32_1 = arith.constant 0 : i32
    %7 = arith.cmpi ne, %6, %c0_i32_1 : i32
    scf.if %7 {
      %8 = arith.index_cast %1 : i32 to index
      %c0 = arith.constant 0 : index
      %9 = vector.load %arg7[%8, %c0] : memref<16x128xf32, #tpu.memory_space<vmem>>, vector<16x128xf32>
      %c0_2 = arith.constant 0 : index
      %c0_3 = arith.constant 0 : index
      %10 = vector.load %arg8[%c0_2, %c0_3] : memref<1x128xf32, #tpu.memory_space<vmem>>, vector<1x128xf32>
      %11 = vector.broadcast %10 : vector<1x128xf32> to vector<16x128xf32>
      %12 = arith.mulf %9, %11 : vector<16x128xf32>
      %c0_4 = arith.constant 0 : index
      %c0_5 = arith.constant 0 : index
      %13 = vector.load %arg9[%c0_4, %c0_5] : memref<1x128xf32, #tpu.memory_space<vmem>>, vector<1x128xf32>
      %14 = vector.broadcast %13 : vector<1x128xf32> to vector<16x128xf32>
      %15 = arith.addf %12, %14 : vector<16x128xf32>
      %cst = arith.constant 0.000000e+00 : f32
      %16 = vector.broadcast %cst : f32 to vector<16x128xf32>
      %17 = arith.cmpf oge, %15, %16 : vector<16x128xf32>
      %cst_6 = arith.constant 2.000000e-01 : f32
      %18 = vector.broadcast %cst_6 : f32 to vector<16x128xf32>
      %19 = arith.mulf %18, %15 : vector<16x128xf32>
      %20 = arith.select %17, %15, %19 : vector<16x128xi1>, vector<16x128xf32>
      %21 = arith.truncf %20 : vector<16x128xf32> to vector<16x128xbf16>
      %c0_7 = arith.constant 0 : index
      %c0_8 = arith.constant 0 : index
      %22 = vector.load %arg6[%c0_7, %c0_8] : memref<16x128xbf16, #tpu.memory_space<vmem>>, vector<16x128xbf16>
      tpu.vector_store %arg6[%c0_7, %c0_8], %21 {strides = array<i32>} : memref<16x128xbf16, #tpu.memory_space<vmem>>, vector<16x128xbf16>,
    } else {
    }
    return
  }
  func.func @transform_0(%arg0: i32, %arg1: i32) -> (i32, i32) {
    %c1_i32 = arith.constant 1 : i32
    %0 = arith.subi %c1_i32, %arg0 : i32
    %1 = arith.muli %0, %arg1 : i32
    %c0_i32 = arith.constant 0 : i32
    %2 = arith.muli %arg0, %c0_i32 : i32
    %3 = arith.addi %1, %2 : i32
    %c0_i32_0 = arith.constant 0 : i32
    %c0_i32_1 = arith.constant 0 : i32
    return %3, %c0_i32_0 : i32, i32
  }
  func.func @transform_1(%arg0: i32, %arg1: i32) -> (i32, i32) {
    %c0_i32 = arith.constant 0 : i32
    %c0_i32_0 = arith.constant 0 : i32
    %c0_i32_1 = arith.constant 0 : i32
    return %c0_i32, %c0_i32_0 : i32, i32
  }
  func.func @transform_2(%arg0: i32, %arg1: i32) -> (i32, i32) {
    %c0_i32 = arith.constant 0 : i32
    %c0_i32_0 = arith.constant 0 : i32
    %c0_i32_1 = arith.constant 0 : i32
    return %c0_i32, %c0_i32_0 : i32, i32
  }
  func.func @transform_3(%arg0: i32, %arg1: i32) -> (i32, i32) {
    %c0_i32 = arith.constant 0 : i32
    %c0_i32_0 = arith.constant 0 : i32
    %c0_i32_1 = arith.constant 0 : i32
    return %c0_i32, %c0_i32_0 : i32, i32
  }
  func.func @transform_4(%arg0: i32, %arg1: i32) -> (i32, i32) {
    %0 = arith.muli %arg0, %arg1 : i32
    %c0_i32 = arith.constant 0 : i32
    %c0_i32_0 = arith.constant 0 : i32
    return %0, %c0_i32 : i32, i32
  }
}

</mosaic_0001>

<llo_original>
// kernel: front_end_forward.4
$region0: #{front_end_forward.4}
  #allocation0 [shape = 'u32[]', space=smem, size = 0x4, offset = 0x4, fixed_abs, tag = 'smem constant byte address 0x4 - core index']
  #allocation1 [shape = 'u32[144,128]{1,0:T(1,128)}', space=vmem, size = 0x12000, scoped, tag = 'internal scratch']
  %s0 = inlined_call_operand.vmem [shape: f32[672,1], index: 0, kind: input, shape index: {}]
  %s1 = inlined_call_operand.vmem [shape: f32[1,4], index: 1, kind: input, shape index: {}]
  %s2 = inlined_call_operand.vmem [shape: bf16[672,4], index: 2, kind: output, shape index: {}]
  %s3 = sld [smem:[#allocation0]]
  $region41: #{front_end_forward.4} parent=0
    _
  %s5 = ssub.s32 1, %s3
  %s6 = scalar_select 0, %s5, %s3
  loop: start=0, step=1, limit=4
  $region2: #{front_end_forward.4} parent=0 // loop_pre_header
    _
  $region3: #{front_end_forward.4} parent=0 // loop_header
    %s8 = sphi 0, %s12
    %p9 = scmp.ge.s32.totalorder %s8, 4
    %s18 = sphi 0, %s20
    %s21 = sphi 0, %s18
    %s22 = sphi 0, %s21
    %s38 = sphi 0, %s22
    %s42 = sphi 0, %s42
    %s44 = sphi 0, %s42
    %s45 = sphi 0, %s44
    %s59 = sphi 0, %s45
    %s65 = sphi 0, %s67
    %s68 = sphi 0, %s65
    %s69 = sphi 0, %s68
    %s85 = sphi 0, %s69
  $region4: #{front_end_forward.4} parent=0 // loop_header_branch
    %11 = sbr.rel (%p9) target = $region8
  $region5: #{front_end_forward.4} parent=0 // loop_body
    %s13 = ssub.s32 %s8, 1
    %s14 = ssub.s32 %s8, 2
    %s15 = sadd.s32 %s8, 1
    %s16 = ssub.s32 %s8, %s15
    %p17 = scmp.eq.s32.totalorder %s16, 0
    %s19 = sadd.s32 %s18, 1
    %s20 = scalar_select %p17, %s18, %s19
    %p23 = pneg %p17
    %p24 = scmp.eq.s32.totalorder %s8, 1
    %p25 = por %p23, %p24
    %p26 = scmp.ne.s32.totalorder %s18, %s21
    %p27 = scmp.eq.s32.totalorder %s8, 0
    %p28 = por %p26, %p27
    %p29 = scmp.ne.s32.totalorder %s18, %s21
    %p30 = scmp.eq.s32.totalorder %s13, 1
    %p31 = por %p29, %p30
    %p32 = scmp.ne.s32.totalorder %s21, %s22
    %p33 = scmp.eq.s32.totalorder %s13, 0
    %p34 = por %p32, %p33
    %p35 = scmp.ne.s32.totalorder %s21, %s22
    %p36 = scmp.eq.s32.totalorder %s14, 1
    %p37 = por %p35, %p36
    %p39 = scmp.ne.s32.totalorder %s22, %s38
    %p40 = scmp.eq.s32.totalorder %s14, 0
    %p41 = por %p39, %p40
    %s43 = sadd.s32 %s42, 1
    %p46 = scmp.eq.s32.totalorder %s8, 1
    %p47 = scmp.ne.s32.totalorder %s42, %s44
    %p48 = scmp.eq.s32.totalorder %s8, 0
    %p49 = por %p47, %p48
    %p50 = scmp.ne.s32.totalorder %s42, %s44
    %p51 = scmp.eq.s32.totalorder %s13, 1
    %p52 = por %p50, %p51
    %p53 = scmp.ne.s32.totalorder %s44, %s45
    %p54 = scmp.eq.s32.totalorder %s13, 0
    %p55 = por %p53, %p54
    %p56 = scmp.ne.s32.totalorder %s44, %s45
    %p57 = scmp.eq.s32.totalorder %s14, 1
    %p58 = por %p56, %p57
    %p60 = scmp.ne.s32.totalorder %s45, %s59
    %p61 = scmp.eq.s32.totalorder %s14, 0
    %p62 = por %p60, %p61
    %s63 = ssub.s32 %s8, %s15
    %p64 = scmp.eq.s32.totalorder %s63, 0
    %s66 = sadd.s32 %s65, 1
    %s67 = scalar_select %p64, %s65, %s66
    %p70 = pneg %p64
    %p71 = scmp.eq.s32.totalorder %s8, 1
    %p72 = por %p70, %p71
    %p73 = scmp.ne.s32.totalorder %s65, %s68
    %p74 = scmp.eq.s32.totalorder %s8, 0
    %p75 = por %p73, %p74
    %p76 = scmp.ne.s32.totalorder %s65, %s68
    %p77 = scmp.eq.s32.totalorder %s13, 1
    %p78 = por %p76, %p77
    %p79 = scmp.ne.s32.totalorder %s68, %s69
    %p80 = scmp.eq.s32.totalorder %s13, 0
    %p81 = por %p79, %p80
    %p82 = scmp.ne.s32.totalorder %s68, %s69
    %p83 = scmp.eq.s32.totalorder %s14, 1
    %p84 = por %p82, %p83
    %p86 = scmp.ne.s32.totalorder %s69, %s85
    %p87 = scmp.eq.s32.totalorder %s14, 0
    %p88 = por %p86, %p87
    %p89 = scmp.le.s32.totalorder 1, %s8
    %p90 = scmp.lt.s32.totalorder %s8, 3
    %p91 = pnand %p89, %p90
    %p92 = pneg %p91
    // Predicated region
    $region9: #{front_end_forward.4} parent=5 // pred_check
      _
    $region10: #{front_end_forward.4} parent=5 // pred_check_branch
      %94 = sbr.rel (%p91) target = $region12
    $region11: #{front_end_forward.4} parent=5 // pred_region
      %s95 = ssub.s32 %s8, 1
      // Predicated region
      $region13: #{front_end_forward.4} parent=11 // pred_check
        %p96 = pneg %p55
      $region14: #{front_end_forward.4} parent=11 // pred_check_branch
        %98 = sbr.rel (%p96) target = $region16
      $region15: #{front_end_forward.4} parent=11 // pred_region
        _
      $region16: #{front_end_forward.4} parent=11 // pred_fallthru
        _
    $region12: #{front_end_forward.4} parent=5 // pred_fallthru
      _
    %p99 = scmp.lt.s32.totalorder %s8, 2
    // Predicated region
    $region17: #{front_end_forward.4} parent=5 // pred_check
      %p100 = pneg %p99
    $region18: #{front_end_forward.4} parent=5 // pred_check_branch
      %102 = sbr.rel (%p100) target = $region20
    $region19: #{front_end_forward.4} parent=5 // pred_region
      // Predicated region
      $region21: #{front_end_forward.4} parent=19 // pred_check
        %p103 = pneg %p28
      $region22: #{front_end_forward.4} parent=19 // pred_check_branch
        %105 = sbr.rel (%p103) target = $region24
      $region23: #{front_end_forward.4} parent=19 // pred_region
        %s106 = smul.u32 42, %s8
        %p107 = scmp.lt.s32.totalorder %s106, 83
        %s108 = scalar_select %p107, %s106, 83
        %s109 = smul.addr %s108, 8
        %s110 = scalar_lea.vmem %s0, %s109
        %s111 = smul.u32 42, %s8
      $region24: #{front_end_forward.4} parent=19 // pred_fallthru
        _
    $region20: #{front_end_forward.4} parent=5 // pred_fallthru
      _
    %p112 = scmp.le.s32.totalorder 1, %s8
    %p113 = scmp.lt.s32.totalorder %s8, 3
    %p114 = pnand %p112, %p113
    %p115 = pneg %p114
    // Predicated region
    $region25: #{front_end_forward.4} parent=5 // pred_check
      _
    $region26: #{front_end_forward.4} parent=5 // pred_check_branch
      %117 = sbr.rel (%p114) target = $region28
    $region27: #{front_end_forward.4} parent=5 // pred_region
      %s118 = ssub.s32 %s8, 1
      %s119 = smul.u32 42, %s13
      %p120 = scmp.lt.s32.totalorder %s119, 83
      %s121 = scalar_select %p120, %s119, 83
      %s122 = smul.addr %s121, 8
      %s123 = scalar_lea.vmem %s0, %s122
      %p124 = pneg %p34
      %p125 = pneg %p31
      %p126 = pneg %p55
      %p127 = pneg %p52
      %p128 = pneg %p81
      %p129 = pneg %p78
      %s130 = smul.u32 42, %s13
      %p131 = scmp.lt.s32.totalorder %s130, 83
      %s132 = scalar_select %p131, %s130, 83
      %s133 = smul.addr %s132, 4
      %s134 = scalar_lea.vmem %s2, %s133
      %s135 = smul.u32 42, %s13
      %p136 = scmp.lt.s32.totalorder %s135, 83
      %s137 = scalar_select %p136, %s135, 83
      %s138 = smul.addr %s137, 8
      %s139 = scalar_lea.vmem %s0, %s138
      %s140 = smul.u32 42, %s13
      %s141 = smul.u32 42, %s13
      %p142 = scmp.lt.s32.totalorder %s141, 83
      %s143 = scalar_select %p142, %s141, 83
      %s144 = smul.addr %s143, 4
      %s145 = scalar_lea.vmem %s2, %s144
      %s146 = smul.u32 42, %s13
      %v147 = vld [vmem:[%s139] sm:$0xff]
      %v148 = vld [vmem:[%s139 + $0x8] sm:$0xff]
      %v149 = vld [vmem:[%s139 + $0x10] sm:$0xff]
      %v150 = vld [vmem:[%s139 + $0x18] sm:$0xff]
      %v151 = vld [vmem:[%s139 + $0x20] sm:$0xff]
      %v152 = vld [vmem:[%s139 + $0x28] sm:$0xff]
      %v153 = vld [vmem:[%s139 + $0x30] sm:$0xff]
      %v154 = vld [vmem:[%s139 + $0x38] sm:$0xff]
      %v155 = vld [vmem:[%s139 + $0x40] sm:$0xff]
      %v156 = vld [vmem:[%s139 + $0x48] sm:$0xff]
      %v157 = vld [vmem:[%s139 + $0x50] sm:$0xff]
      %v158 = vld [vmem:[%s139 + $0x58] sm:$0xff]
      %v159 = vld [vmem:[%s139 + $0x60] sm:$0xff]
      %v160 = vld [vmem:[%s139 + $0x68] sm:$0xff]
      %v161 = vld [vmem:[%s139 + $0x70] sm:$0xff]
      %v162 = vld [vmem:[%s139 + $0x78] sm:$0xff]
      %v163 = vld [vmem:[%s139 + $0x80] sm:$0xff]
      %v164 = vld [vmem:[%s139 + $0x88] sm:$0xff]
      %v165 = vld [vmem:[%s139 + $0x90] sm:$0xff]
      %v166 = vld [vmem:[%s139 + $0x98] sm:$0xff]
      %v167 = vld [vmem:[%s139 + $0xa0] sm:$0xff]
      %v168 = vld [vmem:[%s139 + $0xa8] sm:$0xff]
      %v169 = vld [vmem:[%s139 + $0xb0] sm:$0xff]
      %v170 = vld [vmem:[%s139 + $0xb8] sm:$0xff]
      %v171 = vld [vmem:[%s139 + $0xc0] sm:$0xff]
      %v172 = vld [vmem:[%s139 + $0xc8] sm:$0xff]
      %v173 = vld [vmem:[%s139 + $0xd0] sm:$0xff]
      %v174 = vld [vmem:[%s139 + $0xd8] sm:$0xff]
      %v175 = vld [vmem:[%s139 + $0xe0] sm:$0xff]
      %v176 = vld [vmem:[%s139 + $0xe8] sm:$0xff]
      %v177 = vld [vmem:[%s139 + $0xf0] sm:$0xff]
      %v178 = vld [vmem:[%s139 + $0xf8] sm:$0xff]
      %v179 = vld [vmem:[%s139 + $0x100] sm:$0xff]
      %v180 = vld [vmem:[%s139 + $0x108] sm:$0xff]
      %v181 = vld [vmem:[%s139 + $0x110] sm:$0xff]
      %v182 = vld [vmem:[%s139 + $0x118] sm:$0xff]
      %v183 = vld [vmem:[%s139 + $0x120] sm:$0xff]
      %v184 = vld [vmem:[%s139 + $0x128] sm:$0xff]
      %v185 = vld [vmem:[%s139 + $0x130] sm:$0xff]
      %v186 = vld [vmem:[%s139 + $0x138] sm:$0xff]
      %v187 = vld [vmem:[%s139 + $0x140] sm:$0xff]
      %v188 = vld [vmem:[%s139 + $0x148] sm:$0xff]
      %v189 = vld [vmem:[%s1] sm:$0x1]
      %191 = vset.pattern.permute.xlu0 0
      %192 = vperm.xlu0 %191, %v147
      %v193 = vpop.permute.xlu0 %192
      %196 = vset.pattern.permute.xlu0 0
      %197 = vperm.xlu0 %196, %v148
      %v198 = vpop.permute.xlu0 %197
      %201 = vset.pattern.permute.xlu0 0
      %202 = vperm.xlu0 %201, %v149
      %v203 = vpop.permute.xlu0 %202
      %206 = vset.pattern.permute.xlu0 0
      %207 = vperm.xlu0 %206, %v150
      %v208 = vpop.permute.xlu0 %207
      %211 = vset.pattern.permute.xlu0 0
      %212 = vperm.xlu0 %211, %v151
      %v213 = vpop.permute.xlu0 %212
      %216 = vset.pattern.permute.xlu0 0
      %217 = vperm.xlu0 %216, %v152
      %v218 = vpop.permute.xlu0 %217
      %221 = vset.pattern.permute.xlu0 0
      %222 = vperm.xlu0 %221, %v153
      %v223 = vpop.permute.xlu0 %222
      %226 = vset.pattern.permute.xlu0 0
      %227 = vperm.xlu0 %226, %v154
      %v228 = vpop.permute.xlu0 %227
      %231 = vset.pattern.permute.xlu0 0
      %232 = vperm.xlu0 %231, %v155
      %v233 = vpop.permute.xlu0 %232
      %236 = vset.pattern.permute.xlu0 0
      %237 = vperm.xlu0 %236, %v156
      %v238 = vpop.permute.xlu0 %237
      %241 = vset.pattern.permute.xlu0 0
      %242 = vperm.xlu0 %241, %v157
      %v243 = vpop.permute.xlu0 %242
      %246 = vset.pattern.permute.xlu0 0
      %247 = vperm.xlu0 %246, %v158
      %v248 = vpop.permute.xlu0 %247
      %251 = vset.pattern.permute.xlu0 0
      %252 = vperm.xlu0 %251, %v159
      %v253 = vpop.permute.xlu0 %252
      %256 = vset.pattern.permute.xlu0 0
      %257 = vperm.xlu0 %256, %v160
      %v258 = vpop.permute.xlu0 %257
      %261 = vset.pattern.permute.xlu0 0
      %262 = vperm.xlu0 %261, %v161
      %v263 = vpop.permute.xlu0 %262
      %266 = vset.pattern.permute.xlu0 0
      %267 = vperm.xlu0 %266, %v162
      %v268 = vpop.permute.xlu0 %267
      %271 = vset.pattern.permute.xlu0 0
      %272 = vperm.xlu0 %271, %v163
      %v273 = vpop.permute.xlu0 %272
      %276 = vset.pattern.permute.xlu0 0
      %277 = vperm.xlu0 %276, %v164
      %v278 = vpop.permute.xlu0 %277
      %281 = vset.pattern.permute.xlu0 0
      %282 = vperm.xlu0 %281, %v165
      %v283 = vpop.permute.xlu0 %282
      %286 = vset.pattern.permute.xlu0 0
      %287 = vperm.xlu0 %286, %v166
      %v288 = vpop.permute.xlu0 %287
      %291 = vset.pattern.permute.xlu0 0
      %292 = vperm.xlu0 %291, %v167
      %v293 = vpop.permute.xlu0 %292
      %296 = vset.pattern.permute.xlu0 0
      %297 = vperm.xlu0 %296, %v168
      %v298 = vpop.permute.xlu0 %297
      %301 = vset.pattern.permute.xlu0 0
      %302 = vperm.xlu0 %301, %v169
      %v303 = vpop.permute.xlu0 %302
      %306 = vset.pattern.permute.xlu0 0
      %307 = vperm.xlu0 %306, %v170
      %v308 = vpop.permute.xlu0 %307
      %311 = vset.pattern.permute.xlu0 0
      %312 = vperm.xlu0 %311, %v171
      %v313 = vpop.permute.xlu0 %312
      %316 = vset.pattern.permute.xlu0 0
      %317 = vperm.xlu0 %316, %v172
      %v318 = vpop.permute.xlu0 %317
      %321 = vset.pattern.permute.xlu0 0
      %322 = vperm.xlu0 %321, %v173
      %v323 = vpop.permute.xlu0 %322
      %326 = vset.pattern.permute.xlu0 0
      %327 = vperm.xlu0 %326, %v174
      %v328 = vpop.permute.xlu0 %327
      %331 = vset.pattern.permute.xlu0 0
      %332 = vperm.xlu0 %331, %v175
      %v333 = vpop.permute.xlu0 %332
      %336 = vset.pattern.permute.xlu0 0
      %337 = vperm.xlu0 %336, %v176
      %v338 = vpop.permute.xlu0 %337
      %341 = vset.pattern.permute.xlu0 0
      %342 = vperm.xlu0 %341, %v177
      %v343 = vpop.permute.xlu0 %342
      %346 = vset.pattern.permute.xlu0 0
      %347 = vperm.xlu0 %346, %v178
      %v348 = vpop.permute.xlu0 %347
      %351 = vset.pattern.permute.xlu0 0
      %352 = vperm.xlu0 %351, %v179
      %v353 = vpop.permute.xlu0 %352
      %356 = vset.pattern.permute.xlu0 0
      %357 = vperm.xlu0 %356, %v180
      %v358 = vpop.permute.xlu0 %357
      %361 = vset.pattern.permute.xlu0 0
      %362 = vperm.xlu0 %361, %v181
      %v363 = vpop.permute.xlu0 %362
      %366 = vset.pattern.permute.xlu0 0
      %367 = vperm.xlu0 %366, %v182
      %v368 = vpop.permute.xlu0 %367
      %371 = vset.pattern.permute.xlu0 0
      %372 = vperm.xlu0 %371, %v183
      %v373 = vpop.permute.xlu0 %372
      %376 = vset.pattern.permute.xlu0 0
      %377 = vperm.xlu0 %376, %v184
      %v378 = vpop.permute.xlu0 %377
      %381 = vset.pattern.permute.xlu0 0
      %382 = vperm.xlu0 %381, %v185
      %v383 = vpop.permute.xlu0 %382
      %386 = vset.pattern.permute.xlu0 0
      %387 = vperm.xlu0 %386, %v186
      %v388 = vpop.permute.xlu0 %387
      %391 = vset.pattern.permute.xlu0 0
      %392 = vperm.xlu0 %391, %v187
      %v393 = vpop.permute.xlu0 %392
      %396 = vset.pattern.permute.xlu0 0
      %397 = vperm.xlu0 %396, %v188
      %v398 = vpop.permute.xlu0 %397
      %v401 = vlaneseq
      %v402 = vshrl.u32 %v401, 7
      %v403 = vsub.s32 0, %v402
      %v404 = vrot.slane %v189, %v403
      %v406 = vmul.f32 %v193, %v404
      %v407 = vmul.f32 %v198, %v404
      %v408 = vmul.f32 %v203, %v404
      %v409 = vmul.f32 %v208, %v404
      %v410 = vmul.f32 %v213, %v404
      %v411 = vmul.f32 %v218, %v404
      %v412 = vmul.f32 %v223, %v404
      %v413 = vmul.f32 %v228, %v404
      %v414 = vmul.f32 %v233, %v404
      %v415 = vmul.f32 %v238, %v404
      %v416 = vmul.f32 %v243, %v404
      %v417 = vmul.f32 %v248, %v404
      %v418 = vmul.f32 %v253, %v404
      %v419 = vmul.f32 %v258, %v404
      %v420 = vmul.f32 %v263, %v404
      %v421 = vmul.f32 %v268, %v404
      %v422 = vmul.f32 %v273, %v404
      %v423 = vmul.f32 %v278, %v404
      %v424 = vmul.f32 %v283, %v404
      %v425 = vmul.f32 %v288, %v404
      %v426 = vmul.f32 %v293, %v404
      %v427 = vmul.f32 %v298, %v404
      %v428 = vmul.f32 %v303, %v404
      %v429 = vmul.f32 %v308, %v404
      %v430 = vmul.f32 %v313, %v404
      %v431 = vmul.f32 %v318, %v404
      %v432 = vmul.f32 %v323, %v404
      %v433 = vmul.f32 %v328, %v404
      %v434 = vmul.f32 %v333, %v404
      %v435 = vmul.f32 %v338, %v404
      %v436 = vmul.f32 %v343, %v404
      %v437 = vmul.f32 %v348, %v404
      %v438 = vmul.f32 %v353, %v404
      %v439 = vmul.f32 %v358, %v404
      %v440 = vmul.f32 %v363, %v404
      %v441 = vmul.f32 %v368, %v404
      %v442 = vmul.f32 %v373, %v404
      %v443 = vmul.f32 %v378, %v404
      %v444 = vmul.f32 %v383, %v404
      %v445 = vmul.f32 %v388, %v404
      %v446 = vmul.f32 %v393, %v404
      %v447 = vmul.f32 %v398, %v404
      %vm448 = vcmp.ge.f32.partialorder %v406, 0.0
      %vm449 = vcmp.ge.f32.partialorder %v407, 0.0
      %vm450 = vcmp.ge.f32.partialorder %v408, 0.0
      %vm451 = vcmp.ge.f32.partialorder %v409, 0.0
      %vm452 = vcmp.ge.f32.partialorder %v410, 0.0
      %vm453 = vcmp.ge.f32.partialorder %v411, 0.0
      %vm454 = vcmp.ge.f32.partialorder %v412, 0.0
      %vm455 = vcmp.ge.f32.partialorder %v413, 0.0
      %vm456 = vcmp.ge.f32.partialorder %v414, 0.0
      %vm457 = vcmp.ge.f32.partialorder %v415, 0.0
      %vm458 = vcmp.ge.f32.partialorder %v416, 0.0
      %vm459 = vcmp.ge.f32.partialorder %v417, 0.0
      %vm460 = vcmp.ge.f32.partialorder %v418, 0.0
      %vm461 = vcmp.ge.f32.partialorder %v419, 0.0
      %vm462 = vcmp.ge.f32.partialorder %v420, 0.0
      %vm463 = vcmp.ge.f32.partialorder %v421, 0.0
      %vm464 = vcmp.ge.f32.partialorder %v422, 0.0
      %vm465 = vcmp.ge.f32.partialorder %v423, 0.0
      %vm466 = vcmp.ge.f32.partialorder %v424, 0.0
      %vm467 = vcmp.ge.f32.partialorder %v425, 0.0
      %vm468 = vcmp.ge.f32.partialorder %v426, 0.0
      %vm469 = vcmp.ge.f32.partialorder %v427, 0.0
      %vm470 = vcmp.ge.f32.partialorder %v428, 0.0
      %vm471 = vcmp.ge.f32.partialorder %v429, 0.0
      %vm472 = vcmp.ge.f32.partialorder %v430, 0.0
      %vm473 = vcmp.ge.f32.partialorder %v431, 0.0
      %vm474 = vcmp.ge.f32.partialorder %v432, 0.0
      %vm475 = vcmp.ge.f32.partialorder %v433, 0.0
      %vm476 = vcmp.ge.f32.partialorder %v434, 0.0
      %vm477 = vcmp.ge.f32.partialorder %v435, 0.0
      %vm478 = vcmp.ge.f32.partialorder %v436, 0.0
      %vm479 = vcmp.ge.f32.partialorder %v437, 0.0
      %vm480 = vcmp.ge.f32.partialorder %v438, 0.0
      %vm481 = vcmp.ge.f32.partialorder %v439, 0.0
      %vm482 = vcmp.ge.f32.partialorder %v440, 0.0
      %vm483 = vcmp.ge.f32.partialorder %v441, 0.0
      %vm484 = vcmp.ge.f32.partialorder %v442, 0.0
      %vm485 = vcmp.ge.f32.partialorder %v443, 0.0
      %vm486 = vcmp.ge.f32.partialorder %v444, 0.0
      %vm487 = vcmp.ge.f32.partialorder %v445, 0.0
      %vm488 = vcmp.ge.f32.partialorder %v446, 0.0
      %vm489 = vcmp.ge.f32.partialorder %v447, 0.0
      %v490 = vmul.f32 %v406, 0.2
      %v491 = vmul.f32 %v407, 0.2
      %v492 = vmul.f32 %v408, 0.2
      %v493 = vmul.f32 %v409, 0.2
      %v494 = vmul.f32 %v410, 0.2
      %v495 = vmul.f32 %v411, 0.2
      %v496 = vmul.f32 %v412, 0.2
      %v497 = vmul.f32 %v413, 0.2
      %v498 = vmul.f32 %v414, 0.2
      %v499 = vmul.f32 %v415, 0.2
      %v500 = vmul.f32 %v416, 0.2
      %v501 = vmul.f32 %v417, 0.2
      %v502 = vmul.f32 %v418, 0.2
      %v503 = vmul.f32 %v419, 0.2
      %v504 = vmul.f32 %v420, 0.2
      %v505 = vmul.f32 %v421, 0.2
      %v506 = vmul.f32 %v422, 0.2
      %v507 = vmul.f32 %v423, 0.2
      %v508 = vmul.f32 %v424, 0.2
      %v509 = vmul.f32 %v425, 0.2
      %v510 = vmul.f32 %v426, 0.2
      %v511 = vmul.f32 %v427, 0.2
      %v512 = vmul.f32 %v428, 0.2
      %v513 = vmul.f32 %v429, 0.2
      %v514 = vmul.f32 %v430, 0.2
      %v515 = vmul.f32 %v431, 0.2
      %v516 = vmul.f32 %v432, 0.2
      %v517 = vmul.f32 %v433, 0.2
      %v518 = vmul.f32 %v434, 0.2
      %v519 = vmul.f32 %v435, 0.2
      %v520 = vmul.f32 %v436, 0.2
      %v521 = vmul.f32 %v437, 0.2
      %v522 = vmul.f32 %v438, 0.2
      %v523 = vmul.f32 %v439, 0.2
      %v524 = vmul.f32 %v440, 0.2
      %v525 = vmul.f32 %v441, 0.2
      %v526 = vmul.f32 %v442, 0.2
      %v527 = vmul.f32 %v443, 0.2
      %v528 = vmul.f32 %v444, 0.2
      %v529 = vmul.f32 %v445, 0.2
      %v530 = vmul.f32 %v446, 0.2
      %v531 = vmul.f32 %v447, 0.2
      %v532 = vsel %vm448, %v406, %v490
      %v533 = vsel %vm449, %v407, %v491
      %v534 = vsel %vm450, %v408, %v492
      %v535 = vsel %vm451, %v409, %v493
      %v536 = vsel %vm452, %v410, %v494
      %v537 = vsel %vm453, %v411, %v495
      %v538 = vsel %vm454, %v412, %v496
      %v539 = vsel %vm455, %v413, %v497
      %v540 = vsel %vm456, %v414, %v498
      %v541 = vsel %vm457, %v415, %v499
      %v542 = vsel %vm458, %v416, %v500
      %v543 = vsel %vm459, %v417, %v501
      %v544 = vsel %vm460, %v418, %v502
      %v545 = vsel %vm461, %v419, %v503
      %v546 = vsel %vm462, %v420, %v504
      %v547 = vsel %vm463, %v421, %v505
      %v548 = vsel %vm464, %v422, %v506
      %v549 = vsel %vm465, %v423, %v507
      %v550 = vsel %vm466, %v424, %v508
      %v551 = vsel %vm467, %v425, %v509
      %v552 = vsel %vm468, %v426, %v510
      %v553 = vsel %vm469, %v427, %v511
      %v554 = vsel %vm470, %v428, %v512
      %v555 = vsel %vm471, %v429, %v513
      %v556 = vsel %vm472, %v430, %v514
      %v557 = vsel %vm473, %v431, %v515
      %v558 = vsel %vm474, %v432, %v516
      %v559 = vsel %vm475, %v433, %v517
      %v560 = vsel %vm476, %v434, %v518
      %v561 = vsel %vm477, %v435, %v519
      %v562 = vsel %vm478, %v436, %v520
      %v563 = vsel %vm479, %v437, %v521
      %v564 = vsel %vm480, %v438, %v522
      %v565 = vsel %vm481, %v439, %v523
      %v566 = vsel %vm482, %v440, %v524
      %v567 = vsel %vm483, %v441, %v525
      %v568 = vsel %vm484, %v442, %v526
      %v569 = vsel %vm485, %v443, %v527
      %v570 = vsel %vm486, %v444, %v528
      %v571 = vsel %vm487, %v445, %v529
      %v572 = vsel %vm488, %v446, %v530
      %v573 = vsel %vm489, %v447, %v531
      %v574 = vpack.c.bf16 %v533, %v532
      %v575 = vpack.c.bf16 %v535, %v534
      %v576 = vpack.c.bf16 %v537, %v536
      %v577 = vpack.c.bf16 %v539, %v538
      %v578 = vpack.c.bf16 %v541, %v540
      %v579 = vpack.c.bf16 %v543, %v542
      %v580 = vpack.c.bf16 %v545, %v544
      %v581 = vpack.c.bf16 %v547, %v546
      %v582 = vpack.c.bf16 %v549, %v548
      %v583 = vpack.c.bf16 %v551, %v550
      %v584 = vpack.c.bf16 %v553, %v552
      %v585 = vpack.c.bf16 %v555, %v554
      %v586 = vpack.c.bf16 %v557, %v556
      %v587 = vpack.c.bf16 %v559, %v558
      %v588 = vpack.c.bf16 %v561, %v560
      %v589 = vpack.c.bf16 %v563, %v562
      %v590 = vpack.c.bf16 %v565, %v564
      %v591 = vpack.c.bf16 %v567, %v566
      %v592 = vpack.c.bf16 %v569, %v568
      %v593 = vpack.c.bf16 %v571, %v570
      %v594 = vpack.c.bf16 %v573, %v572
      %v616 = vunpack.c.l.b16 %v574
      %v617 = vunpack.c.h.b16 %v574
      %v618 = vunpack.c.l.b16 %v575
      %v619 = vunpack.c.h.b16 %v575
      %v620 = vunpack.c.l.b16 %v576
      %v621 = vunpack.c.h.b16 %v576
      %v622 = vunpack.c.l.b16 %v577
      %v623 = vunpack.c.h.b16 %v577
      %v624 = vunpack.c.l.b16 %v578
      %v625 = vunpack.c.h.b16 %v578
      %v626 = vunpack.c.l.b16 %v579
      %v627 = vunpack.c.h.b16 %v579
      %v628 = vunpack.c.l.b16 %v580
      %v629 = vunpack.c.h.b16 %v580
      %v630 = vunpack.c.l.b16 %v581
      %v631 = vunpack.c.h.b16 %v581
      %v632 = vunpack.c.l.b16 %v582
      %v633 = vunpack.c.h.b16 %v582
      %v634 = vunpack.c.l.b16 %v583
      %v635 = vunpack.c.h.b16 %v583
      %v636 = vunpack.c.l.b16 %v584
      %v637 = vunpack.c.h.b16 %v584
      %v638 = vunpack.c.l.b16 %v585
      %v639 = vunpack.c.h.b16 %v585
      %v640 = vunpack.c.l.b16 %v586
      %v641 = vunpack.c.h.b16 %v586
      %v642 = vunpack.c.l.b16 %v587
      %v643 = vunpack.c.h.b16 %v587
      %v644 = vunpack.c.l.b16 %v588
      %v645 = vunpack.c.h.b16 %v588
      %v646 = vunpack.c.l.b16 %v589
      %v647 = vunpack.c.h.b16 %v589
      %v648 = vunpack.c.l.b16 %v590
      %v649 = vunpack.c.h.b16 %v590
      %v650 = vunpack.c.l.b16 %v591
      %v651 = vunpack.c.h.b16 %v591
      %v652 = vunpack.c.l.b16 %v592
      %v653 = vunpack.c.h.b16 %v592
      %v654 = vunpack.c.l.b16 %v593
      %v655 = vunpack.c.h.b16 %v593
      %v656 = vunpack.c.l.b16 %v594
      %v657 = vunpack.c.h.b16 %v594
      %v658 = vpack.c.b16 %v616, %v616
      %v659 = vpack.c.b16 %v617, %v617
      %v660 = vpack.c.b16 %v618, %v618
      %v661 = vpack.c.b16 %v619, %v619
      %v662 = vpack.c.b16 %v620, %v620
      %v663 = vpack.c.b16 %v621, %v621
      %v664 = vpack.c.b16 %v622, %v622
      %v665 = vpack.c.b16 %v623, %v623
      %v666 = vpack.c.b16 %v624, %v624
      %v667 = vpack.c.b16 %v625, %v625
      %v668 = vpack.c.b16 %v626, %v626
      %v669 = vpack.c.b16 %v627, %v627
      %v670 = vpack.c.b16 %v628, %v628
      %v671 = vpack.c.b16 %v629, %v629
      %v672 = vpack.c.b16 %v630, %v630
      %v673 = vpack.c.b16 %v631, %v631
      %v674 = vpack.c.b16 %v632, %v632
      %v675 = vpack.c.b16 %v633, %v633
      %v676 = vpack.c.b16 %v634, %v634
      %v677 = vpack.c.b16 %v635, %v635
      %v678 = vpack.c.b16 %v636, %v636
      %v679 = vpack.c.b16 %v637, %v637
      %v680 = vpack.c.b16 %v638, %v638
      %v681 = vpack.c.b16 %v639, %v639
      %v682 = vpack.c.b16 %v640, %v640
      %v683 = vpack.c.b16 %v641, %v641
      %v684 = vpack.c.b16 %v642, %v642
      %v685 = vpack.c.b16 %v643, %v643
      %v686 = vpack.c.b16 %v644, %v644
      %v687 = vpack.c.b16 %v645, %v645
      %v688 = vpack.c.b16 %v646, %v646
      %v689 = vpack.c.b16 %v647, %v647
      %v690 = vpack.c.b16 %v648, %v648
      %v691 = vpack.c.b16 %v649, %v649
      %v692 = vpack.c.b16 %v650, %v650
      %v693 = vpack.c.b16 %v651, %v651
      %v694 = vpack.c.b16 %v652, %v652
      %v695 = vpack.c.b16 %v653, %v653
      %v696 = vpack.c.b16 %v654, %v654
      %v697 = vpack.c.b16 %v655, %v655
      %v698 = vpack.c.b16 %v656, %v656
      %v699 = vpack.c.b16 %v657, %v657
      %vm742 = vcmask 27648
      %743 = vst.msk [vmem:[%s145] sm:$0xf] %vm742, %v658
      %744 = vst.msk [vmem:[%s145 + $0x4] sm:$0xf] %vm742, %v659
      %745 = vst.msk [vmem:[%s145 + $0x8] sm:$0xf] %vm742, %v660
      %746 = vst.msk [vmem:[%s145 + $0xc] sm:$0xf] %vm742, %v661
      %747 = vst.msk [vmem:[%s145 + $0x10] sm:$0xf] %vm742, %v662
      %748 = vst.msk [vmem:[%s145 + $0x14] sm:$0xf] %vm742, %v663
      %749 = vst.msk [vmem:[%s145 + $0x18] sm:$0xf] %vm742, %v664
      %750 = vst.msk [vmem:[%s145 + $0x1c] sm:$0xf] %vm742, %v665
      %751 = vst.msk [vmem:[%s145 + $0x20] sm:$0xf] %vm742, %v666
      %752 = vst.msk [vmem:[%s145 + $0x24] sm:$0xf] %vm742, %v667
      %753 = vst.msk [vmem:[%s145 + $0x28] sm:$0xf] %vm742, %v668
      %754 = vst.msk [vmem:[%s145 + $0x2c] sm:$0xf] %vm742, %v669
      %755 = vst.msk [vmem:[%s145 + $0x30] sm:$0xf] %vm742, %v670
      %756 = vst.msk [vmem:[%s145 + $0x34] sm:$0xf] %vm742, %v671
      %757 = vst.msk [vmem:[%s145 + $0x38] sm:$0xf] %vm742, %v672
      %758 = vst.msk [vmem:[%s145 + $0x3c] sm:$0xf] %vm742, %v673
      %759 = vst.msk [vmem:[%s145 + $0x40] sm:$0xf] %vm742, %v674
      %760 = vst.msk [vmem:[%s145 + $0x44] sm:$0xf] %vm742, %v675
      %761 = vst.msk [vmem:[%s145 + $0x48] sm:$0xf] %vm742, %v676
      %762 = vst.msk [vmem:[%s145 + $0x4c] sm:$0xf] %vm742, %v677
      %763 = vst.msk [vmem:[%s145 + $0x50] sm:$0xf] %vm742, %v678
      %764 = vst.msk [vmem:[%s145 + $0x54] sm:$0xf] %vm742, %v679
      %765 = vst.msk [vmem:[%s145 + $0x58] sm:$0xf] %vm742, %v680
      %766 = vst.msk [vmem:[%s145 + $0x5c] sm:$0xf] %vm742, %v681
      %767 = vst.msk [vmem:[%s145 + $0x60] sm:$0xf] %vm742, %v682
      %768 = vst.msk [vmem:[%s145 + $0x64] sm:$0xf] %vm742, %v683
      %769 = vst.msk [vmem:[%s145 + $0x68] sm:$0xf] %vm742, %v684
      %770 = vst.msk [vmem:[%s145 + $0x6c] sm:$0xf] %vm742, %v685
      %771 = vst.msk [vmem:[%s145 + $0x70] sm:$0xf] %vm742, %v686
      %772 = vst.msk [vmem:[%s145 + $0x74] sm:$0xf] %vm742, %v687
      %773 = vst.msk [vmem:[%s145 + $0x78] sm:$0xf] %vm742, %v688
      %774 = vst.msk [vmem:[%s145 + $0x7c] sm:$0xf] %vm742, %v689
      %775 = vst.msk [vmem:[%s145 + $0x80] sm:$0xf] %vm742, %v690
      %776 = vst.msk [vmem:[%s145 + $0x84] sm:$0xf] %vm742, %v691
      %777 = vst.msk [vmem:[%s145 + $0x88] sm:$0xf] %vm742, %v692
      %778 = vst.msk [vmem:[%s145 + $0x8c] sm:$0xf] %vm742, %v693
      %779 = vst.msk [vmem:[%s145 + $0x90] sm:$0xf] %vm742, %v694
      %780 = vst.msk [vmem:[%s145 + $0x94] sm:$0xf] %vm742, %v695
      %781 = vst.msk [vmem:[%s145 + $0x98] sm:$0xf] %vm742, %v696
      %782 = vst.msk [vmem:[%s145 + $0x9c] sm:$0xf] %vm742, %v697
      %783 = vst.msk [vmem:[%s145 + $0xa0] sm:$0xf] %vm742, %v698
      %784 = vst.msk [vmem:[%s145 + $0xa4] sm:$0xf] %vm742, %v699
      %s785 = smul.u32 42, %s13
      %p786 = scmp.lt.s32.totalorder %s785, 83
      %s787 = scalar_select %p786, %s785, 83
      %s788 = smul.addr %s787, 4
      %s789 = scalar_lea.vmem %s2, %s788
      // Predicated region
      $region29: #{front_end_forward.4} parent=27 // pred_check
        %p790 = pneg %p78
      $region30: #{front_end_forward.4} parent=27 // pred_check_branch
        %792 = sbr.rel (%p790) target = $region32
      $region31: #{front_end_forward.4} parent=27 // pred_region
        %s793 = smul.u32 42, %s13
      $region32: #{front_end_forward.4} parent=27 // pred_fallthru
        _
    $region28: #{front_end_forward.4} parent=5 // pred_fallthru
      _
    %p794 = scmp.le.s32.totalorder 2, %s8
    // Predicated region
    $region33: #{front_end_forward.4} parent=5 // pred_check
      %p795 = pneg %p794
    $region34: #{front_end_forward.4} parent=5 // pred_check_branch
      %797 = sbr.rel (%p795) target = $region36
    $region35: #{front_end_forward.4} parent=5 // pred_region
      %s798 = ssub.s32 %s8, 2
      // Predicated region
      $region37: #{front_end_forward.4} parent=35 // pred_check
        %p799 = pneg %p84
      $region38: #{front_end_forward.4} parent=35 // pred_check_branch
        %801 = sbr.rel (%p799) target = $region40
      $region39: #{front_end_forward.4} parent=35 // pred_region
        %s802 = smul.u32 42, %s14
        %p803 = scmp.lt.s32.totalorder %s802, 83
        %s804 = scalar_select %p803, %s802, 83
        %s805 = smul.addr %s804, 4
        %s806 = scalar_lea.vmem %s2, %s805
      $region40: #{front_end_forward.4} parent=35 // pred_fallthru
        _
    $region36: #{front_end_forward.4} parent=5 // pred_fallthru
      _
  $region6: #{front_end_forward.4} parent=0 // loop_footer
    %s12 = sadd.s32 1, %s8
  $region7: #{front_end_forward.4} parent=0 // loop_footer_branch
    %7 = sbr.rel target = $region3
  $region8: #{front_end_forward.4} parent=0 // loop_exit
    _

// kernel: front_end_forward.5
$region0: #{front_end_forward.5}
  #allocation0 [shape = 'u32[]', space=smem, size = 0x4, offset = 0x4, fixed_abs, tag = 'smem constant byte address 0x4 - core index']
  #allocation1 [shape = 'u32[144,128]{1,0:T(1,128)}', space=vmem, size = 0x12000, scoped, tag = 'internal scratch']
  #allocation2 [shape = 'f32[208,128]{1,0:T(8,128)}', space=vmem, size = 0x1a000, scoped, tag = 'scratch operand']
  #allocation3 [shape = 'f32[1,128]{1,0:T(1,128)}', space=vmem, size = 0x200, scoped, tag = 'scratch operand']
  #allocation4 [shape = 'f32[1,128]{1,0:T(1,128)}', space=vmem, size = 0x200, scoped, tag = 'scratch operand']
  %s0 = inlined_call_operand.vmem [shape: bf16[208,128], index: 0, kind: input, shape index: {}]
  %s1 = inlined_call_operand.vmem [shape: bf16[128,128], index: 1, kind: input, shape index: {}]
  %s2 = inlined_call_operand.vmem [shape: f32[1,128], index: 2, kind: input, shape index: {}]
  %s3 = inlined_call_operand.vmem [shape: f32[1,128], index: 3, kind: input, shape index: {}]
  %s4 = inlined_call_operand.vmem [shape: bf16[208,128], index: 4, kind: output, shape index: {}]
  %s5 = sld [smem:[#allocation0]]
  $region65: #{front_end_forward.5} parent=0
    _
  %s7 = ssub.s32 1, %s5
  %s8 = scalar_select 0, %s7, %s5
  loop: start=0, step=1, limit=4
  $region2: #{front_end_forward.5} parent=0 // loop_pre_header
    _
  $region3: #{front_end_forward.5} parent=0 // loop_header
    %s10 = sphi 0, %s14
    %p11 = scmp.ge.s32.totalorder %s10, 4
    %s17 = sphi 0, %s29
    %s18 = sphi 0, %s25
    %s19 = sphi 0, %s17
    %s20 = sphi 0, %s18
    %s21 = sphi 0, %s19
    %s22 = sphi 0, %s20
    %s36 = sphi 0, %s38
    %s39 = sphi 0, %s36
    %s40 = sphi 0, %s39
    %s56 = sphi 0, %s40
    %s60 = sphi 0, %s60
    %s62 = sphi 0, %s60
    %s63 = sphi 0, %s62
    %s77 = sphi 0, %s63
    %s81 = sphi 0, %s81
    %s83 = sphi 0, %s81
    %s84 = sphi 0, %s83
    %s98 = sphi 0, %s84
    %s102 = sphi 0, %s102
    %s104 = sphi 0, %s102
    %s105 = sphi 0, %s104
    %s119 = sphi 0, %s105
    %s127 = sphi 0, %s129
    %s130 = sphi 0, %s127
    %s131 = sphi 0, %s130
    %s147 = sphi 0, %s131
  $region4: #{front_end_forward.5} parent=0 // loop_header_branch
    %13 = sbr.rel (%p11) target = $region8
  $region5: #{front_end_forward.5} parent=0 // loop_body
    %s15 = ssub.s32 %s10, 1
    %s16 = ssub.s32 %s10, 2
    %s23 = sadd.s32 1, %s18
    %p24 = scmp.ge.s32.totalorder %s23, 1
    %s25 = scalar_select %p24, 0, %s23
    %s26 = sadd.s32 1, %s17
    %s27 = scalar_select %p24, %s26, %s17
    %p28 = scmp.ge.s32.totalorder %s27, 2
    %s29 = scalar_select %p28, 0, %s27
    %s30 = ssub.s32 1, %s17
    %s31 = smul.u32 %s30, %s18
    %s32 = ssub.s32 1, %s29
    %s33 = smul.u32 %s32, %s25
    %s34 = ssub.s32 %s31, %s33
    %p35 = scmp.eq.s32.totalorder %s34, 0
    %s37 = sadd.s32 %s36, 1
    %s38 = scalar_select %p35, %s36, %s37
    %p41 = pneg %p35
    %p42 = scmp.eq.s32.totalorder %s10, 1
    %p43 = por %p41, %p42
    %p44 = scmp.ne.s32.totalorder %s36, %s39
    %p45 = scmp.eq.s32.totalorder %s10, 0
    %p46 = por %p44, %p45
    %p47 = scmp.ne.s32.totalorder %s36, %s39
    %p48 = scmp.eq.s32.totalorder %s15, 1
    %p49 = por %p47, %p48
    %p50 = scmp.ne.s32.totalorder %s39, %s40
    %p51 = scmp.eq.s32.totalorder %s15, 0
    %p52 = por %p50, %p51
    %p53 = scmp.ne.s32.totalorder %s39, %s40
    %p54 = scmp.eq.s32.totalorder %s16, 1
    %p55 = por %p53, %p54
    %p57 = scmp.ne.s32.totalorder %s40, %s56
    %p58 = scmp.eq.s32.totalorder %s16, 0
    %p59 = por %p57, %p58
    %s61 = sadd.s32 %s60, 1
    %p64 = scmp.eq.s32.totalorder %s10, 1
    %p65 = scmp.ne.s32.totalorder %s60, %s62
    %p66 = scmp.eq.s32.totalorder %s10, 0
    %p67 = por %p65, %p66
    %p68 = scmp.ne.s32.totalorder %s60, %s62
    %p69 = scmp.eq.s32.totalorder %s15, 1
    %p70 = por %p68, %p69
    %p71 = scmp.ne.s32.totalorder %s62, %s63
    %p72 = scmp.eq.s32.totalorder %s15, 0
    %p73 = por %p71, %p72
    %p74 = scmp.ne.s32.totalorder %s62, %s63
    %p75 = scmp.eq.s32.totalorder %s16, 1
    %p76 = por %p74, %p75
    %p78 = scmp.ne.s32.totalorder %s63, %s77
    %p79 = scmp.eq.s32.totalorder %s16, 0
    %p80 = por %p78, %p79
    %s82 = sadd.s32 %s81, 1
    %p85 = scmp.eq.s32.totalorder %s10, 1
    %p86 = scmp.ne.s32.totalorder %s81, %s83
    %p87 = scmp.eq.s32.totalorder %s10, 0
    %p88 = por %p86, %p87
    %p89 = scmp.ne.s32.totalorder %s81, %s83
    %p90 = scmp.eq.s32.totalorder %s15, 1
    %p91 = por %p89, %p90
    %p92 = scmp.ne.s32.totalorder %s83, %s84
    %p93 = scmp.eq.s32.totalorder %s15, 0
    %p94 = por %p92, %p93
    %p95 = scmp.ne.s32.totalorder %s83, %s84
    %p96 = scmp.eq.s32.totalorder %s16, 1
    %p97 = por %p95, %p96
    %p99 = scmp.ne.s32.totalorder %s84, %s98
    %p100 = scmp.eq.s32.totalorder %s16, 0
    %p101 = por %p99, %p100
    %s103 = sadd.s32 %s102, 1
    %p106 = scmp.eq.s32.totalorder %s10, 1
    %p107 = scmp.ne.s32.totalorder %s102, %s104
    %p108 = scmp.eq.s32.totalorder %s10, 0
    %p109 = por %p107, %p108
    %p110 = scmp.ne.s32.totalorder %s102, %s104
    %p111 = scmp.eq.s32.totalorder %s15, 1
    %p112 = por %p110, %p111
    %p113 = scmp.ne.s32.totalorder %s104, %s105
    %p114 = scmp.eq.s32.totalorder %s15, 0
    %p115 = por %p113, %p114
    %p116 = scmp.ne.s32.totalorder %s104, %s105
    %p117 = scmp.eq.s32.totalorder %s16, 1
    %p118 = por %p116, %p117
    %p120 = scmp.ne.s32.totalorder %s105, %s119
    %p121 = scmp.eq.s32.totalorder %s16, 0
    %p122 = por %p120, %p121
    %s123 = smul.u32 %s17, %s18
    %s124 = smul.u32 %s29, %s25
    %s125 = ssub.s32 %s123, %s124
    %p126 = scmp.eq.s32.totalorder %s125, 0
    %s128 = sadd.s32 %s127, 1
    %s129 = scalar_select %p126, %s127, %s128
    %p132 = pneg %p126
    %p133 = scmp.eq.s32.totalorder %s10, 1
    %p134 = por %p132, %p133
    %p135 = scmp.ne.s32.totalorder %s127, %s130
    %p136 = scmp.eq.s32.totalorder %s10, 0
    %p137 = por %p135, %p136
    %p138 = scmp.ne.s32.totalorder %s127, %s130
    %p139 = scmp.eq.s32.totalorder %s15, 1
    %p140 = por %p138, %p139
    %p141 = scmp.ne.s32.totalorder %s130, %s131
    %p142 = scmp.eq.s32.totalorder %s15, 0
    %p143 = por %p141, %p142
    %p144 = scmp.ne.s32.totalorder %s130, %s131
    %p145 = scmp.eq.s32.totalorder %s16, 1
    %p146 = por %p144, %p145
    %p148 = scmp.ne.s32.totalorder %s131, %s147
    %p149 = scmp.eq.s32.totalorder %s16, 0
    %p150 = por %p148, %p149
    %p151 = scmp.le.s32.totalorder 1, %s10
    %p152 = scmp.lt.s32.totalorder %s10, 3
    %p153 = pnand %p151, %p152
    %p154 = pneg %p153
    // Predicated region
    $region9: #{front_end_forward.5} parent=5 // pred_check
      _
    $region10: #{front_end_forward.5} parent=5 // pred_check_branch
      %156 = sbr.rel (%p153) target = $region12
    $region11: #{front_end_forward.5} parent=5 // pred_region
      %s157 = ssub.s32 %s10, 1
      // Predicated region
      $region13: #{front_end_forward.5} parent=11 // pred_check
        %p158 = pneg %p73
      $region14: #{front_end_forward.5} parent=11 // pred_check_branch
        %160 = sbr.rel (%p158) target = $region16
      $region15: #{front_end_forward.5} parent=11 // pred_region
        _
      $region16: #{front_end_forward.5} parent=11 // pred_fallthru
        _
      // Predicated region
      $region17: #{front_end_forward.5} parent=11 // pred_check
        %p161 = pneg %p94
      $region18: #{front_end_forward.5} parent=11 // pred_check_branch
        %163 = sbr.rel (%p161) target = $region20
      $region19: #{front_end_forward.5} parent=11 // pred_region
        _
      $region20: #{front_end_forward.5} parent=11 // pred_fallthru
        _
      // Predicated region
      $region21: #{front_end_forward.5} parent=11 // pred_check
        %p164 = pneg %p115
      $region22: #{front_end_forward.5} parent=11 // pred_check_branch
        %166 = sbr.rel (%p164) target = $region24
      $region23: #{front_end_forward.5} parent=11 // pred_region
        _
      $region24: #{front_end_forward.5} parent=11 // pred_fallthru
        _
    $region12: #{front_end_forward.5} parent=5 // pred_fallthru
      _
    %p167 = scmp.lt.s32.totalorder %s10, 2
    // Predicated region
    $region25: #{front_end_forward.5} parent=5 // pred_check
      %p168 = pneg %p167
    $region26: #{front_end_forward.5} parent=5 // pred_check_branch
      %170 = sbr.rel (%p168) target = $region28
    $region27: #{front_end_forward.5} parent=5 // pred_region
      // Predicated region
      $region29: #{front_end_forward.5} parent=27 // pred_check
        %p171 = pneg %p46
      $region30: #{front_end_forward.5} parent=27 // pred_check_branch
        %173 = sbr.rel (%p171) target = $region32
      $region31: #{front_end_forward.5} parent=27 // pred_region
        %s174 = ssub.s32 1, %s17
        %s175 = smul.u32 %s174, %s18
        %s176 = smul.u32 26, %s175
        %p177 = scmp.lt.s32.totalorder %s176, 25
        %s178 = scalar_select %p177, %s176, 25
        %s179 = smul.addr %s178, 4
        %s180 = scalar_lea.vmem %s0, %s179
        %s181 = ssub.s32 1, %s17
        %s182 = smul.u32 %s181, %s18
        %s183 = smul.u32 26, %s182
      $region32: #{front_end_forward.5} parent=27 // pred_fallthru
        _
    $region28: #{front_end_forward.5} parent=5 // pred_fallthru
      _
    %p184 = scmp.le.s32.totalorder 1, %s10
    %p185 = scmp.lt.s32.totalorder %s10, 3
    %p186 = pnand %p184, %p185
    %p187 = pneg %p186
    // Predicated region
    $region33: #{front_end_forward.5} parent=5 // pred_check
      _
    $region34: #{front_end_forward.5} parent=5 // pred_check_branch
      %189 = sbr.rel (%p186) target = $region36
    $region35: #{front_end_forward.5} parent=5 // pred_region
      %s190 = ssub.s32 %s10, 1
      %s191 = ssub.s32 1, %s19
      %s192 = smul.u32 %s191, %s20
      %s193 = smul.u32 26, %s192
      %p194 = scmp.lt.s32.totalorder %s193, 25
      %s195 = scalar_select %p194, %s193, 25
      %s196 = smul.addr %s195, 4
      %s197 = scalar_lea.vmem %s0, %s196
      %p198 = pneg %p52
      %p199 = pneg %p49
      %p200 = pneg %p73
      %p201 = pneg %p70
      %p202 = pneg %p94
      %p203 = pneg %p91
      %p204 = pneg %p115
      %p205 = pneg %p112
      %p206 = pneg %p143
      %p207 = pneg %p140
      %s208 = smul.u32 %s19, %s20
      %s209 = smul.u32 26, %s208
      %p210 = scmp.lt.s32.totalorder %s209, 25
      %s211 = scalar_select %p210, %s209, 25
      %s212 = smul.addr %s211, 4
      %s213 = scalar_lea.vmem %s4, %s212
      %s214 = ssub.s32 1, %s19
      %s215 = smul.u32 %s214, %s20
      %s216 = smul.u32 26, %s215
      %p217 = scmp.lt.s32.totalorder %s216, 25
      %s218 = scalar_select %p217, %s216, 25
      %s219 = smul.addr %s218, 4
      %s220 = scalar_lea.vmem %s0, %s219
      %s221 = ssub.s32 1, %s19
      %s222 = smul.u32 %s221, %s20
      %s223 = smul.u32 26, %s222
      %s224 = smul.u32 %s19, %s20
      %s225 = smul.u32 26, %s224
      %p226 = scmp.lt.s32.totalorder %s225, 25
      %s227 = scalar_select %p226, %s225, 25
      %s228 = smul.addr %s227, 4
      %s229 = scalar_lea.vmem %s4, %s228
      %s230 = smul.u32 %s19, %s20
      %s231 = smul.u32 26, %s230
      %s233 = smul.u32 %s20, 208
      %p234 = scmp.eq.s32.totalorder %s19, 0
      // Predicated region
      $region37: #{front_end_forward.5} parent=35 // pred_check
        %p235 = pneg %p234
      $region38: #{front_end_forward.5} parent=35 // pred_check_branch
        %237 = sbr.rel (%p235) target = $region40
      $region39: #{front_end_forward.5} parent=35 // pred_region
        %p238 = scmp.eq.s32.totalorder %s20, 0
        // Predicated region
        $region41: #{front_end_forward.5} parent=39 // pred_check
          %p239 = pneg %p238
        $region42: #{front_end_forward.5} parent=39 // pred_check_branch
          %241 = sbr.rel (%p239) target = $region44
        $region43: #{front_end_forward.5} parent=39 // pred_region
          %242 = vst [vmem:[#allocation3] sm:$0x1] 0.0
          %243 = vst [vmem:[#allocation4] sm:$0x1] 0.0
        $region44: #{front_end_forward.5} parent=39 // pred_fallthru
          _
        %v244 = vld [vmem:[%s220] sm:$0xf]
        %v245 = vld [vmem:[%s220 + $0x4] sm:$0xf]
        %v246 = vld [vmem:[%s220 + $0x8] sm:$0xf]
        %v247 = vld [vmem:[%s220 + $0xc] sm:$0xf]
        %v248 = vld [vmem:[%s220 + $0x10] sm:$0xf]
        %v249 = vld [vmem:[%s220 + $0x14] sm:$0xf]
        %v250 = vld [vmem:[%s220 + $0x18] sm:$0xf]
        %v251 = vld [vmem:[%s220 + $0x1c] sm:$0xf]
        %v252 = vld [vmem:[%s220 + $0x20] sm:$0xf]
        %v253 = vld [vmem:[%s220 + $0x24] sm:$0xf]
        %v254 = vld [vmem:[%s220 + $0x28] sm:$0xf]
        %v255 = vld [vmem:[%s220 + $0x2c] sm:$0xf]
        %v256 = vld [vmem:[%s220 + $0x30] sm:$0xf]
        %v257 = vld [vmem:[%s220 + $0x34] sm:$0xf]
        %v258 = vld [vmem:[%s220 + $0x38] sm:$0xf]
        %v259 = vld [vmem:[%s220 + $0x3c] sm:$0xf]
        %v260 = vld [vmem:[%s220 + $0x40] sm:$0xf]
        %v261 = vld [vmem:[%s220 + $0x44] sm:$0xf]
        %v262 = vld [vmem:[%s220 + $0x48] sm:$0xf]
        %v263 = vld [vmem:[%s220 + $0x4c] sm:$0xf]
        %v264 = vld [vmem:[%s220 + $0x50] sm:$0xf]
        %v265 = vld [vmem:[%s220 + $0x54] sm:$0xf]
        %v266 = vld [vmem:[%s220 + $0x58] sm:$0xf]
        %v267 = vld [vmem:[%s220 + $0x5c] sm:$0xf]
        %v268 = vld [vmem:[%s220 + $0x60] sm:$0xf]
        %v269 = vld [vmem:[%s220 + $0x64] sm:$0xf]
        %v270 = vld [vmem:[%s1] sm:$0xf]
        %v271 = vld [vmem:[%s1 + $0x4] sm:$0xf]
        %v272 = vld [vmem:[%s1 + $0x8] sm:$0xf]
        %v273 = vld [vmem:[%s1 + $0xc] sm:$0xf]
        %v274 = vld [vmem:[%s1 + $0x10] sm:$0xf]
        %v275 = vld [vmem:[%s1 + $0x14] sm:$0xf]
        %v276 = vld [vmem:[%s1 + $0x18] sm:$0xf]
        %v277 = vld [vmem:[%s1 + $0x1c] sm:$0xf]
        %v278 = vld [vmem:[%s1 + $0x20] sm:$0xf]
        %v279 = vld [vmem:[%s1 + $0x24] sm:$0xf]
        %v280 = vld [vmem:[%s1 + $0x28] sm:$0xf]
        %v281 = vld [vmem:[%s1 + $0x2c] sm:$0xf]
        %v282 = vld [vmem:[%s1 + $0x30] sm:$0xf]
        %v283 = vld [vmem:[%s1 + $0x34] sm:$0xf]
        %v284 = vld [vmem:[%s1 + $0x38] sm:$0xf]
        %v285 = vld [vmem:[%s1 + $0x3c] sm:$0xf]
        %v312 = vunpack.c.l.b16 %v244
        %v313 = vunpack.c.l.b16 %v245
        %v314 = vunpack.c.l.b16 %v246
        %v315 = vunpack.c.l.b16 %v247
        %v316 = vunpack.c.l.b16 %v248
        %v317 = vunpack.c.l.b16 %v249
        %v318 = vunpack.c.l.b16 %v250
        %v319 = vunpack.c.l.b16 %v251
        %v320 = vunpack.c.l.b16 %v252
        %v321 = vunpack.c.l.b16 %v253
        %v322 = vunpack.c.l.b16 %v254
        %v323 = vunpack.c.l.b16 %v255
        %v324 = vunpack.c.l.b16 %v256
        %v325 = vunpack.c.l.b16 %v257
        %v326 = vunpack.c.l.b16 %v258
        %v327 = vunpack.c.l.b16 %v259
        %v328 = vunpack.c.l.b16 %v260
        %v329 = vunpack.c.l.b16 %v261
        %v330 = vunpack.c.l.b16 %v262
        %v331 = vunpack.c.l.b16 %v263
        %v332 = vunpack.c.l.b16 %v264
        %v333 = vunpack.c.l.b16 %v265
        %v334 = vunpack.c.l.b16 %v266
        %v335 = vunpack.c.l.b16 %v267
        %v336 = vunpack.c.l.b16 %v268
        %v337 = vunpack.c.l.b16 %v269
        %v338 = vpack.c.b16 %v313, %v312
        %v339 = vpack.c.b16 %v315, %v314
        %v340 = vpack.c.b16 %v317, %v316
        %v341 = vpack.c.b16 %v319, %v318
        %v342 = vpack.c.b16 %v321, %v320
        %v343 = vpack.c.b16 %v323, %v322
        %v344 = vpack.c.b16 %v325, %v324
        %v345 = vpack.c.b16 %v327, %v326
        %v346 = vpack.c.b16 %v329, %v328
        %v347 = vpack.c.b16 %v331, %v330
        %v348 = vpack.c.b16 %v333, %v332
        %v349 = vpack.c.b16 %v335, %v334
        %v350 = vpack.c.b16 %v337, %v336
        %v380 = vunpack.c.l.b16 %v270
        %v381 = vunpack.c.l.b16 %v271
        %v382 = vunpack.c.l.b16 %v272
        %v383 = vunpack.c.l.b16 %v273
        %v384 = vunpack.c.l.b16 %v274
        %v385 = vunpack.c.l.b16 %v275
        %v386 = vunpack.c.l.b16 %v276
        %v387 = vunpack.c.l.b16 %v277
        %v388 = vunpack.c.l.b16 %v278
        %v389 = vunpack.c.l.b16 %v279
        %v390 = vunpack.c.l.b16 %v280
        %v391 = vunpack.c.l.b16 %v281
        %v392 = vunpack.c.l.b16 %v282
        %v393 = vunpack.c.l.b16 %v283
        %v394 = vunpack.c.l.b16 %v284
        %v395 = vunpack.c.l.b16 %v285
        %v396 = vpack.c.b16 %v381, %v380
        %v397 = vpack.c.b16 %v383, %v382
        %v398 = vpack.c.b16 %v385, %v384
        %v399 = vpack.c.b16 %v387, %v386
        %v400 = vpack.c.b16 %v389, %v388
        %v401 = vpack.c.b16 %v391, %v390
        %v402 = vpack.c.b16 %v393, %v392
        %v403 = vpack.c.b16 %v395, %v394
        %412 = vmatprep.subr.bf16.mxu0 0
        %413 = vmatpush1.bf16.msra.mxu0 %v396
        %414 = vmatprep.subr.bf16.mxu0 0
        %415 = vmatpush1.bf16.msra.mxu0 %v397
        %416 = vmatprep.subr.bf16.mxu0 0
        %417 = vmatpush1.bf16.msra.mxu0 %v398
        %418 = vmatprep.subr.bf16.mxu0 0
        %419 = vmatpush1.bf16.msra.mxu0 %v399
        %420 = vmatprep.subr.bf16.mxu0 0
        %421 = vmatpush1.bf16.msra.mxu0 %v400
        %422 = vmatprep.subr.bf16.mxu0 0
        %423 = vmatpush1.bf16.msra.mxu0 %v401
        %424 = vmatprep.subr.bf16.mxu0 0
        %425 = vmatpush1.bf16.msra.mxu0 %v402
        %426 = vmatprep.subr.bf16.mxu0 0
        %427 = vmatpush1.bf16.msra.mxu0 %v403
        %428 = vmatprep.subr.bf16.mxu0 0
        %429 = vmatpush1.bf16.msra.mxu0 0
        %430 = vmatprep.subr.bf16.mxu0 0
        %431 = vmatpush1.bf16.msra.mxu0 0
        %432 = vmatprep.subr.bf16.mxu0 0
        %433 = vmatpush1.bf16.msra.mxu0 0
        %434 = vmatprep.subr.bf16.mxu0 0
        %435 = vmatpush1.bf16.msra.mxu0 0
        %436 = vmatprep.subr.bf16.mxu0 0
        %437 = vmatpush1.bf16.msra.mxu0 0
        %438 = vmatprep.subr.bf16.mxu0 0
        %439 = vmatpush1.bf16.msra.mxu0 0
        %440 = vmatprep.subr.bf16.mxu0 0
        %441 = vmatpush1.bf16.msra.mxu0 0
        %442 = vmatprep.subr.bf16.mxu0 0
        %443 = vmatpush1.bf16.msra.mxu0 0
        %444 = vmatprep.mubr.bf16.mxu0 0
        %445 = vmatmul.mubr.bf16.gmra.mrb[0].mxu0 %v338
        %v446 = vpop.f32.mrb[0].mxu0
        %v447 = vadd.f32 0.0, %v446
        %v448 = vpop.f32.mrb[0].mxu0
        %v449 = vpop.f32.mrb[0].mxu0
        %v450 = vadd.f32 0.0, %v449
        %v451 = vpop.f32.mrb[0].mxu0
        %452 = vmatprep.mubr.bf16.mxu0 0
        %453 = vmatmul.mubr.bf16.gmra.mrb[0].mxu0 %v339
        %v454 = vpop.f32.mrb[0].mxu0
        %v455 = vadd.f32 0.0, %v454
        %v456 = vpop.f32.mrb[0].mxu0
        %v457 = vpop.f32.mrb[0].mxu0
        %v458 = vadd.f32 0.0, %v457
        %v459 = vpop.f32.mrb[0].mxu0
        %460 = vmatprep.mubr.bf16.mxu0 0
        %461 = vmatmul.mubr.bf16.gmra.mrb[0].mxu0 %v340
        %v462 = vpop.f32.mrb[0].mxu0
        %v463 = vadd.f32 0.0, %v462
        %v464 = vpop.f32.mrb[0].mxu0
        %v465 = vpop.f32.mrb[0].mxu0
        %v466 = vadd.f32 0.0, %v465
        %v467 = vpop.f32.mrb[0].mxu0
        %468 = vmatprep.mubr.bf16.mxu0 0
        %469 = vmatmul.mubr.bf16.gmra.mrb[0].mxu0 %v341
        %v470 = vpop.f32.mrb[0].mxu0
        %v471 = vadd.f32 0.0, %v470
        %v472 = vpop.f32.mrb[0].mxu0
        %v473 = vpop.f32.mrb[0].mxu0
        %v474 = vadd.f32 0.0, %v473
        %v475 = vpop.f32.mrb[0].mxu0
        %476 = vmatprep.mubr.bf16.mxu0 0
        %477 = vmatmul.mubr.bf16.gmra.mrb[0].mxu0 %v342
        %v478 = vpop.f32.mrb[0].mxu0
        %v479 = vadd.f32 0.0, %v478
        %v480 = vpop.f32.mrb[0].mxu0
        %v481 = vpop.f32.mrb[0].mxu0
        %v482 = vadd.f32 0.0, %v481
        %v483 = vpop.f32.mrb[0].mxu0
        %484 = vmatprep.mubr.bf16.mxu0 0
        %485 = vmatmul.mubr.bf16.gmra.mrb[0].mxu0 %v343
        %v486 = vpop.f32.mrb[0].mxu0
        %v487 = vadd.f32 0.0, %v486
        %v488 = vpop.f32.mrb[0].mxu0
        %v489 = vpop.f32.mrb[0].mxu0
        %v490 = vadd.f32 0.0, %v489
        %v491 = vpop.f32.mrb[0].mxu0
        %492 = vmatprep.mubr.bf16.mxu0 0
        %493 = vmatmul.mubr.bf16.gmra.mrb[0].mxu0 %v344
        %v494 = vpop.f32.mrb[0].mxu0
        %v495 = vadd.f32 0.0, %v494
        %v496 = vpop.f32.mrb[0].mxu0
        %v497 = vpop.f32.mrb[0].mxu0
        %v498 = vadd.f32 0.0, %v497
        %v499 = vpop.f32.mrb[0].mxu0
        %500 = vmatprep.mubr.bf16.mxu0 0
        %501 = vmatmul.mubr.bf16.gmra.mrb[0].mxu0 %v345
        %v502 = vpop.f32.mrb[0].mxu0
        %v503 = vadd.f32 0.0, %v502
        %v504 = vpop.f32.mrb[0].mxu0
        %v505 = vpop.f32.mrb[0].mxu0
        %v506 = vadd.f32 0.0, %v505
        %v507 = vpop.f32.mrb[0].mxu0
        %508 = vmatprep.mubr.bf16.mxu0 0
        %509 = vmatmul.mubr.bf16.gmra.mrb[0].mxu0 %v346
        %v510 = vpop.f32.mrb[0].mxu0
        %v511 = vadd.f32 0.0, %v510
        %v512 = vpop.f32.mrb[0].mxu0
        %v513 = vpop.f32.mrb[0].mxu0
        %v514 = vadd.f32 0.0, %v513
        %v515 = vpop.f32.mrb[0].mxu0
        %516 = vmatprep.mubr.bf16.mxu0 0
        %517 = vmatmul.mubr.bf16.gmra.mrb[0].mxu0 %v347
        %v518 = vpop.f32.mrb[0].mxu0
        %v519 = vadd.f32 0.0, %v518
        %v520 = vpop.f32.mrb[0].mxu0
        %v521 = vpop.f32.mrb[0].mxu0
        %v522 = vadd.f32 0.0, %v521
        %v523 = vpop.f32.mrb[0].mxu0
        %524 = vmatprep.mubr.bf16.mxu0 0
        %525 = vmatmul.mubr.bf16.gmra.mrb[0].mxu0 %v348
        %v526 = vpop.f32.mrb[0].mxu0
        %v527 = vadd.f32 0.0, %v526
        %v528 = vpop.f32.mrb[0].mxu0
        %v529 = vpop.f32.mrb[0].mxu0
        %v530 = vadd.f32 0.0, %v529
        %v531 = vpop.f32.mrb[0].mxu0
        %532 = vmatprep.mubr.bf16.mxu0 0
        %533 = vmatmul.mubr.bf16.gmra.mrb[0].mxu0 %v349
        %v534 = vpop.f32.mrb[0].mxu0
        %v535 = vadd.f32 0.0, %v534
        %v536 = vpop.f32.mrb[0].mxu0
        %v537 = vpop.f32.mrb[0].mxu0
        %v538 = vadd.f32 0.0, %v537
        %v539 = vpop.f32.mrb[0].mxu0
        %540 = vmatprep.mubr.bf16.mxu0 0
        %541 = vmatmul.mubr.bf16.gmra.mrb[0].mxu0 %v350
        %v542 = vpop.f32.mrb[0].mxu0
        %v543 = vadd.f32 0.0, %v542
        %v544 = vpop.f32.mrb[0].mxu0
        %v545 = vpop.f32.mrb[0].mxu0
        %v546 = vadd.f32 0.0, %v545
        %v547 = vpop.f32.mrb[0].mxu0
        %548 = vdwg.mxu0
        %s549 = scalar_lea.vmem [#allocation2], %s233
        %550 = vst [vmem:[%s549] sm:$0xff] %v447
        %551 = vst [vmem:[%s549 + $0x8] sm:$0xff] %v450
        %552 = vst [vmem:[%s549 + $0x10] sm:$0xff] %v455
        %553 = vst [vmem:[%s549 + $0x18] sm:$0xff] %v458
        %554 = vst [vmem:[%s549 + $0x20] sm:$0xff] %v463
        %555 = vst [vmem:[%s549 + $0x28] sm:$0xff] %v466
        %556 = vst [vmem:[%s549 + $0x30] sm:$0xff] %v471
        %557 = vst [vmem:[%s549 + $0x38] sm:$0xff] %v474
        %558 = vst [vmem:[%s549 + $0x40] sm:$0xff] %v479
        %559 = vst [vmem:[%s549 + $0x48] sm:$0xff] %v482
        %560 = vst [vmem:[%s549 + $0x50] sm:$0xff] %v487
        %561 = vst [vmem:[%s549 + $0x58] sm:$0xff] %v490
        %562 = vst [vmem:[%s549 + $0x60] sm:$0xff] %v495
        %563 = vst [vmem:[%s549 + $0x68] sm:$0xff] %v498
        %564 = vst [vmem:[%s549 + $0x70] sm:$0xff] %v503
        %565 = vst [vmem:[%s549 + $0x78] sm:$0xff] %v506
        %566 = vst [vmem:[%s549 + $0x80] sm:$0xff] %v511
        %567 = vst [vmem:[%s549 + $0x88] sm:$0xff] %v514
        %568 = vst [vmem:[%s549 + $0x90] sm:$0xff] %v519
        %569 = vst [vmem:[%s549 + $0x98] sm:$0xff] %v522
        %570 = vst [vmem:[%s549 + $0xa0] sm:$0xff] %v527
        %571 = vst [vmem:[%s549 + $0xa8] sm:$0xff] %v530
        %572 = vst [vmem:[%s549 + $0xb0] sm:$0xff] %v535
        %573 = vst [vmem:[%s549 + $0xb8] sm:$0xff] %v538
        %574 = vst [vmem:[%s549 + $0xc0] sm:$0xff] %v543
        %575 = vst [vmem:[%s549 + $0xc8] sm:$0xff] %v546
        %v576 = vld [vmem:[#allocation3] sm:$0x1]
        %v577 = vadd.f32 %v447, %v450
        %v578 = vadd.f32 %v577, %v455
        %v579 = vadd.f32 %v578, %v458
        %v580 = vadd.f32 %v579, %v463
        %v581 = vadd.f32 %v580, %v466
        %v582 = vadd.f32 %v581, %v471
        %v583 = vadd.f32 %v582, %v474
        %v584 = vadd.f32 %v583, %v479
        %v585 = vadd.f32 %v584, %v482
        %v586 = vadd.f32 %v585, %v487
        %v587 = vadd.f32 %v586, %v490
        %v588 = vadd.f32 %v587, %v495
        %v589 = vadd.f32 %v588, %v498
        %v590 = vadd.f32 %v589, %v503
        %v591 = vadd.f32 %v590, %v506
        %v592 = vadd.f32 %v591, %v511
        %v593 = vadd.f32 %v592, %v514
        %v594 = vadd.f32 %v593, %v519
        %v595 = vadd.f32 %v594, %v522
        %v596 = vadd.f32 %v595, %v527
        %v597 = vadd.f32 %v596, %v530
        %v598 = vadd.f32 %v597, %v535
        %v599 = vadd.f32 %v598, %v538
        %v600 = vadd.f32 %v599, %v543
        %v601 = vadd.f32 %v600, %v546
        %v602 = vrot.slane %v601, 4
        %v603 = vadd.f32 %v601, %v602
        %v604 = vrot.slane %v603, 2
        %v605 = vadd.f32 %v603, %v604
        %v606 = vrot.slane %v605, 1
        %v607 = vadd.f32 %v605, %v606
        %v608 = vadd.f32 %v576, %v607
        %609 = vst [vmem:[#allocation3] sm:$0x1] %v608
        %v610 = vld [vmem:[#allocation4] sm:$0x1]
        %v611 = vmul.f32 %v447, %v447
        %v612 = vmul.f32 %v450, %v450
        %v613 = vmul.f32 %v455, %v455
        %v614 = vmul.f32 %v458, %v458
        %v615 = vmul.f32 %v463, %v463
        %v616 = vmul.f32 %v466, %v466
        %v617 = vmul.f32 %v471, %v471
        %v618 = vmul.f32 %v474, %v474
        %v619 = vmul.f32 %v479, %v479
        %v620 = vmul.f32 %v482, %v482
        %v621 = vmul.f32 %v487, %v487
        %v622 = vmul.f32 %v490, %v490
        %v623 = vmul.f32 %v495, %v495
        %v624 = vmul.f32 %v498, %v498
        %v625 = vmul.f32 %v503, %v503
        %v626 = vmul.f32 %v506, %v506
        %v627 = vmul.f32 %v511, %v511
        %v628 = vmul.f32 %v514, %v514
        %v629 = vmul.f32 %v519, %v519
        %v630 = vmul.f32 %v522, %v522
        %v631 = vmul.f32 %v527, %v527
        %v632 = vmul.f32 %v530, %v530
        %v633 = vmul.f32 %v535, %v535
        %v634 = vmul.f32 %v538, %v538
        %v635 = vmul.f32 %v543, %v543
        %v636 = vmul.f32 %v546, %v546
        %v637 = vadd.f32 %v611, %v612
        %v638 = vadd.f32 %v637, %v613
        %v639 = vadd.f32 %v638, %v614
        %v640 = vadd.f32 %v639, %v615
        %v641 = vadd.f32 %v640, %v616
        %v642 = vadd.f32 %v641, %v617
        %v643 = vadd.f32 %v642, %v618
        %v644 = vadd.f32 %v643, %v619
        %v645 = vadd.f32 %v644, %v620
        %v646 = vadd.f32 %v645, %v621
        %v647 = vadd.f32 %v646, %v622
        %v648 = vadd.f32 %v647, %v623
        %v649 = vadd.f32 %v648, %v624
        %v650 = vadd.f32 %v649, %v625
        %v651 = vadd.f32 %v650, %v626
        %v652 = vadd.f32 %v651, %v627
        %v653 = vadd.f32 %v652, %v628
        %v654 = vadd.f32 %v653, %v629
        %v655 = vadd.f32 %v654, %v630
        %v656 = vadd.f32 %v655, %v631
        %v657 = vadd.f32 %v656, %v632
        %v658 = vadd.f32 %v657, %v633
        %v659 = vadd.f32 %v658, %v634
        %v660 = vadd.f32 %v659, %v635
        %v661 = vadd.f32 %v660, %v636
        %v662 = vrot.slane %v661, 4
        %v663 = vadd.f32 %v661, %v662
        %v664 = vrot.slane %v663, 2
        %v665 = vadd.f32 %v663, %v664
        %v666 = vrot.slane %v665, 1
        %v667 = vadd.f32 %v665, %v666
        %v668 = vadd.f32 %v610, %v667
        %669 = vst [vmem:[#allocation4] sm:$0x1] %v668
        // Predicated region
        $region45: #{front_end_forward.5} parent=39 // pred_check
          %p670 = pneg %p238
        $region46: #{front_end_forward.5} parent=39 // pred_check_branch
          %672 = sbr.rel (%p670) target = $region48
        $region47: #{front_end_forward.5} parent=39 // pred_region
          %v673 = vld [vmem:[#allocation3] sm:$0x1]
          %v674 = vmul.f32 %v673, 0.005
          %v675 = vld [vmem:[#allocation4] sm:$0x1]
          %v676 = vmul.f32 %v675, 0.005
          %v677 = vmul.f32 %v674, %v674
          %v678 = vsub.f32 %v676, %v677
          %v679 = vmax.f32 %v678, 0.0
          %v680 = vld [vmem:[%s2] sm:$0x1]
          %v681 = vadd.f32 %v679, 1e-05
          %v682 = vrsqrt.pop %v681
          %v683 = vmul.f32 %v680, %v682
          %684 = vst [vmem:[#allocation3] sm:$0x1] %v683
          %v685 = vld [vmem:[%s3] sm:$0x1]
          %v686 = vmul.f32 %v674, %v683
          %v687 = vsub.f32 %v685, %v686
          %688 = vst [vmem:[#allocation4] sm:$0x1] %v687
        $region48: #{front_end_forward.5} parent=39 // pred_fallthru
          _
      $region40: #{front_end_forward.5} parent=35 // pred_fallthru
        _
      %p689 = scmp.eq.s32.totalorder %s19, 1
      // Predicated region
      $region49: #{front_end_forward.5} parent=35 // pred_check
        %p690 = pneg %p689
      $region50: #{front_end_forward.5} parent=35 // pred_check_branch
        %692 = sbr.rel (%p690) target = $region52
      $region51: #{front_end_forward.5} parent=35 // pred_region
        %s693 = scalar_lea.vmem [#allocation2], %s233
        %v694 = vld [vmem:[%s693] sm:$0xff]
        %v695 = vld [vmem:[%s693 + $0x8] sm:$0xff]
        %v696 = vld [vmem:[%s693 + $0x10] sm:$0xff]
        %v697 = vld [vmem:[%s693 + $0x18] sm:$0xff]
        %v698 = vld [vmem:[%s693 + $0x20] sm:$0xff]
        %v699 = vld [vmem:[%s693 + $0x28] sm:$0xff]
        %v700 = vld [vmem:[%s693 + $0x30] sm:$0xff]
        %v701 = vld [vmem:[%s693 + $0x38] sm:$0xff]
        %v702 = vld [vmem:[%s693 + $0x40] sm:$0xff]
        %v703 = vld [vmem:[%s693 + $0x48] sm:$0xff]
        %v704 = vld [vmem:[%s693 + $0x50] sm:$0xff]
        %v705 = vld [vmem:[%s693 + $0x58] sm:$0xff]
        %v706 = vld [vmem:[%s693 + $0x60] sm:$0xff]
        %v707 = vld [vmem:[%s693 + $0x68] sm:$0xff]
        %v708 = vld [vmem:[%s693 + $0x70] sm:$0xff]
        %v709 = vld [vmem:[%s693 + $0x78] sm:$0xff]
        %v710 = vld [vmem:[%s693 + $0x80] sm:$0xff]
        %v711 = vld [vmem:[%s693 + $0x88] sm:$0xff]
        %v712 = vld [vmem:[%s693 + $0x90] sm:$0xff]
        %v713 = vld [vmem:[%s693 + $0x98] sm:$0xff]
        %v714 = vld [vmem:[%s693 + $0xa0] sm:$0xff]
        %v715 = vld [vmem:[%s693 + $0xa8] sm:$0xff]
        %v716 = vld [vmem:[%s693 + $0xb0] sm:$0xff]
        %v717 = vld [vmem:[%s693 + $0xb8] sm:$0xff]
        %v718 = vld [vmem:[%s693 + $0xc0] sm:$0xff]
        %v719 = vld [vmem:[%s693 + $0xc8] sm:$0xff]
        %v720 = vld [vmem:[#allocation3] sm:$0x1]
        %v722 = vlaneseq
        %v723 = vshrl.u32 %v722, 7
        %v724 = vsub.s32 0, %v723
        %v725 = vrot.slane %v720, %v724
        %v727 = vmul.f32 %v694, %v725
        %v728 = vmul.f32 %v695, %v725
        %v729 = vmul.f32 %v696, %v725
        %v730 = vmul.f32 %v697, %v725
        %v731 = vmul.f32 %v698, %v725
        %v732 = vmul.f32 %v699, %v725
        %v733 = vmul.f32 %v700, %v725
        %v734 = vmul.f32 %v701, %v725
        %v735 = vmul.f32 %v702, %v725
        %v736 = vmul.f32 %v703, %v725
        %v737 = vmul.f32 %v704, %v725
        %v738 = vmul.f32 %v705, %v725
        %v739 = vmul.f32 %v706, %v725
        %v740 = vmul.f32 %v707, %v725
        %v741 = vmul.f32 %v708, %v725
        %v742 = vmul.f32 %v709, %v725
        %v743 = vmul.f32 %v710, %v725
        %v744 = vmul.f32 %v711, %v725
        %v745 = vmul.f32 %v712, %v725
        %v746 = vmul.f32 %v713, %v725
        %v747 = vmul.f32 %v714, %v725
        %v748 = vmul.f32 %v715, %v725
        %v749 = vmul.f32 %v716, %v725
        %v750 = vmul.f32 %v717, %v725
        %v751 = vmul.f32 %v718, %v725
        %v752 = vmul.f32 %v719, %v725
        %v753 = vld [vmem:[#allocation4] sm:$0x1]
        %v755 = vlaneseq
        %v756 = vshrl.u32 %v755, 7
        %v757 = vsub.s32 0, %v756
        %v758 = vrot.slane %v753, %v757
        %v760 = vadd.f32 %v727, %v758
        %v761 = vadd.f32 %v728, %v758
        %v762 = vadd.f32 %v729, %v758
        %v763 = vadd.f32 %v730, %v758
        %v764 = vadd.f32 %v731, %v758
        %v765 = vadd.f32 %v732, %v758
        %v766 = vadd.f32 %v733, %v758
        %v767 = vadd.f32 %v734, %v758
        %v768 = vadd.f32 %v735, %v758
        %v769 = vadd.f32 %v736, %v758
        %v770 = vadd.f32 %v737, %v758
        %v771 = vadd.f32 %v738, %v758
        %v772 = vadd.f32 %v739, %v758
        %v773 = vadd.f32 %v740, %v758
        %v774 = vadd.f32 %v741, %v758
        %v775 = vadd.f32 %v742, %v758
        %v776 = vadd.f32 %v743, %v758
        %v777 = vadd.f32 %v744, %v758
        %v778 = vadd.f32 %v745, %v758
        %v779 = vadd.f32 %v746, %v758
        %v780 = vadd.f32 %v747, %v758
        %v781 = vadd.f32 %v748, %v758
        %v782 = vadd.f32 %v749, %v758
        %v783 = vadd.f32 %v750, %v758
        %v784 = vadd.f32 %v751, %v758
        %v785 = vadd.f32 %v752, %v758
        %vm786 = vcmp.ge.f32.partialorder %v760, 0.0
        %vm787 = vcmp.ge.f32.partialorder %v761, 0.0
        %vm788 = vcmp.ge.f32.partialorder %v762, 0.0
        %vm789 = vcmp.ge.f32.partialorder %v763, 0.0
        %vm790 = vcmp.ge.f32.partialorder %v764, 0.0
        %vm791 = vcmp.ge.f32.partialorder %v765, 0.0
        %vm792 = vcmp.ge.f32.partialorder %v766, 0.0
        %vm793 = vcmp.ge.f32.partialorder %v767, 0.0
        %vm794 = vcmp.ge.f32.partialorder %v768, 0.0
        %vm795 = vcmp.ge.f32.partialorder %v769, 0.0
        %vm796 = vcmp.ge.f32.partialorder %v770, 0.0
        %vm797 = vcmp.ge.f32.partialorder %v771, 0.0
        %vm798 = vcmp.ge.f32.partialorder %v772, 0.0
        %vm799 = vcmp.ge.f32.partialorder %v773, 0.0
        %vm800 = vcmp.ge.f32.partialorder %v774, 0.0
        %vm801 = vcmp.ge.f32.partialorder %v775, 0.0
        %vm802 = vcmp.ge.f32.partialorder %v776, 0.0
        %vm803 = vcmp.ge.f32.partialorder %v777, 0.0
        %vm804 = vcmp.ge.f32.partialorder %v778, 0.0
        %vm805 = vcmp.ge.f32.partialorder %v779, 0.0
        %vm806 = vcmp.ge.f32.partialorder %v780, 0.0
        %vm807 = vcmp.ge.f32.partialorder %v781, 0.0
        %vm808 = vcmp.ge.f32.partialorder %v782, 0.0
        %vm809 = vcmp.ge.f32.partialorder %v783, 0.0
        %vm810 = vcmp.ge.f32.partialorder %v784, 0.0
        %vm811 = vcmp.ge.f32.partialorder %v785, 0.0
        %v812 = vmul.f32 %v760, 0.2
        %v813 = vmul.f32 %v761, 0.2
        %v814 = vmul.f32 %v762, 0.2
        %v815 = vmul.f32 %v763, 0.2
        %v816 = vmul.f32 %v764, 0.2
        %v817 = vmul.f32 %v765, 0.2
        %v818 = vmul.f32 %v766, 0.2
        %v819 = vmul.f32 %v767, 0.2
        %v820 = vmul.f32 %v768, 0.2
        %v821 = vmul.f32 %v769, 0.2
        %v822 = vmul.f32 %v770, 0.2
        %v823 = vmul.f32 %v771, 0.2
        %v824 = vmul.f32 %v772, 0.2
        %v825 = vmul.f32 %v773, 0.2
        %v826 = vmul.f32 %v774, 0.2
        %v827 = vmul.f32 %v775, 0.2
        %v828 = vmul.f32 %v776, 0.2
        %v829 = vmul.f32 %v777, 0.2
        %v830 = vmul.f32 %v778, 0.2
        %v831 = vmul.f32 %v779, 0.2
        %v832 = vmul.f32 %v780, 0.2
        %v833 = vmul.f32 %v781, 0.2
        %v834 = vmul.f32 %v782, 0.2
        %v835 = vmul.f32 %v783, 0.2
        %v836 = vmul.f32 %v784, 0.2
        %v837 = vmul.f32 %v785, 0.2
        %v838 = vsel %vm786, %v760, %v812
        %v839 = vsel %vm787, %v761, %v813
        %v840 = vsel %vm788, %v762, %v814
        %v841 = vsel %vm789, %v763, %v815
        %v842 = vsel %vm790, %v764, %v816
        %v843 = vsel %vm791, %v765, %v817
        %v844 = vsel %vm792, %v766, %v818
        %v845 = vsel %vm793, %v767, %v819
        %v846 = vsel %vm794, %v768, %v820
        %v847 = vsel %vm795, %v769, %v821
        %v848 = vsel %vm796, %v770, %v822
        %v849 = vsel %vm797, %v771, %v823
        %v850 = vsel %vm798, %v772, %v824
        %v851 = vsel %vm799, %v773, %v825
        %v852 = vsel %vm800, %v774, %v826
        %v853 = vsel %vm801, %v775, %v827
        %v854 = vsel %vm802, %v776, %v828
        %v855 = vsel %vm803, %v777, %v829
        %v856 = vsel %vm804, %v778, %v830
        %v857 = vsel %vm805, %v779, %v831
        %v858 = vsel %vm806, %v780, %v832
        %v859 = vsel %vm807, %v781, %v833
        %v860 = vsel %vm808, %v782, %v834
        %v861 = vsel %vm809, %v783, %v835
        %v862 = vsel %vm810, %v784, %v836
        %v863 = vsel %vm811, %v785, %v837
        %v864 = vpack.c.bf16 %v839, %v838
        %v865 = vpack.c.bf16 %v841, %v840
        %v866 = vpack.c.bf16 %v843, %v842
        %v867 = vpack.c.bf16 %v845, %v844
        %v868 = vpack.c.bf16 %v847, %v846
        %v869 = vpack.c.bf16 %v849, %v848
        %v870 = vpack.c.bf16 %v851, %v850
        %v871 = vpack.c.bf16 %v853, %v852
        %v872 = vpack.c.bf16 %v855, %v854
        %v873 = vpack.c.bf16 %v857, %v856
        %v874 = vpack.c.bf16 %v859, %v858
        %v875 = vpack.c.bf16 %v861, %v860
        %v876 = vpack.c.bf16 %v863, %v862
        %v890 = vunpack.c.l.b16 %v864
        %v891 = vunpack.c.h.b16 %v864
        %v892 = vunpack.c.l.b16 %v865
        %v893 = vunpack.c.h.b16 %v865
        %v894 = vunpack.c.l.b16 %v866
        %v895 = vunpack.c.h.b16 %v866
        %v896 = vunpack.c.l.b16 %v867
        %v897 = vunpack.c.h.b16 %v867
        %v898 = vunpack.c.l.b16 %v868
        %v899 = vunpack.c.h.b16 %v868
        %v900 = vunpack.c.l.b16 %v869
        %v901 = vunpack.c.h.b16 %v869
        %v902 = vunpack.c.l.b16 %v870
        %v903 = vunpack.c.h.b16 %v870
        %v904 = vunpack.c.l.b16 %v871
        %v905 = vunpack.c.h.b16 %v871
        %v906 = vunpack.c.l.b16 %v872
        %v907 = vunpack.c.h.b16 %v872
        %v908 = vunpack.c.l.b16 %v873
        %v909 = vunpack.c.h.b16 %v873
        %v910 = vunpack.c.l.b16 %v874
        %v911 = vunpack.c.h.b16 %v874
        %v912 = vunpack.c.l.b16 %v875
        %v913 = vunpack.c.h.b16 %v875
        %v914 = vunpack.c.l.b16 %v876
        %v915 = vunpack.c.h.b16 %v876
        %v916 = vpack.c.b16 %v890, %v890
        %v917 = vpack.c.b16 %v891, %v891
        %v918 = vpack.c.b16 %v892, %v892
        %v919 = vpack.c.b16 %v893, %v893
        %v920 = vpack.c.b16 %v894, %v894
        %v921 = vpack.c.b16 %v895, %v895
        %v922 = vpack.c.b16 %v896, %v896
        %v923 = vpack.c.b16 %v897, %v897
        %v924 = vpack.c.b16 %v898, %v898
        %v925 = vpack.c.b16 %v899, %v899
        %v926 = vpack.c.b16 %v900, %v900
        %v927 = vpack.c.b16 %v901, %v901
        %v928 = vpack.c.b16 %v902, %v902
        %v929 = vpack.c.b16 %v903, %v903
        %v930 = vpack.c.b16 %v904, %v904
        %v931 = vpack.c.b16 %v905, %v905
        %v932 = vpack.c.b16 %v906, %v906
        %v933 = vpack.c.b16 %v907, %v907
        %v934 = vpack.c.b16 %v908, %v908
        %v935 = vpack.c.b16 %v909, %v909
        %v936 = vpack.c.b16 %v910, %v910
        %v937 = vpack.c.b16 %v911, %v911
        %v938 = vpack.c.b16 %v912, %v912
        %v939 = vpack.c.b16 %v913, %v913
        %v940 = vpack.c.b16 %v914, %v914
        %v941 = vpack.c.b16 %v915, %v915
        %968 = vst [vmem:[%s229] sm:$0xf] %v916
        %969 = vst [vmem:[%s229 + $0x4] sm:$0xf] %v917
        %970 = vst [vmem:[%s229 + $0x8] sm:$0xf] %v918
        %971 = vst [vmem:[%s229 + $0xc] sm:$0xf] %v919
        %972 = vst [vmem:[%s229 + $0x10] sm:$0xf] %v920
        %973 = vst [vmem:[%s229 + $0x14] sm:$0xf] %v921
        %974 = vst [vmem:[%s229 + $0x18] sm:$0xf] %v922
        %975 = vst [vmem:[%s229 + $0x1c] sm:$0xf] %v923
        %976 = vst [vmem:[%s229 + $0x20] sm:$0xf] %v924
        %977 = vst [vmem:[%s229 + $0x24] sm:$0xf] %v925
        %978 = vst [vmem:[%s229 + $0x28] sm:$0xf] %v926
        %979 = vst [vmem:[%s229 + $0x2c] sm:$0xf] %v927
        %980 = vst [vmem:[%s229 + $0x30] sm:$0xf] %v928
        %981 = vst [vmem:[%s229 + $0x34] sm:$0xf] %v929
        %982 = vst [vmem:[%s229 + $0x38] sm:$0xf] %v930
        %983 = vst [vmem:[%s229 + $0x3c] sm:$0xf] %v931
        %984 = vst [vmem:[%s229 + $0x40] sm:$0xf] %v932
        %985 = vst [vmem:[%s229 + $0x44] sm:$0xf] %v933
        %986 = vst [vmem:[%s229 + $0x48] sm:$0xf] %v934
        %987 = vst [vmem:[%s229 + $0x4c] sm:$0xf] %v935
        %988 = vst [vmem:[%s229 + $0x50] sm:$0xf] %v936
        %989 = vst [vmem:[%s229 + $0x54] sm:$0xf] %v937
        %990 = vst [vmem:[%s229 + $0x58] sm:$0xf] %v938
        %991 = vst [vmem:[%s229 + $0x5c] sm:$0xf] %v939
        %992 = vst [vmem:[%s229 + $0x60] sm:$0xf] %v940
        %993 = vst [vmem:[%s229 + $0x64] sm:$0xf] %v941
      $region52: #{front_end_forward.5} parent=35 // pred_fallthru
        _
      %s994 = smul.u32 %s19, %s20
      %s995 = smul.u32 26, %s994
      %p996 = scmp.lt.s32.totalorder %s995, 25
      %s997 = scalar_select %p996, %s995, 25
      %s998 = smul.addr %s997, 4
      %s999 = scalar_lea.vmem %s4, %s998
      // Predicated region
      $region53: #{front_end_forward.5} parent=35 // pred_check
        %p1000 = pneg %p140
      $region54: #{front_end_forward.5} parent=35 // pred_check_branch
        %1002 = sbr.rel (%p1000) target = $region56
      $region55: #{front_end_forward.5} parent=35 // pred_region
        %s1003 = smul.u32 %s19, %s20
        %s1004 = smul.u32 26, %s1003
      $region56: #{front_end_forward.5} parent=35 // pred_fallthru
        _
    $region36: #{front_end_forward.5} parent=5 // pred_fallthru
      _
    %p1005 = scmp.le.s32.totalorder 2, %s10
    // Predicated region
    $region57: #{front_end_forward.5} parent=5 // pred_check
      %p1006 = pneg %p1005
    $region58: #{front_end_forward.5} parent=5 // pred_check_branch
      %1008 = sbr.rel (%p1006) target = $region60
    $region59: #{front_end_forward.5} parent=5 // pred_region
      %s1009 = ssub.s32 %s10, 2
      // Predicated region
      $region61: #{front_end_forward.5} parent=59 // pred_check
        %p1010 = pneg %p146
      $region62: #{front_end_forward.5} parent=59 // pred_check_branch
        %1012 = sbr.rel (%p1010) target = $region64
      $region63: #{front_end_forward.5} parent=59 // pred_region
        %s1013 = smul.u32 %s21, %s22
        %s1014 = smul.u32 26, %s1013
        %p1015 = scmp.lt.s32.totalorder %s1014, 25
        %s1016 = scalar_select %p1015, %s1014, 25
        %s1017 = smul.addr %s1016, 4
        %s1018 = scalar_lea.vmem %s4, %s1017
      $region64: #{front_end_forward.5} parent=59 // pred_fallthru
        _
    $region60: #{front_end_forward.5} parent=5 // pred_fallthru
      _
  $region6: #{front_end_forward.5} parent=0 // loop_footer
    %s14 = sadd.s32 1, %s10
  $region7: #{front_end_forward.5} parent=0 // loop_footer_branch
    %9 = sbr.rel target = $region3
  $region8: #{front_end_forward.5} parent=0 // loop_exit
    _

// kernel: front_end_forward.6
$region0: #{front_end_forward.6}
  #allocation0 [shape = 'u32[]', space=smem, size = 0x4, offset = 0x4, fixed_abs, tag = 'smem constant byte address 0x4 - core index']
  #allocation1 [shape = 'u32[144,128]{1,0:T(1,128)}', space=vmem, size = 0x12000, scoped, tag = 'internal scratch']
  #allocation2 [shape = 'f32[64,128]{1,0:T(8,128)}', space=vmem, size = 0x8000, scoped, tag = 'scratch operand']
  #allocation3 [shape = 'f32[1,128]{1,0:T(1,128)}', space=vmem, size = 0x200, scoped, tag = 'scratch operand']
  #allocation4 [shape = 'f32[1,128]{1,0:T(1,128)}', space=vmem, size = 0x200, scoped, tag = 'scratch operand']
  %s0 = inlined_call_operand.vmem [shape: bf16[64,128], index: 0, kind: input, shape index: {}]
  %s1 = inlined_call_operand.vmem [shape: bf16[128,128], index: 1, kind: input, shape index: {}]
  %s2 = inlined_call_operand.vmem [shape: f32[1,128], index: 2, kind: input, shape index: {}]
  %s3 = inlined_call_operand.vmem [shape: f32[1,128], index: 3, kind: input, shape index: {}]
  %s4 = inlined_call_operand.vmem [shape: bf16[64,128], index: 4, kind: output, shape index: {}]
  %s5 = sld [smem:[#allocation0]]
  $region65: #{front_end_forward.6} parent=0
    _
  %s7 = ssub.s32 1, %s5
  %s8 = scalar_select 0, %s7, %s5
  loop: start=0, step=1, limit=4
  $region2: #{front_end_forward.6} parent=0 // loop_pre_header
    _
  $region3: #{front_end_forward.6} parent=0 // loop_header
    %s10 = sphi 0, %s14
    %p11 = scmp.ge.s32.totalorder %s10, 4
    %s17 = sphi 0, %s29
    %s18 = sphi 0, %s25
    %s19 = sphi 0, %s17
    %s20 = sphi 0, %s18
    %s21 = sphi 0, %s19
    %s22 = sphi 0, %s20
    %s36 = sphi 0, %s38
    %s39 = sphi 0, %s36
    %s40 = sphi 0, %s39
    %s56 = sphi 0, %s40
    %s60 = sphi 0, %s60
    %s62 = sphi 0, %s60
    %s63 = sphi 0, %s62
    %s77 = sphi 0, %s63
    %s81 = sphi 0, %s81
    %s83 = sphi 0, %s81
    %s84 = sphi 0, %s83
    %s98 = sphi 0, %s84
    %s102 = sphi 0, %s102
    %s104 = sphi 0, %s102
    %s105 = sphi 0, %s104
    %s119 = sphi 0, %s105
    %s127 = sphi 0, %s129
    %s130 = sphi 0, %s127
    %s131 = sphi 0, %s130
    %s147 = sphi 0, %s131
  $region4: #{front_end_forward.6} parent=0 // loop_header_branch
    %13 = sbr.rel (%p11) target = $region8
  $region5: #{front_end_forward.6} parent=0 // loop_body
    %s15 = ssub.s32 %s10, 1
    %s16 = ssub.s32 %s10, 2
    %s23 = sadd.s32 1, %s18
    %p24 = scmp.ge.s32.totalorder %s23, 1
    %s25 = scalar_select %p24, 0, %s23
    %s26 = sadd.s32 1, %s17
    %s27 = scalar_select %p24, %s26, %s17
    %p28 = scmp.ge.s32.totalorder %s27, 2
    %s29 = scalar_select %p28, 0, %s27
    %s30 = ssub.s32 1, %s17
    %s31 = smul.u32 %s30, %s18
    %s32 = ssub.s32 1, %s29
    %s33 = smul.u32 %s32, %s25
    %s34 = ssub.s32 %s31, %s33
    %p35 = scmp.eq.s32.totalorder %s34, 0
    %s37 = sadd.s32 %s36, 1
    %s38 = scalar_select %p35, %s36, %s37
    %p41 = pneg %p35
    %p42 = scmp.eq.s32.totalorder %s10, 1
    %p43 = por %p41, %p42
    %p44 = scmp.ne.s32.totalorder %s36, %s39
    %p45 = scmp.eq.s32.totalorder %s10, 0
    %p46 = por %p44, %p45
    %p47 = scmp.ne.s32.totalorder %s36, %s39
    %p48 = scmp.eq.s32.totalorder %s15, 1
    %p49 = por %p47, %p48
    %p50 = scmp.ne.s32.totalorder %s39, %s40
    %p51 = scmp.eq.s32.totalorder %s15, 0
    %p52 = por %p50, %p51
    %p53 = scmp.ne.s32.totalorder %s39, %s40
    %p54 = scmp.eq.s32.totalorder %s16, 1
    %p55 = por %p53, %p54
    %p57 = scmp.ne.s32.totalorder %s40, %s56
    %p58 = scmp.eq.s32.totalorder %s16, 0
    %p59 = por %p57, %p58
    %s61 = sadd.s32 %s60, 1
    %p64 = scmp.eq.s32.totalorder %s10, 1
    %p65 = scmp.ne.s32.totalorder %s60, %s62
    %p66 = scmp.eq.s32.totalorder %s10, 0
    %p67 = por %p65, %p66
    %p68 = scmp.ne.s32.totalorder %s60, %s62
    %p69 = scmp.eq.s32.totalorder %s15, 1
    %p70 = por %p68, %p69
    %p71 = scmp.ne.s32.totalorder %s62, %s63
    %p72 = scmp.eq.s32.totalorder %s15, 0
    %p73 = por %p71, %p72
    %p74 = scmp.ne.s32.totalorder %s62, %s63
    %p75 = scmp.eq.s32.totalorder %s16, 1
    %p76 = por %p74, %p75
    %p78 = scmp.ne.s32.totalorder %s63, %s77
    %p79 = scmp.eq.s32.totalorder %s16, 0
    %p80 = por %p78, %p79
    %s82 = sadd.s32 %s81, 1
    %p85 = scmp.eq.s32.totalorder %s10, 1
    %p86 = scmp.ne.s32.totalorder %s81, %s83
    %p87 = scmp.eq.s32.totalorder %s10, 0
    %p88 = por %p86, %p87
    %p89 = scmp.ne.s32.totalorder %s81, %s83
    %p90 = scmp.eq.s32.totalorder %s15, 1
    %p91 = por %p89, %p90
    %p92 = scmp.ne.s32.totalorder %s83, %s84
    %p93 = scmp.eq.s32.totalorder %s15, 0
    %p94 = por %p92, %p93
    %p95 = scmp.ne.s32.totalorder %s83, %s84
    %p96 = scmp.eq.s32.totalorder %s16, 1
    %p97 = por %p95, %p96
    %p99 = scmp.ne.s32.totalorder %s84, %s98
    %p100 = scmp.eq.s32.totalorder %s16, 0
    %p101 = por %p99, %p100
    %s103 = sadd.s32 %s102, 1
    %p106 = scmp.eq.s32.totalorder %s10, 1
    %p107 = scmp.ne.s32.totalorder %s102, %s104
    %p108 = scmp.eq.s32.totalorder %s10, 0
    %p109 = por %p107, %p108
    %p110 = scmp.ne.s32.totalorder %s102, %s104
    %p111 = scmp.eq.s32.totalorder %s15, 1
    %p112 = por %p110, %p111
    %p113 = scmp.ne.s32.totalorder %s104, %s105
    %p114 = scmp.eq.s32.totalorder %s15, 0
    %p115 = por %p113, %p114
    %p116 = scmp.ne.s32.totalorder %s104, %s105
    %p117 = scmp.eq.s32.totalorder %s16, 1
    %p118 = por %p116, %p117
    %p120 = scmp.ne.s32.totalorder %s105, %s119
    %p121 = scmp.eq.s32.totalorder %s16, 0
    %p122 = por %p120, %p121
    %s123 = smul.u32 %s17, %s18
    %s124 = smul.u32 %s29, %s25
    %s125 = ssub.s32 %s123, %s124
    %p126 = scmp.eq.s32.totalorder %s125, 0
    %s128 = sadd.s32 %s127, 1
    %s129 = scalar_select %p126, %s127, %s128
    %p132 = pneg %p126
    %p133 = scmp.eq.s32.totalorder %s10, 1
    %p134 = por %p132, %p133
    %p135 = scmp.ne.s32.totalorder %s127, %s130
    %p136 = scmp.eq.s32.totalorder %s10, 0
    %p137 = por %p135, %p136
    %p138 = scmp.ne.s32.totalorder %s127, %s130
    %p139 = scmp.eq.s32.totalorder %s15, 1
    %p140 = por %p138, %p139
    %p141 = scmp.ne.s32.totalorder %s130, %s131
    %p142 = scmp.eq.s32.totalorder %s15, 0
    %p143 = por %p141, %p142
    %p144 = scmp.ne.s32.totalorder %s130, %s131
    %p145 = scmp.eq.s32.totalorder %s16, 1
    %p146 = por %p144, %p145
    %p148 = scmp.ne.s32.totalorder %s131, %s147
    %p149 = scmp.eq.s32.totalorder %s16, 0
    %p150 = por %p148, %p149
    %p151 = scmp.le.s32.totalorder 1, %s10
    %p152 = scmp.lt.s32.totalorder %s10, 3
    %p153 = pnand %p151, %p152
    %p154 = pneg %p153
    // Predicated region
    $region9: #{front_end_forward.6} parent=5 // pred_check
      _
    $region10: #{front_end_forward.6} parent=5 // pred_check_branch
      %156 = sbr.rel (%p153) target = $region12
    $region11: #{front_end_forward.6} parent=5 // pred_region
      %s157 = ssub.s32 %s10, 1
      // Predicated region
      $region13: #{front_end_forward.6} parent=11 // pred_check
        %p158 = pneg %p73
      $region14: #{front_end_forward.6} parent=11 // pred_check_branch
        %160 = sbr.rel (%p158) target = $region16
      $region15: #{front_end_forward.6} parent=11 // pred_region
        _
      $region16: #{front_end_forward.6} parent=11 // pred_fallthru
        _
      // Predicated region
      $region17: #{front_end_forward.6} parent=11 // pred_check
        %p161 = pneg %p94
      $region18: #{front_end_forward.6} parent=11 // pred_check_branch
        %163 = sbr.rel (%p161) target = $region20
      $region19: #{front_end_forward.6} parent=11 // pred_region
        _
      $region20: #{front_end_forward.6} parent=11 // pred_fallthru
        _
      // Predicated region
      $region21: #{front_end_forward.6} parent=11 // pred_check
        %p164 = pneg %p115
      $region22: #{front_end_forward.6} parent=11 // pred_check_branch
        %166 = sbr.rel (%p164) target = $region24
      $region23: #{front_end_forward.6} parent=11 // pred_region
        _
      $region24: #{front_end_forward.6} parent=11 // pred_fallthru
        _
    $region12: #{front_end_forward.6} parent=5 // pred_fallthru
      _
    %p167 = scmp.lt.s32.totalorder %s10, 2
    // Predicated region
    $region25: #{front_end_forward.6} parent=5 // pred_check
      %p168 = pneg %p167
    $region26: #{front_end_forward.6} parent=5 // pred_check_branch
      %170 = sbr.rel (%p168) target = $region28
    $region27: #{front_end_forward.6} parent=5 // pred_region
      // Predicated region
      $region29: #{front_end_forward.6} parent=27 // pred_check
        %p171 = pneg %p46
      $region30: #{front_end_forward.6} parent=27 // pred_check_branch
        %173 = sbr.rel (%p171) target = $region32
      $region31: #{front_end_forward.6} parent=27 // pred_region
        %s174 = ssub.s32 1, %s17
        %s175 = smul.u32 %s174, %s18
        %s176 = smul.u32 8, %s175
        %p177 = scmp.lt.s32.totalorder %s176, 7
        %s178 = scalar_select %p177, %s176, 7
        %s179 = smul.addr %s178, 4
        %s180 = scalar_lea.vmem %s0, %s179
        %s181 = ssub.s32 1, %s17
        %s182 = smul.u32 %s181, %s18
        %s183 = smul.u32 8, %s182
      $region32: #{front_end_forward.6} parent=27 // pred_fallthru
        _
    $region28: #{front_end_forward.6} parent=5 // pred_fallthru
      _
    %p184 = scmp.le.s32.totalorder 1, %s10
    %p185 = scmp.lt.s32.totalorder %s10, 3
    %p186 = pnand %p184, %p185
    %p187 = pneg %p186
    // Predicated region
    $region33: #{front_end_forward.6} parent=5 // pred_check
      _
    $region34: #{front_end_forward.6} parent=5 // pred_check_branch
      %189 = sbr.rel (%p186) target = $region36
    $region35: #{front_end_forward.6} parent=5 // pred_region
      %s190 = ssub.s32 %s10, 1
      %s191 = ssub.s32 1, %s19
      %s192 = smul.u32 %s191, %s20
      %s193 = smul.u32 8, %s192
      %p194 = scmp.lt.s32.totalorder %s193, 7
      %s195 = scalar_select %p194, %s193, 7
      %s196 = smul.addr %s195, 4
      %s197 = scalar_lea.vmem %s0, %s196
      %p198 = pneg %p52
      %p199 = pneg %p49
      %p200 = pneg %p73
      %p201 = pneg %p70
      %p202 = pneg %p94
      %p203 = pneg %p91
      %p204 = pneg %p115
      %p205 = pneg %p112
      %p206 = pneg %p143
      %p207 = pneg %p140
      %s208 = smul.u32 %s19, %s20
      %s209 = smul.u32 8, %s208
      %p210 = scmp.lt.s32.totalorder %s209, 7
      %s211 = scalar_select %p210, %s209, 7
      %s212 = smul.addr %s211, 4
      %s213 = scalar_lea.vmem %s4, %s212
      %s214 = ssub.s32 1, %s19
      %s215 = smul.u32 %s214, %s20
      %s216 = smul.u32 8, %s215
      %p217 = scmp.lt.s32.totalorder %s216, 7
      %s218 = scalar_select %p217, %s216, 7
      %s219 = smul.addr %s218, 4
      %s220 = scalar_lea.vmem %s0, %s219
      %s221 = ssub.s32 1, %s19
      %s222 = smul.u32 %s221, %s20
      %s223 = smul.u32 8, %s222
      %s224 = smul.u32 %s19, %s20
      %s225 = smul.u32 8, %s224
      %p226 = scmp.lt.s32.totalorder %s225, 7
      %s227 = scalar_select %p226, %s225, 7
      %s228 = smul.addr %s227, 4
      %s229 = scalar_lea.vmem %s4, %s228
      %s230 = smul.u32 %s19, %s20
      %s231 = smul.u32 8, %s230
      %s233 = smul.u32 %s20, 64
      %p234 = scmp.eq.s32.totalorder %s19, 0
      // Predicated region
      $region37: #{front_end_forward.6} parent=35 // pred_check
        %p235 = pneg %p234
      $region38: #{front_end_forward.6} parent=35 // pred_check_branch
        %237 = sbr.rel (%p235) target = $region40
      $region39: #{front_end_forward.6} parent=35 // pred_region
        %p238 = scmp.eq.s32.totalorder %s20, 0
        // Predicated region
        $region41: #{front_end_forward.6} parent=39 // pred_check
          %p239 = pneg %p238
        $region42: #{front_end_forward.6} parent=39 // pred_check_branch
          %241 = sbr.rel (%p239) target = $region44
        $region43: #{front_end_forward.6} parent=39 // pred_region
          %242 = vst [vmem:[#allocation3] sm:$0x1] 0.0
          %243 = vst [vmem:[#allocation4] sm:$0x1] 0.0
        $region44: #{front_end_forward.6} parent=39 // pred_fallthru
          _
        %v244 = vld [vmem:[%s220] sm:$0xf]
        %v245 = vld [vmem:[%s220 + $0x4] sm:$0xf]
        %v246 = vld [vmem:[%s220 + $0x8] sm:$0xf]
        %v247 = vld [vmem:[%s220 + $0xc] sm:$0xf]
        %v248 = vld [vmem:[%s220 + $0x10] sm:$0xf]
        %v249 = vld [vmem:[%s220 + $0x14] sm:$0xf]
        %v250 = vld [vmem:[%s220 + $0x18] sm:$0xf]
        %v251 = vld [vmem:[%s220 + $0x1c] sm:$0xf]
        %v252 = vld [vmem:[%s1] sm:$0xf]
        %v253 = vld [vmem:[%s1 + $0x4] sm:$0xf]
        %v254 = vld [vmem:[%s1 + $0x8] sm:$0xf]
        %v255 = vld [vmem:[%s1 + $0xc] sm:$0xf]
        %v256 = vld [vmem:[%s1 + $0x10] sm:$0xf]
        %v257 = vld [vmem:[%s1 + $0x14] sm:$0xf]
        %v258 = vld [vmem:[%s1 + $0x18] sm:$0xf]
        %v259 = vld [vmem:[%s1 + $0x1c] sm:$0xf]
        %v260 = vld [vmem:[%s1 + $0x20] sm:$0xf]
        %v261 = vld [vmem:[%s1 + $0x24] sm:$0xf]
        %v262 = vld [vmem:[%s1 + $0x28] sm:$0xf]
        %v263 = vld [vmem:[%s1 + $0x2c] sm:$0xf]
        %v264 = vld [vmem:[%s1 + $0x30] sm:$0xf]
        %v265 = vld [vmem:[%s1 + $0x34] sm:$0xf]
        %v266 = vld [vmem:[%s1 + $0x38] sm:$0xf]
        %v267 = vld [vmem:[%s1 + $0x3c] sm:$0xf]
        %v276 = vunpack.c.l.b16 %v244
        %v277 = vunpack.c.l.b16 %v245
        %v278 = vunpack.c.l.b16 %v246
        %v279 = vunpack.c.l.b16 %v247
        %v280 = vunpack.c.l.b16 %v248
        %v281 = vunpack.c.l.b16 %v249
        %v282 = vunpack.c.l.b16 %v250
        %v283 = vunpack.c.l.b16 %v251
        %v284 = vpack.c.b16 %v277, %v276
        %v285 = vpack.c.b16 %v279, %v278
        %v286 = vpack.c.b16 %v281, %v280
        %v287 = vpack.c.b16 %v283, %v282
        %v308 = vunpack.c.l.b16 %v252
        %v309 = vunpack.c.l.b16 %v253
        %v310 = vunpack.c.l.b16 %v254
        %v311 = vunpack.c.l.b16 %v255
        %v312 = vunpack.c.l.b16 %v256
        %v313 = vunpack.c.l.b16 %v257
        %v314 = vunpack.c.l.b16 %v258
        %v315 = vunpack.c.l.b16 %v259
        %v316 = vunpack.c.l.b16 %v260
        %v317 = vunpack.c.l.b16 %v261
        %v318 = vunpack.c.l.b16 %v262
        %v319 = vunpack.c.l.b16 %v263
        %v320 = vunpack.c.l.b16 %v264
        %v321 = vunpack.c.l.b16 %v265
        %v322 = vunpack.c.l.b16 %v266
        %v323 = vunpack.c.l.b16 %v267
        %v324 = vpack.c.b16 %v309, %v308
        %v325 = vpack.c.b16 %v311, %v310
        %v326 = vpack.c.b16 %v313, %v312
        %v327 = vpack.c.b16 %v315, %v314
        %v328 = vpack.c.b16 %v317, %v316
        %v329 = vpack.c.b16 %v319, %v318
        %v330 = vpack.c.b16 %v321, %v320
        %v331 = vpack.c.b16 %v323, %v322
        %340 = vmatprep.subr.bf16.mxu0 0
        %341 = vmatpush1.bf16.msra.mxu0 %v324
        %342 = vmatprep.subr.bf16.mxu0 0
        %343 = vmatpush1.bf16.msra.mxu0 %v325
        %344 = vmatprep.subr.bf16.mxu0 0
        %345 = vmatpush1.bf16.msra.mxu0 %v326
        %346 = vmatprep.subr.bf16.mxu0 0
        %347 = vmatpush1.bf16.msra.mxu0 %v327
        %348 = vmatprep.subr.bf16.mxu0 0
        %349 = vmatpush1.bf16.msra.mxu0 %v328
        %350 = vmatprep.subr.bf16.mxu0 0
        %351 = vmatpush1.bf16.msra.mxu0 %v329
        %352 = vmatprep.subr.bf16.mxu0 0
        %353 = vmatpush1.bf16.msra.mxu0 %v330
        %354 = vmatprep.subr.bf16.mxu0 0
        %355 = vmatpush1.bf16.msra.mxu0 %v331
        %356 = vmatprep.subr.bf16.mxu0 0
        %357 = vmatpush1.bf16.msra.mxu0 0
        %358 = vmatprep.subr.bf16.mxu0 0
        %359 = vmatpush1.bf16.msra.mxu0 0
        %360 = vmatprep.subr.bf16.mxu0 0
        %361 = vmatpush1.bf16.msra.mxu0 0
        %362 = vmatprep.subr.bf16.mxu0 0
        %363 = vmatpush1.bf16.msra.mxu0 0
        %364 = vmatprep.subr.bf16.mxu0 0
        %365 = vmatpush1.bf16.msra.mxu0 0
        %366 = vmatprep.subr.bf16.mxu0 0
        %367 = vmatpush1.bf16.msra.mxu0 0
        %368 = vmatprep.subr.bf16.mxu0 0
        %369 = vmatpush1.bf16.msra.mxu0 0
        %370 = vmatprep.subr.bf16.mxu0 0
        %371 = vmatpush1.bf16.msra.mxu0 0
        %372 = vmatprep.mubr.bf16.mxu0 0
        %373 = vmatmul.mubr.bf16.gmra.mrb[0].mxu0 %v284
        %v374 = vpop.f32.mrb[0].mxu0
        %v375 = vadd.f32 0.0, %v374
        %v376 = vpop.f32.mrb[0].mxu0
        %v377 = vpop.f32.mrb[0].mxu0
        %v378 = vadd.f32 0.0, %v377
        %v379 = vpop.f32.mrb[0].mxu0
        %380 = vmatprep.mubr.bf16.mxu0 0
        %381 = vmatmul.mubr.bf16.gmra.mrb[0].mxu0 %v285
        %v382 = vpop.f32.mrb[0].mxu0
        %v383 = vadd.f32 0.0, %v382
        %v384 = vpop.f32.mrb[0].mxu0
        %v385 = vpop.f32.mrb[0].mxu0
        %v386 = vadd.f32 0.0, %v385
        %v387 = vpop.f32.mrb[0].mxu0
        %388 = vmatprep.mubr.bf16.mxu0 0
        %389 = vmatmul.mubr.bf16.gmra.mrb[0].mxu0 %v286
        %v390 = vpop.f32.mrb[0].mxu0
        %v391 = vadd.f32 0.0, %v390
        %v392 = vpop.f32.mrb[0].mxu0
        %v393 = vpop.f32.mrb[0].mxu0
        %v394 = vadd.f32 0.0, %v393
        %v395 = vpop.f32.mrb[0].mxu0
        %396 = vmatprep.mubr.bf16.mxu0 0
        %397 = vmatmul.mubr.bf16.gmra.mrb[0].mxu0 %v287
        %v398 = vpop.f32.mrb[0].mxu0
        %v399 = vadd.f32 0.0, %v398
        %v400 = vpop.f32.mrb[0].mxu0
        %v401 = vpop.f32.mrb[0].mxu0
        %v402 = vadd.f32 0.0, %v401
        %v403 = vpop.f32.mrb[0].mxu0
        %404 = vdwg.mxu0
        %s405 = scalar_lea.vmem [#allocation2], %s233
        %406 = vst [vmem:[%s405] sm:$0xff] %v375
        %407 = vst [vmem:[%s405 + $0x8] sm:$0xff] %v378
        %408 = vst [vmem:[%s405 + $0x10] sm:$0xff] %v383
        %409 = vst [vmem:[%s405 + $0x18] sm:$0xff] %v386
        %410 = vst [vmem:[%s405 + $0x20] sm:$0xff] %v391
        %411 = vst [vmem:[%s405 + $0x28] sm:$0xff] %v394
        %412 = vst [vmem:[%s405 + $0x30] sm:$0xff] %v399
        %413 = vst [vmem:[%s405 + $0x38] sm:$0xff] %v402
        %v414 = vld [vmem:[#allocation3] sm:$0x1]
        %v415 = vadd.f32 %v375, %v378
        %v416 = vadd.f32 %v415, %v383
        %v417 = vadd.f32 %v416, %v386
        %v418 = vadd.f32 %v417, %v391
        %v419 = vadd.f32 %v418, %v394
        %v420 = vadd.f32 %v419, %v399
        %v421 = vadd.f32 %v420, %v402
        %v422 = vrot.slane %v421, 4
        %v423 = vadd.f32 %v421, %v422
        %v424 = vrot.slane %v423, 2
        %v425 = vadd.f32 %v423, %v424
        %v426 = vrot.slane %v425, 1
        %v427 = vadd.f32 %v425, %v426
        %v428 = vadd.f32 %v414, %v427
        %429 = vst [vmem:[#allocation3] sm:$0x1] %v428
        %v430 = vld [vmem:[#allocation4] sm:$0x1]
        %v431 = vmul.f32 %v375, %v375
        %v432 = vmul.f32 %v378, %v378
        %v433 = vmul.f32 %v383, %v383
        %v434 = vmul.f32 %v386, %v386
        %v435 = vmul.f32 %v391, %v391
        %v436 = vmul.f32 %v394, %v394
        %v437 = vmul.f32 %v399, %v399
        %v438 = vmul.f32 %v402, %v402
        %v439 = vadd.f32 %v431, %v432
        %v440 = vadd.f32 %v439, %v433
        %v441 = vadd.f32 %v440, %v434
        %v442 = vadd.f32 %v441, %v435
        %v443 = vadd.f32 %v442, %v436
        %v444 = vadd.f32 %v443, %v437
        %v445 = vadd.f32 %v444, %v438
        %v446 = vrot.slane %v445, 4
        %v447 = vadd.f32 %v445, %v446
        %v448 = vrot.slane %v447, 2
        %v449 = vadd.f32 %v447, %v448
        %v450 = vrot.slane %v449, 1
        %v451 = vadd.f32 %v449, %v450
        %v452 = vadd.f32 %v430, %v451
        %453 = vst [vmem:[#allocation4] sm:$0x1] %v452
        // Predicated region
        $region45: #{front_end_forward.6} parent=39 // pred_check
          %p454 = pneg %p238
        $region46: #{front_end_forward.6} parent=39 // pred_check_branch
          %456 = sbr.rel (%p454) target = $region48
        $region47: #{front_end_forward.6} parent=39 // pred_region
          %v457 = vld [vmem:[#allocation3] sm:$0x1]
          %v458 = vmul.f32 %v457, 0.02
          %v459 = vld [vmem:[#allocation4] sm:$0x1]
          %v460 = vmul.f32 %v459, 0.02
          %v461 = vmul.f32 %v458, %v458
          %v462 = vsub.f32 %v460, %v461
          %v463 = vmax.f32 %v462, 0.0
          %v464 = vld [vmem:[%s2] sm:$0x1]
          %v465 = vadd.f32 %v463, 1e-05
          %v466 = vrsqrt.pop %v465
          %v467 = vmul.f32 %v464, %v466
          %468 = vst [vmem:[#allocation3] sm:$0x1] %v467
          %v469 = vld [vmem:[%s3] sm:$0x1]
          %v470 = vmul.f32 %v458, %v467
          %v471 = vsub.f32 %v469, %v470
          %472 = vst [vmem:[#allocation4] sm:$0x1] %v471
        $region48: #{front_end_forward.6} parent=39 // pred_fallthru
          _
      $region40: #{front_end_forward.6} parent=35 // pred_fallthru
        _
      %p473 = scmp.eq.s32.totalorder %s19, 1
      // Predicated region
      $region49: #{front_end_forward.6} parent=35 // pred_check
        %p474 = pneg %p473
      $region50: #{front_end_forward.6} parent=35 // pred_check_branch
        %476 = sbr.rel (%p474) target = $region52
      $region51: #{front_end_forward.6} parent=35 // pred_region
        %s477 = scalar_lea.vmem [#allocation2], %s233
        %v478 = vld [vmem:[%s477] sm:$0xff]
        %v479 = vld [vmem:[%s477 + $0x8] sm:$0xff]
        %v480 = vld [vmem:[%s477 + $0x10] sm:$0xff]
        %v481 = vld [vmem:[%s477 + $0x18] sm:$0xff]
        %v482 = vld [vmem:[%s477 + $0x20] sm:$0xff]
        %v483 = vld [vmem:[%s477 + $0x28] sm:$0xff]
        %v484 = vld [vmem:[%s477 + $0x30] sm:$0xff]
        %v485 = vld [vmem:[%s477 + $0x38] sm:$0xff]
        %v486 = vld [vmem:[#allocation3] sm:$0x1]
        %v488 = vlaneseq
        %v489 = vshrl.u32 %v488, 7
        %v490 = vsub.s32 0, %v489
        %v491 = vrot.slane %v486, %v490
        %v493 = vmul.f32 %v478, %v491
        %v494 = vmul.f32 %v479, %v491
        %v495 = vmul.f32 %v480, %v491
        %v496 = vmul.f32 %v481, %v491
        %v497 = vmul.f32 %v482, %v491
        %v498 = vmul.f32 %v483, %v491
        %v499 = vmul.f32 %v484, %v491
        %v500 = vmul.f32 %v485, %v491
        %v501 = vld [vmem:[#allocation4] sm:$0x1]
        %v503 = vlaneseq
        %v504 = vshrl.u32 %v503, 7
        %v505 = vsub.s32 0, %v504
        %v506 = vrot.slane %v501, %v505
        %v508 = vadd.f32 %v493, %v506
        %v509 = vadd.f32 %v494, %v506
        %v510 = vadd.f32 %v495, %v506
        %v511 = vadd.f32 %v496, %v506
        %v512 = vadd.f32 %v497, %v506
        %v513 = vadd.f32 %v498, %v506
        %v514 = vadd.f32 %v499, %v506
        %v515 = vadd.f32 %v500, %v506
        %vm516 = vcmp.ge.f32.partialorder %v508, 0.0
        %vm517 = vcmp.ge.f32.partialorder %v509, 0.0
        %vm518 = vcmp.ge.f32.partialorder %v510, 0.0
        %vm519 = vcmp.ge.f32.partialorder %v511, 0.0
        %vm520 = vcmp.ge.f32.partialorder %v512, 0.0
        %vm521 = vcmp.ge.f32.partialorder %v513, 0.0
        %vm522 = vcmp.ge.f32.partialorder %v514, 0.0
        %vm523 = vcmp.ge.f32.partialorder %v515, 0.0
        %v524 = vmul.f32 %v508, 0.2
        %v525 = vmul.f32 %v509, 0.2
        %v526 = vmul.f32 %v510, 0.2
        %v527 = vmul.f32 %v511, 0.2
        %v528 = vmul.f32 %v512, 0.2
        %v529 = vmul.f32 %v513, 0.2
        %v530 = vmul.f32 %v514, 0.2
        %v531 = vmul.f32 %v515, 0.2
        %v532 = vsel %vm516, %v508, %v524
        %v533 = vsel %vm517, %v509, %v525
        %v534 = vsel %vm518, %v510, %v526
        %v535 = vsel %vm519, %v511, %v527
        %v536 = vsel %vm520, %v512, %v528
        %v537 = vsel %vm521, %v513, %v529
        %v538 = vsel %vm522, %v514, %v530
        %v539 = vsel %vm523, %v515, %v531
        %v540 = vpack.c.bf16 %v533, %v532
        %v541 = vpack.c.bf16 %v535, %v534
        %v542 = vpack.c.bf16 %v537, %v536
        %v543 = vpack.c.bf16 %v539, %v538
        %v548 = vunpack.c.l.b16 %v540
        %v549 = vunpack.c.h.b16 %v540
        %v550 = vunpack.c.l.b16 %v541
        %v551 = vunpack.c.h.b16 %v541
        %v552 = vunpack.c.l.b16 %v542
        %v553 = vunpack.c.h.b16 %v542
        %v554 = vunpack.c.l.b16 %v543
        %v555 = vunpack.c.h.b16 %v543
        %v556 = vpack.c.b16 %v548, %v548
        %v557 = vpack.c.b16 %v549, %v549
        %v558 = vpack.c.b16 %v550, %v550
        %v559 = vpack.c.b16 %v551, %v551
        %v560 = vpack.c.b16 %v552, %v552
        %v561 = vpack.c.b16 %v553, %v553
        %v562 = vpack.c.b16 %v554, %v554
        %v563 = vpack.c.b16 %v555, %v555
        %572 = vst [vmem:[%s229] sm:$0xf] %v556
        %573 = vst [vmem:[%s229 + $0x4] sm:$0xf] %v557
        %574 = vst [vmem:[%s229 + $0x8] sm:$0xf] %v558
        %575 = vst [vmem:[%s229 + $0xc] sm:$0xf] %v559
        %576 = vst [vmem:[%s229 + $0x10] sm:$0xf] %v560
        %577 = vst [vmem:[%s229 + $0x14] sm:$0xf] %v561
        %578 = vst [vmem:[%s229 + $0x18] sm:$0xf] %v562
        %579 = vst [vmem:[%s229 + $0x1c] sm:$0xf] %v563
      $region52: #{front_end_forward.6} parent=35 // pred_fallthru
        _
      %s580 = smul.u32 %s19, %s20
      %s581 = smul.u32 8, %s580
      %p582 = scmp.lt.s32.totalorder %s581, 7
      %s583 = scalar_select %p582, %s581, 7
      %s584 = smul.addr %s583, 4
      %s585 = scalar_lea.vmem %s4, %s584
      // Predicated region
      $region53: #{front_end_forward.6} parent=35 // pred_check
        %p586 = pneg %p140
      $region54: #{front_end_forward.6} parent=35 // pred_check_branch
        %588 = sbr.rel (%p586) target = $region56
      $region55: #{front_end_forward.6} parent=35 // pred_region
        %s589 = smul.u32 %s19, %s20
        %s590 = smul.u32 8, %s589
      $region56: #{front_end_forward.6} parent=35 // pred_fallthru
        _
    $region36: #{front_end_forward.6} parent=5 // pred_fallthru
      _
    %p591 = scmp.le.s32.totalorder 2, %s10
    // Predicated region
    $region57: #{front_end_forward.6} parent=5 // pred_check
      %p592 = pneg %p591
    $region58: #{front_end_forward.6} parent=5 // pred_check_branch
      %594 = sbr.rel (%p592) target = $region60
    $region59: #{front_end_forward.6} parent=5 // pred_region
      %s595 = ssub.s32 %s10, 2
      // Predicated region
      $region61: #{front_end_forward.6} parent=59 // pred_check
        %p596 = pneg %p146
      $region62: #{front_end_forward.6} parent=59 // pred_check_branch
        %598 = sbr.rel (%p596) target = $region64
      $region63: #{front_end_forward.6} parent=59 // pred_region
        %s599 = smul.u32 %s21, %s22
        %s600 = smul.u32 8, %s599
        %p601 = scmp.lt.s32.totalorder %s600, 7
        %s602 = scalar_select %p601, %s600, 7
        %s603 = smul.addr %s602, 4
        %s604 = scalar_lea.vmem %s4, %s603
      $region64: #{front_end_forward.6} parent=59 // pred_fallthru
        _
    $region60: #{front_end_forward.6} parent=5 // pred_fallthru
      _
  $region6: #{front_end_forward.6} parent=0 // loop_footer
    %s14 = sadd.s32 1, %s10
  $region7: #{front_end_forward.6} parent=0 // loop_footer_branch
    %9 = sbr.rel target = $region3
  $region8: #{front_end_forward.6} parent=0 // loop_exit
    _

// kernel: front_end_forward.7
$region0: #{front_end_forward.7}
  #allocation0 [shape = 'u32[]', space=smem, size = 0x4, offset = 0x4, fixed_abs, tag = 'smem constant byte address 0x4 - core index']
  #allocation1 [shape = 'u32[144,128]{1,0:T(1,128)}', space=vmem, size = 0x12000, scoped, tag = 'internal scratch']
  #allocation2 [shape = 'f32[16,128]{1,0:T(8,128)}', space=vmem, size = 0x2000, scoped, tag = 'scratch operand']
  #allocation3 [shape = 'f32[1,128]{1,0:T(1,128)}', space=vmem, size = 0x200, scoped, tag = 'scratch operand']
  #allocation4 [shape = 'f32[1,128]{1,0:T(1,128)}', space=vmem, size = 0x200, scoped, tag = 'scratch operand']
  %s0 = inlined_call_operand.vmem [shape: bf16[16,256], index: 0, kind: input, shape index: {}]
  %s1 = inlined_call_operand.vmem [shape: bf16[256,128], index: 1, kind: input, shape index: {}]
  %s2 = inlined_call_operand.vmem [shape: f32[1,128], index: 2, kind: input, shape index: {}]
  %s3 = inlined_call_operand.vmem [shape: f32[1,128], index: 3, kind: input, shape index: {}]
  %s4 = inlined_call_operand.vmem [shape: bf16[16,128], index: 4, kind: output, shape index: {}]
  %s5 = sld [smem:[#allocation0]]
  $region65: #{front_end_forward.7} parent=0
    _
  %s7 = ssub.s32 1, %s5
  %s8 = scalar_select 0, %s7, %s5
  loop: start=0, step=1, limit=4
  $region2: #{front_end_forward.7} parent=0 // loop_pre_header
    _
  $region3: #{front_end_forward.7} parent=0 // loop_header
    %s10 = sphi 0, %s14
    %p11 = scmp.ge.s32.totalorder %s10, 4
    %s17 = sphi 0, %s29
    %s18 = sphi 0, %s25
    %s19 = sphi 0, %s17
    %s20 = sphi 0, %s18
    %s21 = sphi 0, %s19
    %s22 = sphi 0, %s20
    %s36 = sphi 0, %s38
    %s39 = sphi 0, %s36
    %s40 = sphi 0, %s39
    %s56 = sphi 0, %s40
    %s60 = sphi 0, %s60
    %s62 = sphi 0, %s60
    %s63 = sphi 0, %s62
    %s77 = sphi 0, %s63
    %s81 = sphi 0, %s81
    %s83 = sphi 0, %s81
    %s84 = sphi 0, %s83
    %s98 = sphi 0, %s84
    %s102 = sphi 0, %s102
    %s104 = sphi 0, %s102
    %s105 = sphi 0, %s104
    %s119 = sphi 0, %s105
    %s127 = sphi 0, %s129
    %s130 = sphi 0, %s127
    %s131 = sphi 0, %s130
    %s147 = sphi 0, %s131
  $region4: #{front_end_forward.7} parent=0 // loop_header_branch
    %13 = sbr.rel (%p11) target = $region8
  $region5: #{front_end_forward.7} parent=0 // loop_body
    %s15 = ssub.s32 %s10, 1
    %s16 = ssub.s32 %s10, 2
    %s23 = sadd.s32 1, %s18
    %p24 = scmp.ge.s32.totalorder %s23, 1
    %s25 = scalar_select %p24, 0, %s23
    %s26 = sadd.s32 1, %s17
    %s27 = scalar_select %p24, %s26, %s17
    %p28 = scmp.ge.s32.totalorder %s27, 2
    %s29 = scalar_select %p28, 0, %s27
    %s30 = ssub.s32 1, %s17
    %s31 = smul.u32 %s30, %s18
    %s32 = ssub.s32 1, %s29
    %s33 = smul.u32 %s32, %s25
    %s34 = ssub.s32 %s31, %s33
    %p35 = scmp.eq.s32.totalorder %s34, 0
    %s37 = sadd.s32 %s36, 1
    %s38 = scalar_select %p35, %s36, %s37
    %p41 = pneg %p35
    %p42 = scmp.eq.s32.totalorder %s10, 1
    %p43 = por %p41, %p42
    %p44 = scmp.ne.s32.totalorder %s36, %s39
    %p45 = scmp.eq.s32.totalorder %s10, 0
    %p46 = por %p44, %p45
    %p47 = scmp.ne.s32.totalorder %s36, %s39
    %p48 = scmp.eq.s32.totalorder %s15, 1
    %p49 = por %p47, %p48
    %p50 = scmp.ne.s32.totalorder %s39, %s40
    %p51 = scmp.eq.s32.totalorder %s15, 0
    %p52 = por %p50, %p51
    %p53 = scmp.ne.s32.totalorder %s39, %s40
    %p54 = scmp.eq.s32.totalorder %s16, 1
    %p55 = por %p53, %p54
    %p57 = scmp.ne.s32.totalorder %s40, %s56
    %p58 = scmp.eq.s32.totalorder %s16, 0
    %p59 = por %p57, %p58
    %s61 = sadd.s32 %s60, 1
    %p64 = scmp.eq.s32.totalorder %s10, 1
    %p65 = scmp.ne.s32.totalorder %s60, %s62
    %p66 = scmp.eq.s32.totalorder %s10, 0
    %p67 = por %p65, %p66
    %p68 = scmp.ne.s32.totalorder %s60, %s62
    %p69 = scmp.eq.s32.totalorder %s15, 1
    %p70 = por %p68, %p69
    %p71 = scmp.ne.s32.totalorder %s62, %s63
    %p72 = scmp.eq.s32.totalorder %s15, 0
    %p73 = por %p71, %p72
    %p74 = scmp.ne.s32.totalorder %s62, %s63
    %p75 = scmp.eq.s32.totalorder %s16, 1
    %p76 = por %p74, %p75
    %p78 = scmp.ne.s32.totalorder %s63, %s77
    %p79 = scmp.eq.s32.totalorder %s16, 0
    %p80 = por %p78, %p79
    %s82 = sadd.s32 %s81, 1
    %p85 = scmp.eq.s32.totalorder %s10, 1
    %p86 = scmp.ne.s32.totalorder %s81, %s83
    %p87 = scmp.eq.s32.totalorder %s10, 0
    %p88 = por %p86, %p87
    %p89 = scmp.ne.s32.totalorder %s81, %s83
    %p90 = scmp.eq.s32.totalorder %s15, 1
    %p91 = por %p89, %p90
    %p92 = scmp.ne.s32.totalorder %s83, %s84
    %p93 = scmp.eq.s32.totalorder %s15, 0
    %p94 = por %p92, %p93
    %p95 = scmp.ne.s32.totalorder %s83, %s84
    %p96 = scmp.eq.s32.totalorder %s16, 1
    %p97 = por %p95, %p96
    %p99 = scmp.ne.s32.totalorder %s84, %s98
    %p100 = scmp.eq.s32.totalorder %s16, 0
    %p101 = por %p99, %p100
    %s103 = sadd.s32 %s102, 1
    %p106 = scmp.eq.s32.totalorder %s10, 1
    %p107 = scmp.ne.s32.totalorder %s102, %s104
    %p108 = scmp.eq.s32.totalorder %s10, 0
    %p109 = por %p107, %p108
    %p110 = scmp.ne.s32.totalorder %s102, %s104
    %p111 = scmp.eq.s32.totalorder %s15, 1
    %p112 = por %p110, %p111
    %p113 = scmp.ne.s32.totalorder %s104, %s105
    %p114 = scmp.eq.s32.totalorder %s15, 0
    %p115 = por %p113, %p114
    %p116 = scmp.ne.s32.totalorder %s104, %s105
    %p117 = scmp.eq.s32.totalorder %s16, 1
    %p118 = por %p116, %p117
    %p120 = scmp.ne.s32.totalorder %s105, %s119
    %p121 = scmp.eq.s32.totalorder %s16, 0
    %p122 = por %p120, %p121
    %s123 = smul.u32 %s17, %s18
    %s124 = smul.u32 %s29, %s25
    %s125 = ssub.s32 %s123, %s124
    %p126 = scmp.eq.s32.totalorder %s125, 0
    %s128 = sadd.s32 %s127, 1
    %s129 = scalar_select %p126, %s127, %s128
    %p132 = pneg %p126
    %p133 = scmp.eq.s32.totalorder %s10, 1
    %p134 = por %p132, %p133
    %p135 = scmp.ne.s32.totalorder %s127, %s130
    %p136 = scmp.eq.s32.totalorder %s10, 0
    %p137 = por %p135, %p136
    %p138 = scmp.ne.s32.totalorder %s127, %s130
    %p139 = scmp.eq.s32.totalorder %s15, 1
    %p140 = por %p138, %p139
    %p141 = scmp.ne.s32.totalorder %s130, %s131
    %p142 = scmp.eq.s32.totalorder %s15, 0
    %p143 = por %p141, %p142
    %p144 = scmp.ne.s32.totalorder %s130, %s131
    %p145 = scmp.eq.s32.totalorder %s16, 1
    %p146 = por %p144, %p145
    %p148 = scmp.ne.s32.totalorder %s131, %s147
    %p149 = scmp.eq.s32.totalorder %s16, 0
    %p150 = por %p148, %p149
    %p151 = scmp.le.s32.totalorder 1, %s10
    %p152 = scmp.lt.s32.totalorder %s10, 3
    %p153 = pnand %p151, %p152
    %p154 = pneg %p153
    // Predicated region
    $region9: #{front_end_forward.7} parent=5 // pred_check
      _
    $region10: #{front_end_forward.7} parent=5 // pred_check_branch
      %156 = sbr.rel (%p153) target = $region12
    $region11: #{front_end_forward.7} parent=5 // pred_region
      %s157 = ssub.s32 %s10, 1
      // Predicated region
      $region13: #{front_end_forward.7} parent=11 // pred_check
        %p158 = pneg %p73
      $region14: #{front_end_forward.7} parent=11 // pred_check_branch
        %160 = sbr.rel (%p158) target = $region16
      $region15: #{front_end_forward.7} parent=11 // pred_region
        _
      $region16: #{front_end_forward.7} parent=11 // pred_fallthru
        _
      // Predicated region
      $region17: #{front_end_forward.7} parent=11 // pred_check
        %p161 = pneg %p94
      $region18: #{front_end_forward.7} parent=11 // pred_check_branch
        %163 = sbr.rel (%p161) target = $region20
      $region19: #{front_end_forward.7} parent=11 // pred_region
        _
      $region20: #{front_end_forward.7} parent=11 // pred_fallthru
        _
      // Predicated region
      $region21: #{front_end_forward.7} parent=11 // pred_check
        %p164 = pneg %p115
      $region22: #{front_end_forward.7} parent=11 // pred_check_branch
        %166 = sbr.rel (%p164) target = $region24
      $region23: #{front_end_forward.7} parent=11 // pred_region
        _
      $region24: #{front_end_forward.7} parent=11 // pred_fallthru
        _
    $region12: #{front_end_forward.7} parent=5 // pred_fallthru
      _
    %p167 = scmp.lt.s32.totalorder %s10, 2
    // Predicated region
    $region25: #{front_end_forward.7} parent=5 // pred_check
      %p168 = pneg %p167
    $region26: #{front_end_forward.7} parent=5 // pred_check_branch
      %170 = sbr.rel (%p168) target = $region28
    $region27: #{front_end_forward.7} parent=5 // pred_region
      // Predicated region
      $region29: #{front_end_forward.7} parent=27 // pred_check
        %p171 = pneg %p46
      $region30: #{front_end_forward.7} parent=27 // pred_check_branch
        %173 = sbr.rel (%p171) target = $region32
      $region31: #{front_end_forward.7} parent=27 // pred_region
        %s174 = ssub.s32 1, %s17
        %s175 = smul.u32 %s174, %s18
        %s176 = smul.u32 2, %s175
        %p177 = scmp.lt.s32.totalorder %s176, 1
        %s178 = scalar_select %p177, %s176, 1
        %s179 = smul.addr %s178, 2
        %s180 = smul.addr %s179, 4
        %s181 = scalar_lea.vmem %s0, %s180
        %s182 = ssub.s32 1, %s17
        %s183 = smul.u32 %s182, %s18
        %s184 = smul.u32 2, %s183
      $region32: #{front_end_forward.7} parent=27 // pred_fallthru
        _
    $region28: #{front_end_forward.7} parent=5 // pred_fallthru
      _
    %p185 = scmp.le.s32.totalorder 1, %s10
    %p186 = scmp.lt.s32.totalorder %s10, 3
    %p187 = pnand %p185, %p186
    %p188 = pneg %p187
    // Predicated region
    $region33: #{front_end_forward.7} parent=5 // pred_check
      _
    $region34: #{front_end_forward.7} parent=5 // pred_check_branch
      %190 = sbr.rel (%p187) target = $region36
    $region35: #{front_end_forward.7} parent=5 // pred_region
      %s191 = ssub.s32 %s10, 1
      %s192 = ssub.s32 1, %s19
      %s193 = smul.u32 %s192, %s20
      %s194 = smul.u32 2, %s193
      %p195 = scmp.lt.s32.totalorder %s194, 1
      %s196 = scalar_select %p195, %s194, 1
      %s197 = smul.addr %s196, 2
      %s198 = smul.addr %s197, 4
      %s199 = scalar_lea.vmem %s0, %s198
      %p200 = pneg %p52
      %p201 = pneg %p49
      %p202 = pneg %p73
      %p203 = pneg %p70
      %p204 = pneg %p94
      %p205 = pneg %p91
      %p206 = pneg %p115
      %p207 = pneg %p112
      %p208 = pneg %p143
      %p209 = pneg %p140
      %s210 = smul.u32 %s19, %s20
      %s211 = smul.u32 2, %s210
      %p212 = scmp.lt.s32.totalorder %s211, 1
      %s213 = scalar_select %p212, %s211, 1
      %s214 = smul.addr %s213, 4
      %s215 = scalar_lea.vmem %s4, %s214
      %s216 = ssub.s32 1, %s19
      %s217 = smul.u32 %s216, %s20
      %s218 = smul.u32 2, %s217
      %p219 = scmp.lt.s32.totalorder %s218, 1
      %s220 = scalar_select %p219, %s218, 1
      %s221 = smul.addr %s220, 2
      %s222 = smul.addr %s221, 4
      %s223 = scalar_lea.vmem %s0, %s222
      %s224 = ssub.s32 1, %s19
      %s225 = smul.u32 %s224, %s20
      %s226 = smul.u32 2, %s225
      %s227 = smul.u32 %s19, %s20
      %s228 = smul.u32 2, %s227
      %p229 = scmp.lt.s32.totalorder %s228, 1
      %s230 = scalar_select %p229, %s228, 1
      %s231 = smul.addr %s230, 4
      %s232 = scalar_lea.vmem %s4, %s231
      %s233 = smul.u32 %s19, %s20
      %s234 = smul.u32 2, %s233
      %s236 = smul.u32 %s20, 16
      %p237 = scmp.eq.s32.totalorder %s19, 0
      // Predicated region
      $region37: #{front_end_forward.7} parent=35 // pred_check
        %p238 = pneg %p237
      $region38: #{front_end_forward.7} parent=35 // pred_check_branch
        %240 = sbr.rel (%p238) target = $region40
      $region39: #{front_end_forward.7} parent=35 // pred_region
        %p241 = scmp.eq.s32.totalorder %s20, 0
        // Predicated region
        $region41: #{front_end_forward.7} parent=39 // pred_check
          %p242 = pneg %p241
        $region42: #{front_end_forward.7} parent=39 // pred_check_branch
          %244 = sbr.rel (%p242) target = $region44
        $region43: #{front_end_forward.7} parent=39 // pred_region
          %245 = vst [vmem:[#allocation3] sm:$0x1] 0.0
          %246 = vst [vmem:[#allocation4] sm:$0x1] 0.0
        $region44: #{front_end_forward.7} parent=39 // pred_fallthru
          _
        %v247 = vld [vmem:[%s223] sm:$0xff]
        %v248 = vld [vmem:[%s223 + $0x8] sm:$0xff]
        %v249 = vld [vmem:[%s1] sm:$0xf]
        %v250 = vld [vmem:[%s1 + $0x4] sm:$0xf]
        %v251 = vld [vmem:[%s1 + $0x8] sm:$0xf]
        %v252 = vld [vmem:[%s1 + $0xc] sm:$0xf]
        %v253 = vld [vmem:[%s1 + $0x10] sm:$0xf]
        %v254 = vld [vmem:[%s1 + $0x14] sm:$0xf]
        %v255 = vld [vmem:[%s1 + $0x18] sm:$0xf]
        %v256 = vld [vmem:[%s1 + $0x1c] sm:$0xf]
        %v257 = vld [vmem:[%s1 + $0x20] sm:$0xf]
        %v258 = vld [vmem:[%s1 + $0x24] sm:$0xf]
        %v259 = vld [vmem:[%s1 + $0x28] sm:$0xf]
        %v260 = vld [vmem:[%s1 + $0x2c] sm:$0xf]
        %v261 = vld [vmem:[%s1 + $0x30] sm:$0xf]
        %v262 = vld [vmem:[%s1 + $0x34] sm:$0xf]
        %v263 = vld [vmem:[%s1 + $0x38] sm:$0xf]
        %v264 = vld [vmem:[%s1 + $0x3c] sm:$0xf]
        %v265 = vld [vmem:[%s1 + $0x40] sm:$0xf]
        %v266 = vld [vmem:[%s1 + $0x44] sm:$0xf]
        %v267 = vld [vmem:[%s1 + $0x48] sm:$0xf]
        %v268 = vld [vmem:[%s1 + $0x4c] sm:$0xf]
        %v269 = vld [vmem:[%s1 + $0x50] sm:$0xf]
        %v270 = vld [vmem:[%s1 + $0x54] sm:$0xf]
        %v271 = vld [vmem:[%s1 + $0x58] sm:$0xf]
        %v272 = vld [vmem:[%s1 + $0x5c] sm:$0xf]
        %v273 = vld [vmem:[%s1 + $0x60] sm:$0xf]
        %v274 = vld [vmem:[%s1 + $0x64] sm:$0xf]
        %v275 = vld [vmem:[%s1 + $0x68] sm:$0xf]
        %v276 = vld [vmem:[%s1 + $0x6c] sm:$0xf]
        %v277 = vld [vmem:[%s1 + $0x70] sm:$0xf]
        %v278 = vld [vmem:[%s1 + $0x74] sm:$0xf]
        %v279 = vld [vmem:[%s1 + $0x78] sm:$0xf]
        %v280 = vld [vmem:[%s1 + $0x7c] sm:$0xf]
        %v283 = vunpack.c.l.b16 %v247
        %v284 = vunpack.c.h.b16 %v247
        %v285 = vunpack.c.l.b16 %v248
        %v286 = vunpack.c.h.b16 %v248
        %v287 = vpack.c.b16 %v285, %v283
        %v288 = vpack.c.b16 %v286, %v284
        %v323 = vunpack.c.l.b16 %v249
        %v324 = vunpack.c.l.b16 %v250
        %v325 = vunpack.c.l.b16 %v251
        %v326 = vunpack.c.l.b16 %v252
        %v327 = vunpack.c.l.b16 %v253
        %v328 = vunpack.c.l.b16 %v254
        %v329 = vunpack.c.l.b16 %v255
        %v330 = vunpack.c.l.b16 %v256
        %v331 = vunpack.c.l.b16 %v257
        %v332 = vunpack.c.l.b16 %v258
        %v333 = vunpack.c.l.b16 %v259
        %v334 = vunpack.c.l.b16 %v260
        %v335 = vunpack.c.l.b16 %v261
        %v336 = vunpack.c.l.b16 %v262
        %v337 = vunpack.c.l.b16 %v263
        %v338 = vunpack.c.l.b16 %v264
        %v339 = vunpack.c.l.b16 %v265
        %v340 = vunpack.c.l.b16 %v266
        %v341 = vunpack.c.l.b16 %v267
        %v342 = vunpack.c.l.b16 %v268
        %v343 = vunpack.c.l.b16 %v269
        %v344 = vunpack.c.l.b16 %v270
        %v345 = vunpack.c.l.b16 %v271
        %v346 = vunpack.c.l.b16 %v272
        %v347 = vunpack.c.l.b16 %v273
        %v348 = vunpack.c.l.b16 %v274
        %v349 = vunpack.c.l.b16 %v275
        %v350 = vunpack.c.l.b16 %v276
        %v351 = vunpack.c.l.b16 %v277
        %v352 = vunpack.c.l.b16 %v278
        %v353 = vunpack.c.l.b16 %v279
        %v354 = vunpack.c.l.b16 %v280
        %v355 = vpack.c.b16 %v324, %v323
        %v356 = vpack.c.b16 %v326, %v325
        %v357 = vpack.c.b16 %v328, %v327
        %v358 = vpack.c.b16 %v330, %v329
        %v359 = vpack.c.b16 %v332, %v331
        %v360 = vpack.c.b16 %v334, %v333
        %v361 = vpack.c.b16 %v336, %v335
        %v362 = vpack.c.b16 %v338, %v337
        %v363 = vpack.c.b16 %v340, %v339
        %v364 = vpack.c.b16 %v342, %v341
        %v365 = vpack.c.b16 %v344, %v343
        %v366 = vpack.c.b16 %v346, %v345
        %v367 = vpack.c.b16 %v348, %v347
        %v368 = vpack.c.b16 %v350, %v349
        %v369 = vpack.c.b16 %v352, %v351
        %v370 = vpack.c.b16 %v354, %v353
        %387 = vmatprep.subr.bf16.mxu0 0
        %388 = vmatpush1.bf16.msra.mxu0 %v355
        %389 = vmatprep.subr.bf16.mxu0 0
        %390 = vmatpush1.bf16.msra.mxu0 %v356
        %391 = vmatprep.subr.bf16.mxu0 0
        %392 = vmatpush1.bf16.msra.mxu0 %v357
        %393 = vmatprep.subr.bf16.mxu0 0
        %394 = vmatpush1.bf16.msra.mxu0 %v358
        %395 = vmatprep.subr.bf16.mxu0 0
        %396 = vmatpush1.bf16.msra.mxu0 %v359
        %397 = vmatprep.subr.bf16.mxu0 0
        %398 = vmatpush1.bf16.msra.mxu0 %v360
        %399 = vmatprep.subr.bf16.mxu0 0
        %400 = vmatpush1.bf16.msra.mxu0 %v361
        %401 = vmatprep.subr.bf16.mxu0 0
        %402 = vmatpush1.bf16.msra.mxu0 %v362
        %403 = vmatprep.subr.bf16.mxu0 0
        %404 = vmatpush1.bf16.msra.mxu0 %v363
        %405 = vmatprep.subr.bf16.mxu0 0
        %406 = vmatpush1.bf16.msra.mxu0 %v364
        %407 = vmatprep.subr.bf16.mxu0 0
        %408 = vmatpush1.bf16.msra.mxu0 %v365
        %409 = vmatprep.subr.bf16.mxu0 0
        %410 = vmatpush1.bf16.msra.mxu0 %v366
        %411 = vmatprep.subr.bf16.mxu0 0
        %412 = vmatpush1.bf16.msra.mxu0 %v367
        %413 = vmatprep.subr.bf16.mxu0 0
        %414 = vmatpush1.bf16.msra.mxu0 %v368
        %415 = vmatprep.subr.bf16.mxu0 0
        %416 = vmatpush1.bf16.msra.mxu0 %v369
        %417 = vmatprep.subr.bf16.mxu0 0
        %418 = vmatpush1.bf16.msra.mxu0 %v370
        %419 = vmatprep.mubr.bf16.mxu0 %v288
        %420 = vmatmul.mubr.bf16.gmra.mrb[0].mxu0 %v287
        %v421 = vpop.f32.mrb[0].mxu0
        %v422 = vadd.f32 0.0, %v421
        %v423 = vpop.f32.mrb[0].mxu0
        %v424 = vpop.f32.mrb[0].mxu0
        %v425 = vadd.f32 0.0, %v424
        %v426 = vpop.f32.mrb[0].mxu0
        %427 = vdwg.mxu0
        %s428 = scalar_lea.vmem [#allocation2], %s236
        %429 = vst [vmem:[%s428] sm:$0xff] %v422
        %430 = vst [vmem:[%s428 + $0x8] sm:$0xff] %v425
        %v431 = vld [vmem:[#allocation3] sm:$0x1]
        %v432 = vadd.f32 %v422, %v425
        %v433 = vrot.slane %v432, 4
        %v434 = vadd.f32 %v432, %v433
        %v435 = vrot.slane %v434, 2
        %v436 = vadd.f32 %v434, %v435
        %v437 = vrot.slane %v436, 1
        %v438 = vadd.f32 %v436, %v437
        %v439 = vadd.f32 %v431, %v438
        %440 = vst [vmem:[#allocation3] sm:$0x1] %v439
        %v441 = vld [vmem:[#allocation4] sm:$0x1]
        %v442 = vmul.f32 %v422, %v422
        %v443 = vmul.f32 %v425, %v425
        %v444 = vadd.f32 %v442, %v443
        %v445 = vrot.slane %v444, 4
        %v446 = vadd.f32 %v444, %v445
        %v447 = vrot.slane %v446, 2
        %v448 = vadd.f32 %v446, %v447
        %v449 = vrot.slane %v448, 1
        %v450 = vadd.f32 %v448, %v449
        %v451 = vadd.f32 %v441, %v450
        %452 = vst [vmem:[#allocation4] sm:$0x1] %v451
        // Predicated region
        $region45: #{front_end_forward.7} parent=39 // pred_check
          %p453 = pneg %p241
        $region46: #{front_end_forward.7} parent=39 // pred_check_branch
          %455 = sbr.rel (%p453) target = $region48
        $region47: #{front_end_forward.7} parent=39 // pred_region
          %v456 = vld [vmem:[#allocation3] sm:$0x1]
          %v457 = vmul.f32 %v456, 0.125
          %v458 = vld [vmem:[#allocation4] sm:$0x1]
          %v459 = vmul.f32 %v458, 0.125
          %v460 = vmul.f32 %v457, %v457
          %v461 = vsub.f32 %v459, %v460
          %v462 = vmax.f32 %v461, 0.0
          %v463 = vld [vmem:[%s2] sm:$0x1]
          %v464 = vadd.f32 %v462, 1e-05
          %v465 = vrsqrt.pop %v464
          %v466 = vmul.f32 %v463, %v465
          %467 = vst [vmem:[#allocation3] sm:$0x1] %v466
          %v468 = vld [vmem:[%s3] sm:$0x1]
          %v469 = vmul.f32 %v457, %v466
          %v470 = vsub.f32 %v468, %v469
          %471 = vst [vmem:[#allocation4] sm:$0x1] %v470
        $region48: #{front_end_forward.7} parent=39 // pred_fallthru
          _
      $region40: #{front_end_forward.7} parent=35 // pred_fallthru
        _
      %p472 = scmp.eq.s32.totalorder %s19, 1
      // Predicated region
      $region49: #{front_end_forward.7} parent=35 // pred_check
        %p473 = pneg %p472
      $region50: #{front_end_forward.7} parent=35 // pred_check_branch
        %475 = sbr.rel (%p473) target = $region52
      $region51: #{front_end_forward.7} parent=35 // pred_region
        %s476 = scalar_lea.vmem [#allocation2], %s236
        %v477 = vld [vmem:[%s476] sm:$0xff]
        %v478 = vld [vmem:[%s476 + $0x8] sm:$0xff]
        %v479 = vld [vmem:[#allocation3] sm:$0x1]
        %v481 = vlaneseq
        %v482 = vshrl.u32 %v481, 7
        %v483 = vsub.s32 0, %v482
        %v484 = vrot.slane %v479, %v483
        %v486 = vmul.f32 %v477, %v484
        %v487 = vmul.f32 %v478, %v484
        %v488 = vld [vmem:[#allocation4] sm:$0x1]
        %v490 = vlaneseq
        %v491 = vshrl.u32 %v490, 7
        %v492 = vsub.s32 0, %v491
        %v493 = vrot.slane %v488, %v492
        %v495 = vadd.f32 %v486, %v493
        %v496 = vadd.f32 %v487, %v493
        %vm497 = vcmp.ge.f32.partialorder %v495, 0.0
        %vm498 = vcmp.ge.f32.partialorder %v496, 0.0
        %v499 = vmul.f32 %v495, 0.2
        %v500 = vmul.f32 %v496, 0.2
        %v501 = vsel %vm497, %v495, %v499
        %v502 = vsel %vm498, %v496, %v500
        %v503 = vpack.c.bf16 %v502, %v501
        %v505 = vunpack.c.l.b16 %v503
        %v506 = vunpack.c.h.b16 %v503
        %v507 = vpack.c.b16 %v505, %v505
        %v508 = vpack.c.b16 %v506, %v506
        %511 = vst [vmem:[%s232] sm:$0xf] %v507
        %512 = vst [vmem:[%s232 + $0x4] sm:$0xf] %v508
      $region52: #{front_end_forward.7} parent=35 // pred_fallthru
        _
      %s513 = smul.u32 %s19, %s20
      %s514 = smul.u32 2, %s513
      %p515 = scmp.lt.s32.totalorder %s514, 1
      %s516 = scalar_select %p515, %s514, 1
      %s517 = smul.addr %s516, 4
      %s518 = scalar_lea.vmem %s4, %s517
      // Predicated region
      $region53: #{front_end_forward.7} parent=35 // pred_check
        %p519 = pneg %p140
      $region54: #{front_end_forward.7} parent=35 // pred_check_branch
        %521 = sbr.rel (%p519) target = $region56
      $region55: #{front_end_forward.7} parent=35 // pred_region
        %s522 = smul.u32 %s19, %s20
        %s523 = smul.u32 2, %s522
      $region56: #{front_end_forward.7} parent=35 // pred_fallthru
        _
    $region36: #{front_end_forward.7} parent=5 // pred_fallthru
      _
    %p524 = scmp.le.s32.totalorder 2, %s10
    // Predicated region
    $region57: #{front_end_forward.7} parent=5 // pred_check
      %p525 = pneg %p524
    $region58: #{front_end_forward.7} parent=5 // pred_check_branch
      %527 = sbr.rel (%p525) target = $region60
    $region59: #{front_end_forward.7} parent=5 // pred_region
      %s528 = ssub.s32 %s10, 2
      // Predicated region
      $region61: #{front_end_forward.7} parent=59 // pred_check
        %p529 = pneg %p146
      $region62: #{front_end_forward.7} parent=59 // pred_check_branch
        %531 = sbr.rel (%p529) target = $region64
      $region63: #{front_end_forward.7} parent=59 // pred_region
        %s532 = smul.u32 %s21, %s22
        %s533 = smul.u32 2, %s532
        %p534 = scmp.lt.s32.totalorder %s533, 1
        %s535 = scalar_select %p534, %s533, 1
        %s536 = smul.addr %s535, 4
        %s537 = scalar_lea.vmem %s4, %s536
      $region64: #{front_end_forward.7} parent=59 // pred_fallthru
        _
    $region60: #{front_end_forward.7} parent=5 // pred_fallthru
      _
  $region6: #{front_end_forward.7} parent=0 // loop_footer
    %s14 = sadd.s32 1, %s10
  $region7: #{front_end_forward.7} parent=0 // loop_footer_branch
    %9 = sbr.rel target = $region3
  $region8: #{front_end_forward.7} parent=0 // loop_exit
    _

</llo_original>
